<compile_context>
chip_gen: v6e
topology: v6e:2x2x1
jax: 0.10.0
libtpu: 0.0.40
codegen_flags: <defaults>
</compile_context>

<pallas_src>
import functools

import jax
import jax.numpy as jnp
from jax.experimental import pallas as pl
from jax.experimental.pallas import tpu as pltpu

N_LAYERS = 10          # 10 Linear layers total
N_MXU_LAYERS = 9       # layers 0..8 run on the MXU; layer 9 (10->1) on the VPU
PAD = 64               # hidden feature dims padded to 64
IN_FEATURES = 41
EPS = 1e-5


# ----------------------------------------------------------------------------
# Pallas kernel: the entire MLP for one packed batch tile.
# ----------------------------------------------------------------------------
def mlp_kernel(x_ref, w_ref, b_ref, wl_ref, bl_ref, o_ref, *, pack):
    # x_ref : (pack*64, Bt_p) bf16          packed activations (features x batch)
    # w_ref : (9, pack*64, pack*64) bf16    block-diagonal BN-folded weights
    # b_ref : (9, pack*64, 1) f32           replicated BN-folded biases
    # wl_ref: (pack*64, 1) f32              last-layer (10->1) weights, replicated
    # bl_ref: (pack, 1) f32                 last-layer bias, replicated
    # o_ref : (pack, Bt_p) f32              lane-dense sigmoid outputs
    h = x_ref[...]
    for l in range(N_MXU_LAYERS):                       # static unroll (9 layers)
        z = jnp.dot(w_ref[l], h,                        # MXU: bf16 in, f32 accum
                    preferred_element_type=jnp.float32) + b_ref[l]
        h = jnp.maximum(z, 0.0).astype(x_ref.dtype)     # ReLU, back to bf16

    # Final Linear(10->1) + Sigmoid on the VPU/XLU: weighted sum over each
    # 64-row feature group (only the first 10 rows carry nonzero weight).
    hf = h.astype(jnp.float32) * wl_ref[...]            # (pack*64, Bt_p) f32
    z = jnp.concatenate(
        [jnp.sum(hf[p * PAD:(p + 1) * PAD, :], axis=0, keepdims=True)
         for p in range(pack)],
        axis=0) + bl_ref[...]                           # (pack, Bt_p)
    o_ref[...] = jax.nn.sigmoid(z)


# ----------------------------------------------------------------------------
# Wrapper
# ----------------------------------------------------------------------------
def _round_up(x, m):
    return ((x + m - 1) // m) * m


def _default_pack():
    """MXU-depth-matched pack factor: 4 for 256-deep v6e/v7x MXUs, else 2."""
    try:
        kind = jax.devices()[0].device_kind.lower()
    except Exception:
        return 4
    if any(s in kind for s in ("v2", "v3", "v4", "v5")):
        return 2
    return 4


@functools.partial(jax.jit, static_argnames=("batch_tile",))
def mlp_criteo_forward(x, w_bd, b_bd, w_last, b_last, *, batch_tile=4096):
    """x: (B, 41) float32  ->  (B, 1) float32 (eval-mode forward)."""
    B, F = x.shape
    pack = w_bd.shape[1] // PAD
    quantum = pack * 128                      # smallest legal tile (full lanes)

    # Adaptive tile: big by default, capped near ceil(B/2) so small batches
    # still yield >= 2 grid steps (both v7x TensorCores get work).
    tile = max(quantum, min(_round_up(batch_tile, quantum),
                            _round_up(-(-B // 2), quantum)))
    n_tiles = -(-B // tile)
    B_pad = n_tiles * tile
    cols = B_pad // pack                      # total packed batch columns
    bt_p = tile // pack                       # packed columns per grid step

    # Single fused pass: pad (features 41->64, batch B->B_pad), cast to bf16,
    # and stack `pack` contiguous batch quarters along the sublane axis.
    # TODO(synk): absorb this pass into layer 0 in-kernel (dot_general on the
    # natural (Bt, 41) layout) if profiling shows it as a separate HBM pass.
    x_packed = (jnp.pad(x.astype(w_bd.dtype), ((0, B_pad - B), (0, PAD - F)))
                .reshape(pack, cols, PAD)
                .transpose(0, 2, 1)
                .reshape(pack * PAD, cols))

    out = pl.pallas_call(
        functools.partial(mlp_kernel, pack=pack),
        out_shape=jax.ShapeDtypeStruct((pack, cols), jnp.float32),
        grid_spec=pltpu.PrefetchScalarGridSpec(
            num_scalar_prefetch=0,
            grid=(n_tiles,),
            in_specs=[
                pl.BlockSpec((pack * PAD, bt_p), lambda i: (0, i)),          # x tile
                pl.BlockSpec((N_MXU_LAYERS, pack * PAD, pack * PAD),
                             lambda i: (0, 0, 0)),                           # W (resident)
                pl.BlockSpec((N_MXU_LAYERS, pack * PAD, 1),
                             lambda i: (0, 0, 0)),                           # b (resident)
                pl.BlockSpec((pack * PAD, 1), lambda i: (0, 0)),             # w_last
                pl.BlockSpec((pack, 1), lambda i: (0, 0)),                   # b_last
            ],
            out_specs=pl.BlockSpec((pack, bt_p), lambda i: (0, i)),          # lane-dense
        ),
        compiler_params=pltpu.CompilerParams(
            dimension_semantics=("parallel",)),
    )(x_packed, w_bd, b_bd, w_last, b_last)

    # out[p, c] is the logit for batch element p*cols + c -> plain reshape.
    return out.reshape(B_pad)[:B][:, None]


# ----------------------------------------------------------------------------
# Deterministic parameter construction (synthetic weights, eval-mode BN folded).
# w_stack holds W_l^T (out_features, in_features) padded to (64, 64), f32.
# ----------------------------------------------------------------------------
def build_params(key):
    dims = [(IN_FEATURES, 64)] + [(64, 64)] * 7 + [(64, 10), (10, 1)]
    has_bn = [True] * 9 + [False]   # every Linear but the last is followed by BN

    w_stack = jnp.zeros((N_LAYERS, PAD, PAD), jnp.float32)
    b_stack = jnp.zeros((N_LAYERS, PAD, 1), jnp.float32)

    for l, (din, dout) in enumerate(dims):
        key, kw, kb, kg, kbe, km, kv = jax.random.split(key, 7)
        bound = 1.0 / jnp.sqrt(din)
        W = jax.random.uniform(kw, (din, dout), jnp.float32, -bound, bound)
        b = jax.random.uniform(kb, (dout,), jnp.float32, -bound, bound)

        if has_bn[l]:
            gamma = 1.0 + 0.1 * jax.random.normal(kg, (dout,), jnp.float32)
            beta = 0.1 * jax.random.normal(kbe, (dout,), jnp.float32)
            mean = 0.1 * jax.random.normal(km, (dout,), jnp.float32)
            var = jnp.abs(1.0 + 0.1 * jax.random.normal(kv, (dout,), jnp.float32))
            s = gamma / jnp.sqrt(var + EPS)
            W = W * s[None, :]
            b = s * (b - mean) + beta

        w_stack = w_stack.at[l, :dout, :din].set(W.T)   # transposed (out, in)
        b_stack = b_stack.at[l, :dout, 0].set(b)

    return w_stack, b_stack


def pack_params(w_stack, b_stack, pack, dtype=jnp.bfloat16):
    """Block-diagonal packing of layers 0..8 plus the VPU last-layer weights."""
    eye = jnp.eye(pack, dtype=jnp.float32)
    w_bd = jnp.stack([jnp.kron(eye, w_stack[l]) for l in range(N_MXU_LAYERS)])
    b_bd = jnp.tile(b_stack[:N_MXU_LAYERS], (1, pack, 1))
    w_last = jnp.tile(w_stack[N_MXU_LAYERS, 0, :], (pack,)).reshape(pack * PAD, 1)
    b_last = jnp.full((pack, 1), b_stack[N_MXU_LAYERS, 0, 0], jnp.float32)
    return (w_bd.astype(dtype), b_bd.astype(jnp.float32),
            w_last.astype(jnp.float32), b_last)


# Pure-JAX reference (mirrors the kernel's bf16 rounding points) for checking.
def reference_forward(x, w_stack, b_stack):
    dims = [(IN_FEATURES, 64)] + [(64, 64)] * 7 + [(64, 10)]
    h = x.astype(jnp.bfloat16).astype(jnp.float32)
    for l, (din, dout) in enumerate(dims):
        Wt = w_stack[l, :dout, :din].astype(jnp.bfloat16).astype(jnp.float32)
        b = b_stack[l, :dout, 0]
        z = jnp.dot(h, Wt.T, precision=jax.lax.Precision.HIGHEST) + b
        h = jnp.maximum(z, 0.0).astype(jnp.bfloat16).astype(jnp.float32)
    w9 = w_stack[N_MXU_LAYERS, 0, :10]          # last layer stays f32 (VPU path)
    b9 = b_stack[N_MXU_LAYERS, 0, 0]
    z = jnp.dot(h, w9, precision=jax.lax.Precision.HIGHEST) + b9
    return jax.nn.sigmoid(z)[:, None]


if __name__ == "__main__":
    key = jax.random.PRNGKey(0)
    kx, kp = jax.random.split(key)

    # B not a multiple of any tile -> exercises batch padding and (when the
    # adaptive cap kicks in) a multi-step grid.
    B = 700
    x = jax.random.normal(kx, (B, IN_FEATURES), jnp.float32)

    w_stack, b_stack = build_params(kp)
    pack = _default_pack()                     # 4 on v6e/v7x, 2 on v5e & older
    w_bd, b_bd, w_last, b_last = pack_params(w_stack, b_stack, pack)

    out = mlp_criteo_forward(x, w_bd, b_bd, w_last, b_last)   # default tile 4096
    out = jax.block_until_ready(out)

    ref = reference_forward(x, w_stack, b_stack)
    assert out.shape == (B, 1)
    assert jnp.allclose(out, ref, atol=5e-3, rtol=0.0), "mismatch vs reference"

    print("KERNEL_OK")
</pallas_src>

<mosaic_0001>
module attributes {stable_mosaic.version = 11 : i64} {
  func.func @mlp_kernel(%arg0: i32, %arg1: memref<256x128xbf16, #tpu.memory_space<vmem>>, %arg2: memref<9x256x256xbf16, #tpu.memory_space<vmem>>, %arg3: memref<9x256x1xf32, #tpu.memory_space<vmem>>, %arg4: memref<256x1xf32, #tpu.memory_space<vmem>>, %arg5: memref<4x1xf32, #tpu.memory_space<vmem>>, %arg6: memref<4x128xf32, #tpu.memory_space<vmem>>) attributes {dimension_semantics = [#tpu.dimension_semantics<parallel>], iteration_bounds = array<i64: 2>, scalar_prefetch = 0 : i64, scratch_operands = 0 : i64, tpu.core_type = #tpu.core_type<tc>, window_params = [{transform_indices = @transform_0, window_bounds = array<i64: 256, 128>}, {pipeline_mode = #tpu.pipeline_mode<synchronous>, transform_indices = @transform_1, window_bounds = array<i64: 9, 256, 256>}, {pipeline_mode = #tpu.pipeline_mode<synchronous>, transform_indices = @transform_2, window_bounds = array<i64: 9, 256, 1>}, {pipeline_mode = #tpu.pipeline_mode<synchronous>, transform_indices = @transform_3, window_bounds = array<i64: 256, 1>}, {pipeline_mode = #tpu.pipeline_mode<synchronous>, transform_indices = @transform_4, window_bounds = array<i64: 4, 1>}, {transform_indices = @transform_5, window_bounds = array<i64: 4, 128>}]} {
    %c0 = arith.constant 0 : index
    %c0_0 = arith.constant 0 : index
    %0 = vector.load %arg1[%c0, %c0_0] : memref<256x128xbf16, #tpu.memory_space<vmem>>, vector<256x128xbf16>
    %c0_1 = arith.constant 0 : index
    %c0_2 = arith.constant 0 : index
    %c0_3 = arith.constant 0 : index
    %1 = vector.load %arg2[%c0_1, %c0_2, %c0_3] : memref<9x256x256xbf16, #tpu.memory_space<vmem>>, vector<1x256x256xbf16>
    %2 = vector.shape_cast %1 : vector<1x256x256xbf16> to vector<256x256xbf16>
    %cst = arith.constant dense<0.000000e+00> : vector<256x128xf32>
    %3 = tpu.matmul %2, %0, %cst {dimension_numbers = #tpu.dot_dimension_numbers<[1], [0], [0], [1], [0, 0, 1, 1], [], []>} : vector<256x256xbf16>, vector<256x128xbf16>, vector<256x128xf32> -> vector<256x128xf32>
    %c0_4 = arith.constant 0 : index
    %c0_5 = arith.constant 0 : index
    %c0_6 = arith.constant 0 : index
    %4 = vector.load %arg3[%c0_4, %c0_5, %c0_6] : memref<9x256x1xf32, #tpu.memory_space<vmem>>, vector<1x256x1xf32>
    %5 = vector.shape_cast %4 : vector<1x256x1xf32> to vector<256x1xf32>
    %6 = vector.broadcast %5 : vector<256x1xf32> to vector<256x128xf32>
    %7 = arith.addf %3, %6 : vector<256x128xf32>
    %cst_7 = arith.constant 0.000000e+00 : f32
    %8 = vector.broadcast %cst_7 : f32 to vector<256x128xf32>
    %9 = arith.maximumf %7, %8 : vector<256x128xf32>
    %10 = arith.truncf %9 : vector<256x128xf32> to vector<256x128xbf16>
    %c1 = arith.constant 1 : index
    %c0_8 = arith.constant 0 : index
    %c0_9 = arith.constant 0 : index
    %11 = vector.load %arg2[%c1, %c0_8, %c0_9] : memref<9x256x256xbf16, #tpu.memory_space<vmem>>, vector<1x256x256xbf16>
    %12 = vector.shape_cast %11 : vector<1x256x256xbf16> to vector<256x256xbf16>
    %cst_10 = arith.constant dense<0.000000e+00> : vector<256x128xf32>
    %13 = tpu.matmul %12, %10, %cst_10 {dimension_numbers = #tpu.dot_dimension_numbers<[1], [0], [0], [1], [0, 0, 1, 1], [], []>} : vector<256x256xbf16>, vector<256x128xbf16>, vector<256x128xf32> -> vector<256x128xf32>
    %c1_11 = arith.constant 1 : index
    %c0_12 = arith.constant 0 : index
    %c0_13 = arith.constant 0 : index
    %14 = vector.load %arg3[%c1_11, %c0_12, %c0_13] : memref<9x256x1xf32, #tpu.memory_space<vmem>>, vector<1x256x1xf32>
    %15 = vector.shape_cast %14 : vector<1x256x1xf32> to vector<256x1xf32>
    %16 = vector.broadcast %15 : vector<256x1xf32> to vector<256x128xf32>
    %17 = arith.addf %13, %16 : vector<256x128xf32>
    %cst_14 = arith.constant 0.000000e+00 : f32
    %18 = vector.broadcast %cst_14 : f32 to vector<256x128xf32>
    %19 = arith.maximumf %17, %18 : vector<256x128xf32>
    %20 = arith.truncf %19 : vector<256x128xf32> to vector<256x128xbf16>
    %c2 = arith.constant 2 : index
    %c0_15 = arith.constant 0 : index
    %c0_16 = arith.constant 0 : index
    %21 = vector.load %arg2[%c2, %c0_15, %c0_16] : memref<9x256x256xbf16, #tpu.memory_space<vmem>>, vector<1x256x256xbf16>
    %22 = vector.shape_cast %21 : vector<1x256x256xbf16> to vector<256x256xbf16>
    %cst_17 = arith.constant dense<0.000000e+00> : vector<256x128xf32>
    %23 = tpu.matmul %22, %20, %cst_17 {dimension_numbers = #tpu.dot_dimension_numbers<[1], [0], [0], [1], [0, 0, 1, 1], [], []>} : vector<256x256xbf16>, vector<256x128xbf16>, vector<256x128xf32> -> vector<256x128xf32>
    %c2_18 = arith.constant 2 : index
    %c0_19 = arith.constant 0 : index
    %c0_20 = arith.constant 0 : index
    %24 = vector.load %arg3[%c2_18, %c0_19, %c0_20] : memref<9x256x1xf32, #tpu.memory_space<vmem>>, vector<1x256x1xf32>
    %25 = vector.shape_cast %24 : vector<1x256x1xf32> to vector<256x1xf32>
    %26 = vector.broadcast %25 : vector<256x1xf32> to vector<256x128xf32>
    %27 = arith.addf %23, %26 : vector<256x128xf32>
    %cst_21 = arith.constant 0.000000e+00 : f32
    %28 = vector.broadcast %cst_21 : f32 to vector<256x128xf32>
    %29 = arith.maximumf %27, %28 : vector<256x128xf32>
    %30 = arith.truncf %29 : vector<256x128xf32> to vector<256x128xbf16>
    %c3 = arith.constant 3 : index
    %c0_22 = arith.constant 0 : index
    %c0_23 = arith.constant 0 : index
    %31 = vector.load %arg2[%c3, %c0_22, %c0_23] : memref<9x256x256xbf16, #tpu.memory_space<vmem>>, vector<1x256x256xbf16>
    %32 = vector.shape_cast %31 : vector<1x256x256xbf16> to vector<256x256xbf16>
    %cst_24 = arith.constant dense<0.000000e+00> : vector<256x128xf32>
    %33 = tpu.matmul %32, %30, %cst_24 {dimension_numbers = #tpu.dot_dimension_numbers<[1], [0], [0], [1], [0, 0, 1, 1], [], []>} : vector<256x256xbf16>, vector<256x128xbf16>, vector<256x128xf32> -> vector<256x128xf32>
    %c3_25 = arith.constant 3 : index
    %c0_26 = arith.constant 0 : index
    %c0_27 = arith.constant 0 : index
    %34 = vector.load %arg3[%c3_25, %c0_26, %c0_27] : memref<9x256x1xf32, #tpu.memory_space<vmem>>, vector<1x256x1xf32>
    %35 = vector.shape_cast %34 : vector<1x256x1xf32> to vector<256x1xf32>
    %36 = vector.broadcast %35 : vector<256x1xf32> to vector<256x128xf32>
    %37 = arith.addf %33, %36 : vector<256x128xf32>
    %cst_28 = arith.constant 0.000000e+00 : f32
    %38 = vector.broadcast %cst_28 : f32 to vector<256x128xf32>
    %39 = arith.maximumf %37, %38 : vector<256x128xf32>
    %40 = arith.truncf %39 : vector<256x128xf32> to vector<256x128xbf16>
    %c4 = arith.constant 4 : index
    %c0_29 = arith.constant 0 : index
    %c0_30 = arith.constant 0 : index
    %41 = vector.load %arg2[%c4, %c0_29, %c0_30] : memref<9x256x256xbf16, #tpu.memory_space<vmem>>, vector<1x256x256xbf16>
    %42 = vector.shape_cast %41 : vector<1x256x256xbf16> to vector<256x256xbf16>
    %cst_31 = arith.constant dense<0.000000e+00> : vector<256x128xf32>
    %43 = tpu.matmul %42, %40, %cst_31 {dimension_numbers = #tpu.dot_dimension_numbers<[1], [0], [0], [1], [0, 0, 1, 1], [], []>} : vector<256x256xbf16>, vector<256x128xbf16>, vector<256x128xf32> -> vector<256x128xf32>
    %c4_32 = arith.constant 4 : index
    %c0_33 = arith.constant 0 : index
    %c0_34 = arith.constant 0 : index
    %44 = vector.load %arg3[%c4_32, %c0_33, %c0_34] : memref<9x256x1xf32, #tpu.memory_space<vmem>>, vector<1x256x1xf32>
    %45 = vector.shape_cast %44 : vector<1x256x1xf32> to vector<256x1xf32>
    %46 = vector.broadcast %45 : vector<256x1xf32> to vector<256x128xf32>
    %47 = arith.addf %43, %46 : vector<256x128xf32>
    %cst_35 = arith.constant 0.000000e+00 : f32
    %48 = vector.broadcast %cst_35 : f32 to vector<256x128xf32>
    %49 = arith.maximumf %47, %48 : vector<256x128xf32>
    %50 = arith.truncf %49 : vector<256x128xf32> to vector<256x128xbf16>
    %c5 = arith.constant 5 : index
    %c0_36 = arith.constant 0 : index
    %c0_37 = arith.constant 0 : index
    %51 = vector.load %arg2[%c5, %c0_36, %c0_37] : memref<9x256x256xbf16, #tpu.memory_space<vmem>>, vector<1x256x256xbf16>
    %52 = vector.shape_cast %51 : vector<1x256x256xbf16> to vector<256x256xbf16>
    %cst_38 = arith.constant dense<0.000000e+00> : vector<256x128xf32>
    %53 = tpu.matmul %52, %50, %cst_38 {dimension_numbers = #tpu.dot_dimension_numbers<[1], [0], [0], [1], [0, 0, 1, 1], [], []>} : vector<256x256xbf16>, vector<256x128xbf16>, vector<256x128xf32> -> vector<256x128xf32>
    %c5_39 = arith.constant 5 : index
    %c0_40 = arith.constant 0 : index
    %c0_41 = arith.constant 0 : index
    %54 = vector.load %arg3[%c5_39, %c0_40, %c0_41] : memref<9x256x1xf32, #tpu.memory_space<vmem>>, vector<1x256x1xf32>
    %55 = vector.shape_cast %54 : vector<1x256x1xf32> to vector<256x1xf32>
    %56 = vector.broadcast %55 : vector<256x1xf32> to vector<256x128xf32>
    %57 = arith.addf %53, %56 : vector<256x128xf32>
    %cst_42 = arith.constant 0.000000e+00 : f32
    %58 = vector.broadcast %cst_42 : f32 to vector<256x128xf32>
    %59 = arith.maximumf %57, %58 : vector<256x128xf32>
    %60 = arith.truncf %59 : vector<256x128xf32> to vector<256x128xbf16>
    %c6 = arith.constant 6 : index
    %c0_43 = arith.constant 0 : index
    %c0_44 = arith.constant 0 : index
    %61 = vector.load %arg2[%c6, %c0_43, %c0_44] : memref<9x256x256xbf16, #tpu.memory_space<vmem>>, vector<1x256x256xbf16>
    %62 = vector.shape_cast %61 : vector<1x256x256xbf16> to vector<256x256xbf16>
    %cst_45 = arith.constant dense<0.000000e+00> : vector<256x128xf32>
    %63 = tpu.matmul %62, %60, %cst_45 {dimension_numbers = #tpu.dot_dimension_numbers<[1], [0], [0], [1], [0, 0, 1, 1], [], []>} : vector<256x256xbf16>, vector<256x128xbf16>, vector<256x128xf32> -> vector<256x128xf32>
    %c6_46 = arith.constant 6 : index
    %c0_47 = arith.constant 0 : index
    %c0_48 = arith.constant 0 : index
    %64 = vector.load %arg3[%c6_46, %c0_47, %c0_48] : memref<9x256x1xf32, #tpu.memory_space<vmem>>, vector<1x256x1xf32>
    %65 = vector.shape_cast %64 : vector<1x256x1xf32> to vector<256x1xf32>
    %66 = vector.broadcast %65 : vector<256x1xf32> to vector<256x128xf32>
    %67 = arith.addf %63, %66 : vector<256x128xf32>
    %cst_49 = arith.constant 0.000000e+00 : f32
    %68 = vector.broadcast %cst_49 : f32 to vector<256x128xf32>
    %69 = arith.maximumf %67, %68 : vector<256x128xf32>
    %70 = arith.truncf %69 : vector<256x128xf32> to vector<256x128xbf16>
    %c7 = arith.constant 7 : index
    %c0_50 = arith.constant 0 : index
    %c0_51 = arith.constant 0 : index
    %71 = vector.load %arg2[%c7, %c0_50, %c0_51] : memref<9x256x256xbf16, #tpu.memory_space<vmem>>, vector<1x256x256xbf16>
    %72 = vector.shape_cast %71 : vector<1x256x256xbf16> to vector<256x256xbf16>
    %cst_52 = arith.constant dense<0.000000e+00> : vector<256x128xf32>
    %73 = tpu.matmul %72, %70, %cst_52 {dimension_numbers = #tpu.dot_dimension_numbers<[1], [0], [0], [1], [0, 0, 1, 1], [], []>} : vector<256x256xbf16>, vector<256x128xbf16>, vector<256x128xf32> -> vector<256x128xf32>
    %c7_53 = arith.constant 7 : index
    %c0_54 = arith.constant 0 : index
    %c0_55 = arith.constant 0 : index
    %74 = vector.load %arg3[%c7_53, %c0_54, %c0_55] : memref<9x256x1xf32, #tpu.memory_space<vmem>>, vector<1x256x1xf32>
    %75 = vector.shape_cast %74 : vector<1x256x1xf32> to vector<256x1xf32>
    %76 = vector.broadcast %75 : vector<256x1xf32> to vector<256x128xf32>
    %77 = arith.addf %73, %76 : vector<256x128xf32>
    %cst_56 = arith.constant 0.000000e+00 : f32
    %78 = vector.broadcast %cst_56 : f32 to vector<256x128xf32>
    %79 = arith.maximumf %77, %78 : vector<256x128xf32>
    %80 = arith.truncf %79 : vector<256x128xf32> to vector<256x128xbf16>
    %c8 = arith.constant 8 : index
    %c0_57 = arith.constant 0 : index
    %c0_58 = arith.constant 0 : index
    %81 = vector.load %arg2[%c8, %c0_57, %c0_58] : memref<9x256x256xbf16, #tpu.memory_space<vmem>>, vector<1x256x256xbf16>
    %82 = vector.shape_cast %81 : vector<1x256x256xbf16> to vector<256x256xbf16>
    %cst_59 = arith.constant dense<0.000000e+00> : vector<256x128xf32>
    %83 = tpu.matmul %82, %80, %cst_59 {dimension_numbers = #tpu.dot_dimension_numbers<[1], [0], [0], [1], [0, 0, 1, 1], [], []>} : vector<256x256xbf16>, vector<256x128xbf16>, vector<256x128xf32> -> vector<256x128xf32>
    %c8_60 = arith.constant 8 : index
    %c0_61 = arith.constant 0 : index
    %c0_62 = arith.constant 0 : index
    %84 = vector.load %arg3[%c8_60, %c0_61, %c0_62] : memref<9x256x1xf32, #tpu.memory_space<vmem>>, vector<1x256x1xf32>
    %85 = vector.shape_cast %84 : vector<1x256x1xf32> to vector<256x1xf32>
    %86 = vector.broadcast %85 : vector<256x1xf32> to vector<256x128xf32>
    %87 = arith.addf %83, %86 : vector<256x128xf32>
    %cst_63 = arith.constant 0.000000e+00 : f32
    %88 = vector.broadcast %cst_63 : f32 to vector<256x128xf32>
    %89 = arith.maximumf %87, %88 : vector<256x128xf32>
    %90 = arith.truncf %89 : vector<256x128xf32> to vector<256x128xbf16>
    %91 = arith.extf %90 : vector<256x128xbf16> to vector<256x128xf32>
    %c0_64 = arith.constant 0 : index
    %c0_65 = arith.constant 0 : index
    %92 = vector.load %arg4[%c0_64, %c0_65] : memref<256x1xf32, #tpu.memory_space<vmem>>, vector<256x1xf32>
    %93 = vector.broadcast %92 : vector<256x1xf32> to vector<256x128xf32>
    %94 = arith.mulf %91, %93 : vector<256x128xf32>
    %95 = vector.extract_strided_slice %94 {offsets = [0, 0], sizes = [64, 128], strides = [1, 1]} : vector<256x128xf32> to vector<64x128xf32>
    %cst_66 = arith.constant dense<0.000000e+00> : vector<128xf32>
    %96 = vector.multi_reduction <add>, %95, %cst_66 [0] : vector<64x128xf32> to vector<128xf32>
    %97 = vector.shape_cast %96 : vector<128xf32> to vector<1x128xf32>
    %98 = vector.extract_strided_slice %94 {offsets = [64, 0], sizes = [64, 128], strides = [1, 1]} : vector<256x128xf32> to vector<64x128xf32>
    %cst_67 = arith.constant dense<0.000000e+00> : vector<128xf32>
    %99 = vector.multi_reduction <add>, %98, %cst_67 [0] : vector<64x128xf32> to vector<128xf32>
    %100 = vector.shape_cast %99 : vector<128xf32> to vector<1x128xf32>
    %101 = vector.extract_strided_slice %94 {offsets = [128, 0], sizes = [64, 128], strides = [1, 1]} : vector<256x128xf32> to vector<64x128xf32>
    %cst_68 = arith.constant dense<0.000000e+00> : vector<128xf32>
    %102 = vector.multi_reduction <add>, %101, %cst_68 [0] : vector<64x128xf32> to vector<128xf32>
    %103 = vector.shape_cast %102 : vector<128xf32> to vector<1x128xf32>
    %104 = vector.extract_strided_slice %94 {offsets = [192, 0], sizes = [64, 128], strides = [1, 1]} : vector<256x128xf32> to vector<64x128xf32>
    %cst_69 = arith.constant dense<0.000000e+00> : vector<128xf32>
    %105 = vector.multi_reduction <add>, %104, %cst_69 [0] : vector<64x128xf32> to vector<128xf32>
    %106 = vector.shape_cast %105 : vector<128xf32> to vector<1x128xf32>
    %107 = tpu.concatenate %97, %100, %103, %106 in 0 : vector<1x128xf32>, vector<1x128xf32>, vector<1x128xf32>, vector<1x128xf32> -> vector<4x128xf32>
    %c0_70 = arith.constant 0 : index
    %c0_71 = arith.constant 0 : index
    %108 = vector.load %arg5[%c0_70, %c0_71] : memref<4x1xf32, #tpu.memory_space<vmem>>, vector<4x1xf32>
    %109 = vector.broadcast %108 : vector<4x1xf32> to vector<4x128xf32>
    %110 = arith.addf %107, %109 : vector<4x128xf32>
    %111 = arith.negf %110 : vector<4x128xf32>
    %112 = math.exp %111 : vector<4x128xf32>
    %cst_72 = arith.constant 1.000000e+00 : f32
    %113 = vector.broadcast %cst_72 : f32 to vector<4x128xf32>
    %114 = arith.addf %113, %112 : vector<4x128xf32>
    %115 = arith.divf %113, %114 : vector<4x128xf32>
    %c0_73 = arith.constant 0 : index
    %c0_74 = arith.constant 0 : index
    %116 = vector.load %arg6[%c0_73, %c0_74] : memref<4x128xf32, #tpu.memory_space<vmem>>, vector<4x128xf32>
    tpu.vector_store %arg6[%c0_73, %c0_74], %115 {strides = array<i32>} : memref<4x128xf32, #tpu.memory_space<vmem>>, vector<4x128xf32>,
    return
  }
  func.func @transform_0(%arg0: i32) -> (i32, i32) {
    %c0_i32 = arith.constant 0 : i32
    %c0_i32_0 = arith.constant 0 : i32
    return %c0_i32, %arg0 : i32, i32
  }
  func.func @transform_1(%arg0: i32) -> (i32, i32, i32) {
    %c0_i32 = arith.constant 0 : i32
    %c0_i32_0 = arith.constant 0 : i32
    %c0_i32_1 = arith.constant 0 : i32
    %c0_i32_2 = arith.constant 0 : i32
    return %c0_i32, %c0_i32_0, %c0_i32_1 : i32, i32, i32
  }
  func.func @transform_2(%arg0: i32) -> (i32, i32, i32) {
    %c0_i32 = arith.constant 0 : i32
    %c0_i32_0 = arith.constant 0 : i32
    %c0_i32_1 = arith.constant 0 : i32
    %c0_i32_2 = arith.constant 0 : i32
    return %c0_i32, %c0_i32_0, %c0_i32_1 : i32, i32, i32
  }
  func.func @transform_3(%arg0: i32) -> (i32, i32) {
    %c0_i32 = arith.constant 0 : i32
    %c0_i32_0 = arith.constant 0 : i32
    %c0_i32_1 = arith.constant 0 : i32
    return %c0_i32, %c0_i32_0 : i32, i32
  }
  func.func @transform_4(%arg0: i32) -> (i32, i32) {
    %c0_i32 = arith.constant 0 : i32
    %c0_i32_0 = arith.constant 0 : i32
    %c0_i32_1 = arith.constant 0 : i32
    return %c0_i32, %c0_i32_0 : i32, i32
  }
  func.func @transform_5(%arg0: i32) -> (i32, i32) {
    %c0_i32 = arith.constant 0 : i32
    %c0_i32_0 = arith.constant 0 : i32
    return %c0_i32, %arg0 : i32, i32
  }
}

</mosaic_0001>

<llo_original>
// kernel: mlp_criteo_forward.1
$region0: #{mlp_criteo_forward.1}
  #allocation0 [shape = 'u32[]', space=smem, size = 0x4, offset = 0x4, fixed_abs, tag = 'smem constant byte address 0x4 - core index']
  #allocation1 [shape = 'u32[144,128]{1,0:T(1,128)}', space=vmem, size = 0x12000, scoped, tag = 'internal scratch']
  %s0 = inlined_call_operand.vmem [shape: bf16[256,256], index: 0, kind: input, shape index: {}]
  %s1 = inlined_call_operand.vmem [shape: bf16[9,256,256], index: 1, kind: input, shape index: {}]
  %s2 = inlined_call_operand.vmem [shape: f32[9,256,1], index: 2, kind: input, shape index: {}]
  %s3 = inlined_call_operand.vmem [shape: f32[256,1], index: 3, kind: input, shape index: {}]
  %s4 = inlined_call_operand.vmem [shape: f32[4,1], index: 4, kind: input, shape index: {}]
  %s5 = inlined_call_operand.vmem [shape: f32[4,256], index: 5, kind: output, shape index: {}]
  %s6 = sld [smem:[#allocation0]]
  $region94: #{mlp_criteo_forward.1} parent=0
    _
  %s8 = ssub.s32 1, %s6
  %s9 = scalar_select 0, %s8, %s6
  $region1: #{mlp_criteo_forward.1} parent=0
    #allocation2 [shape = 'u8[131072]{0}', space=vmem, size = 0x20000, scoped, tag = 'input window, operand 0']
    loop: start=0, step=1, limit=4
    $region2: #{mlp_criteo_forward.1} parent=1 // loop_pre_header
      _
    $region3: #{mlp_criteo_forward.1} parent=1 // loop_header
      %s11 = sphi 0, %s15
      %p12 = scmp.ge.s32.totalorder %s11, 4
      %s21 = sphi 0, %s23
      %s24 = sphi 0, %s21
      %s25 = sphi 0, %s24
      %s41 = sphi 0, %s25
      %s45 = sphi 0, %s45
      %s47 = sphi 0, %s45
      %s48 = sphi 0, %s47
      %s62 = sphi 0, %s48
      %s66 = sphi 0, %s66
      %s68 = sphi 0, %s66
      %s69 = sphi 0, %s68
      %s83 = sphi 0, %s69
      %s87 = sphi 0, %s87
      %s89 = sphi 0, %s87
      %s90 = sphi 0, %s89
      %s104 = sphi 0, %s90
      %s108 = sphi 0, %s108
      %s110 = sphi 0, %s108
      %s111 = sphi 0, %s110
      %s125 = sphi 0, %s111
      %s131 = sphi 0, %s133
      %s134 = sphi 0, %s131
      %s135 = sphi 0, %s134
      %s151 = sphi 0, %s135
    $region4: #{mlp_criteo_forward.1} parent=1 // loop_header_branch
      %14 = sbr.rel (%p12) target = $region8
    $region5: #{mlp_criteo_forward.1} parent=1 // loop_body
      %s16 = ssub.s32 %s11, 1
      %s17 = ssub.s32 %s11, 2
      %s18 = sadd.s32 %s11, 1
      %s19 = ssub.s32 %s11, %s18
      %p20 = scmp.eq.s32.totalorder %s19, 0
      %s22 = sadd.s32 %s21, 1
      %s23 = scalar_select %p20, %s21, %s22
      %p26 = pneg %p20
      %p27 = scmp.eq.s32.totalorder %s11, 1
      %p28 = por %p26, %p27
      %p29 = scmp.ne.s32.totalorder %s21, %s24
      %p30 = scmp.eq.s32.totalorder %s11, 0
      %p31 = por %p29, %p30
      %p32 = scmp.ne.s32.totalorder %s21, %s24
      %p33 = scmp.eq.s32.totalorder %s16, 1
      %p34 = por %p32, %p33
      %p35 = scmp.ne.s32.totalorder %s24, %s25
      %p36 = scmp.eq.s32.totalorder %s16, 0
      %p37 = por %p35, %p36
      %p38 = scmp.ne.s32.totalorder %s24, %s25
      %p39 = scmp.eq.s32.totalorder %s17, 1
      %p40 = por %p38, %p39
      %p42 = scmp.ne.s32.totalorder %s25, %s41
      %p43 = scmp.eq.s32.totalorder %s17, 0
      %p44 = por %p42, %p43
      %s46 = sadd.s32 %s45, 1
      %p49 = scmp.eq.s32.totalorder %s11, 1
      %p50 = scmp.ne.s32.totalorder %s45, %s47
      %p51 = scmp.eq.s32.totalorder %s11, 0
      %p52 = por %p50, %p51
      %p53 = scmp.ne.s32.totalorder %s45, %s47
      %p54 = scmp.eq.s32.totalorder %s16, 1
      %p55 = por %p53, %p54
      %p56 = scmp.ne.s32.totalorder %s47, %s48
      %p57 = scmp.eq.s32.totalorder %s16, 0
      %p58 = por %p56, %p57
      %p59 = scmp.ne.s32.totalorder %s47, %s48
      %p60 = scmp.eq.s32.totalorder %s17, 1
      %p61 = por %p59, %p60
      %p63 = scmp.ne.s32.totalorder %s48, %s62
      %p64 = scmp.eq.s32.totalorder %s17, 0
      %p65 = por %p63, %p64
      %s67 = sadd.s32 %s66, 1
      %p70 = scmp.eq.s32.totalorder %s11, 1
      %p71 = scmp.ne.s32.totalorder %s66, %s68
      %p72 = scmp.eq.s32.totalorder %s11, 0
      %p73 = por %p71, %p72
      %p74 = scmp.ne.s32.totalorder %s66, %s68
      %p75 = scmp.eq.s32.totalorder %s16, 1
      %p76 = por %p74, %p75
      %p77 = scmp.ne.s32.totalorder %s68, %s69
      %p78 = scmp.eq.s32.totalorder %s16, 0
      %p79 = por %p77, %p78
      %p80 = scmp.ne.s32.totalorder %s68, %s69
      %p81 = scmp.eq.s32.totalorder %s17, 1
      %p82 = por %p80, %p81
      %p84 = scmp.ne.s32.totalorder %s69, %s83
      %p85 = scmp.eq.s32.totalorder %s17, 0
      %p86 = por %p84, %p85
      %s88 = sadd.s32 %s87, 1
      %p91 = scmp.eq.s32.totalorder %s11, 1
      %p92 = scmp.ne.s32.totalorder %s87, %s89
      %p93 = scmp.eq.s32.totalorder %s11, 0
      %p94 = por %p92, %p93
      %p95 = scmp.ne.s32.totalorder %s87, %s89
      %p96 = scmp.eq.s32.totalorder %s16, 1
      %p97 = por %p95, %p96
      %p98 = scmp.ne.s32.totalorder %s89, %s90
      %p99 = scmp.eq.s32.totalorder %s16, 0
      %p100 = por %p98, %p99
      %p101 = scmp.ne.s32.totalorder %s89, %s90
      %p102 = scmp.eq.s32.totalorder %s17, 1
      %p103 = por %p101, %p102
      %p105 = scmp.ne.s32.totalorder %s90, %s104
      %p106 = scmp.eq.s32.totalorder %s17, 0
      %p107 = por %p105, %p106
      %s109 = sadd.s32 %s108, 1
      %p112 = scmp.eq.s32.totalorder %s11, 1
      %p113 = scmp.ne.s32.totalorder %s108, %s110
      %p114 = scmp.eq.s32.totalorder %s11, 0
      %p115 = por %p113, %p114
      %p116 = scmp.ne.s32.totalorder %s108, %s110
      %p117 = scmp.eq.s32.totalorder %s16, 1
      %p118 = por %p116, %p117
      %p119 = scmp.ne.s32.totalorder %s110, %s111
      %p120 = scmp.eq.s32.totalorder %s16, 0
      %p121 = por %p119, %p120
      %p122 = scmp.ne.s32.totalorder %s110, %s111
      %p123 = scmp.eq.s32.totalorder %s17, 1
      %p124 = por %p122, %p123
      %p126 = scmp.ne.s32.totalorder %s111, %s125
      %p127 = scmp.eq.s32.totalorder %s17, 0
      %p128 = por %p126, %p127
      %s129 = ssub.s32 %s11, %s18
      %p130 = scmp.eq.s32.totalorder %s129, 0
      %s132 = sadd.s32 %s131, 1
      %s133 = scalar_select %p130, %s131, %s132
      %p136 = pneg %p130
      %p137 = scmp.eq.s32.totalorder %s11, 1
      %p138 = por %p136, %p137
      %p139 = scmp.ne.s32.totalorder %s131, %s134
      %p140 = scmp.eq.s32.totalorder %s11, 0
      %p141 = por %p139, %p140
      %p142 = scmp.ne.s32.totalorder %s131, %s134
      %p143 = scmp.eq.s32.totalorder %s16, 1
      %p144 = por %p142, %p143
      %p145 = scmp.ne.s32.totalorder %s134, %s135
      %p146 = scmp.eq.s32.totalorder %s16, 0
      %p147 = por %p145, %p146
      %p148 = scmp.ne.s32.totalorder %s134, %s135
      %p149 = scmp.eq.s32.totalorder %s17, 1
      %p150 = por %p148, %p149
      %p152 = scmp.ne.s32.totalorder %s135, %s151
      %p153 = scmp.eq.s32.totalorder %s17, 0
      %p154 = por %p152, %p153
      %p155 = scmp.le.s32.totalorder 1, %s11
      %p156 = scmp.lt.s32.totalorder %s11, 3
      %p157 = pnand %p155, %p156
      %p158 = pneg %p157
      // Predicated region
      $region9: #{mlp_criteo_forward.1} parent=5 // pred_check
        _
      $region10: #{mlp_criteo_forward.1} parent=5 // pred_check_branch
        %160 = sbr.rel (%p157) target = $region12
      $region11: #{mlp_criteo_forward.1} parent=5 // pred_region
        %s161 = ssub.s32 %s11, 1
        // Predicated region
        $region13: #{mlp_criteo_forward.1} parent=11 // pred_check
          %p162 = pneg %p58
        $region14: #{mlp_criteo_forward.1} parent=11 // pred_check_branch
          %164 = sbr.rel (%p162) target = $region16
        $region15: #{mlp_criteo_forward.1} parent=11 // pred_region
          _
        $region16: #{mlp_criteo_forward.1} parent=11 // pred_fallthru
          _
        // Predicated region
        $region17: #{mlp_criteo_forward.1} parent=11 // pred_check
          %p165 = pneg %p79
        $region18: #{mlp_criteo_forward.1} parent=11 // pred_check_branch
          %167 = sbr.rel (%p165) target = $region20
        $region19: #{mlp_criteo_forward.1} parent=11 // pred_region
          _
        $region20: #{mlp_criteo_forward.1} parent=11 // pred_fallthru
          _
        // Predicated region
        $region21: #{mlp_criteo_forward.1} parent=11 // pred_check
          %p168 = pneg %p100
        $region22: #{mlp_criteo_forward.1} parent=11 // pred_check_branch
          %170 = sbr.rel (%p168) target = $region24
        $region23: #{mlp_criteo_forward.1} parent=11 // pred_region
          _
        $region24: #{mlp_criteo_forward.1} parent=11 // pred_fallthru
          _
        // Predicated region
        $region25: #{mlp_criteo_forward.1} parent=11 // pred_check
          %p171 = pneg %p121
        $region26: #{mlp_criteo_forward.1} parent=11 // pred_check_branch
          %173 = sbr.rel (%p171) target = $region28
        $region27: #{mlp_criteo_forward.1} parent=11 // pred_region
          _
        $region28: #{mlp_criteo_forward.1} parent=11 // pred_fallthru
          _
      $region12: #{mlp_criteo_forward.1} parent=5 // pred_fallthru
        _
      %p174 = scmp.lt.s32.totalorder %s11, 2
      // Predicated region
      $region29: #{mlp_criteo_forward.1} parent=5 // pred_check
        %p175 = pneg %p174
      $region30: #{mlp_criteo_forward.1} parent=5 // pred_check_branch
        %177 = sbr.rel (%p175) target = $region32
      $region31: #{mlp_criteo_forward.1} parent=5 // pred_region
        // Predicated region
        $region33: #{mlp_criteo_forward.1} parent=31 // pred_check
          %p178 = pneg %p31
        $region34: #{mlp_criteo_forward.1} parent=31 // pred_check_branch
          %180 = sbr.rel (%p178) target = $region36
        $region35: #{mlp_criteo_forward.1} parent=31 // pred_region
          %s181 = sand.u32 %s21, 1
          %s182 = sand.u32 %s21, 1
          %s183 = smul.addr %s182, 128
          %s184 = scalar_lea.vmem [#allocation2], %s183
          %s185 = smul.addr %s11, 4
          %s186 = scalar_lea.vmem %s0, %s185
          // Predicated region
          $region37: #{mlp_criteo_forward.1} parent=35 // pred_check
            _
          $region38: #{mlp_criteo_forward.1} parent=35 // pred_check_branch
            %188 = sbr.rel (0) target = $region40
          $region39: #{mlp_criteo_forward.1} parent=35 // pred_region
            // Predicated region
            $region41: #{mlp_criteo_forward.1} parent=39 // pred_check
              _
            $region42: #{mlp_criteo_forward.1} parent=39 // pred_check_branch
              %190 = sbr.rel target = $region44
            $region43: #{mlp_criteo_forward.1} parent=39 // pred_region
              // Predicated region
              $region56: #{mlp_criteo_forward.1} parent=43 // pred_check
                _
              $region57: #{mlp_criteo_forward.1} parent=43 // pred_check_branch
                %268 = sbr.rel (0) target = $region59
              $region58: #{mlp_criteo_forward.1} parent=43 // pred_region
                loop: start=0, step=1, limit=1
                $region60: #{mlp_criteo_forward.1} parent=58 // loop_pre_header
                  _
                $region61: #{mlp_criteo_forward.1} parent=58 // loop_header
                  %s270 = sphi 0, %s274
                  %p271 = scmp.ge.s32.totalorder %s270, 1
                  %s275 = sphi %s186, %s186
                  %s276 = sphi %s184, %s184
                $region62: #{mlp_criteo_forward.1} parent=58 // loop_header_branch
                  %273 = sbr.rel (%p271) target = $region66
                $region63: #{mlp_criteo_forward.1} parent=58 // loop_body
                  _
                $region64: #{mlp_criteo_forward.1} parent=58 // loop_footer
                  %s274 = sadd.s32 1, %s270
                $region65: #{mlp_criteo_forward.1} parent=58 // loop_footer_branch
                  %269 = sbr.rel target = $region61
                $region66: #{mlp_criteo_forward.1} parent=58 // loop_exit
                  _
                %s278 = ssub.s32 16, 1
                loop: start=0, step=1, limit=1
                $region67: #{mlp_criteo_forward.1} parent=58 // loop_pre_header
                  _
                $region68: #{mlp_criteo_forward.1} parent=58 // loop_header
                  %s280 = sphi 0, %s284
                  %p281 = scmp.ge.s32.totalorder %s280, 1
                  %s285 = sphi %s186, %s186
                  %s286 = sphi %s184, %s184
                $region69: #{mlp_criteo_forward.1} parent=58 // loop_header_branch
                  %283 = sbr.rel (%p281) target = $region73
                $region70: #{mlp_criteo_forward.1} parent=58 // loop_body
                  %v287 = vld [vmem:[%s285] sm:%s278]
                  %288 = vst [vmem:[%s286] sm:%s278] %v287
                  %v289 = vld [vmem:[%s285 + $0x8] sm:%s278]
                  %290 = vst [vmem:[%s286 + $0x4] sm:%s278] %v289
                  %v291 = vld [vmem:[%s285 + $0x10] sm:%s278]
                  %292 = vst [vmem:[%s286 + $0x8] sm:%s278] %v291
                  %v293 = vld [vmem:[%s285 + $0x18] sm:%s278]
                  %294 = vst [vmem:[%s286 + $0xc] sm:%s278] %v293
                  %v295 = vld [vmem:[%s285 + $0x20] sm:%s278]
                  %296 = vst [vmem:[%s286 + $0x10] sm:%s278] %v295
                  %v297 = vld [vmem:[%s285 + $0x28] sm:%s278]
                  %298 = vst [vmem:[%s286 + $0x14] sm:%s278] %v297
                  %v299 = vld [vmem:[%s285 + $0x30] sm:%s278]
                  %300 = vst [vmem:[%s286 + $0x18] sm:%s278] %v299
                  %v301 = vld [vmem:[%s285 + $0x38] sm:%s278]
                  %302 = vst [vmem:[%s286 + $0x1c] sm:%s278] %v301
                  %v303 = vld [vmem:[%s285 + $0x40] sm:%s278]
                  %304 = vst [vmem:[%s286 + $0x20] sm:%s278] %v303
                  %v305 = vld [vmem:[%s285 + $0x48] sm:%s278]
                  %306 = vst [vmem:[%s286 + $0x24] sm:%s278] %v305
                  %v307 = vld [vmem:[%s285 + $0x50] sm:%s278]
                  %308 = vst [vmem:[%s286 + $0x28] sm:%s278] %v307
                  %v309 = vld [vmem:[%s285 + $0x58] sm:%s278]
                  %310 = vst [vmem:[%s286 + $0x2c] sm:%s278] %v309
                  %v311 = vld [vmem:[%s285 + $0x60] sm:%s278]
                  %312 = vst [vmem:[%s286 + $0x30] sm:%s278] %v311
                  %v313 = vld [vmem:[%s285 + $0x68] sm:%s278]
                  %314 = vst [vmem:[%s286 + $0x34] sm:%s278] %v313
                  %v315 = vld [vmem:[%s285 + $0x70] sm:%s278]
                  %316 = vst [vmem:[%s286 + $0x38] sm:%s278] %v315
                  %v317 = vld [vmem:[%s285 + $0x78] sm:%s278]
                  %318 = vst [vmem:[%s286 + $0x3c] sm:%s278] %v317
                  %v319 = vld [vmem:[%s285 + $0x80] sm:%s278]
                  %320 = vst [vmem:[%s286 + $0x40] sm:%s278] %v319
                  %v321 = vld [vmem:[%s285 + $0x88] sm:%s278]
                  %322 = vst [vmem:[%s286 + $0x44] sm:%s278] %v321
                  %v323 = vld [vmem:[%s285 + $0x90] sm:%s278]
                  %324 = vst [vmem:[%s286 + $0x48] sm:%s278] %v323
                  %v325 = vld [vmem:[%s285 + $0x98] sm:%s278]
                  %326 = vst [vmem:[%s286 + $0x4c] sm:%s278] %v325
                  %v327 = vld [vmem:[%s285 + $0xa0] sm:%s278]
                  %328 = vst [vmem:[%s286 + $0x50] sm:%s278] %v327
                  %v329 = vld [vmem:[%s285 + $0xa8] sm:%s278]
                  %330 = vst [vmem:[%s286 + $0x54] sm:%s278] %v329
                  %v331 = vld [vmem:[%s285 + $0xb0] sm:%s278]
                  %332 = vst [vmem:[%s286 + $0x58] sm:%s278] %v331
                  %v333 = vld [vmem:[%s285 + $0xb8] sm:%s278]
                  %334 = vst [vmem:[%s286 + $0x5c] sm:%s278] %v333
                  %v335 = vld [vmem:[%s285 + $0xc0] sm:%s278]
                  %336 = vst [vmem:[%s286 + $0x60] sm:%s278] %v335
                  %v337 = vld [vmem:[%s285 + $0xc8] sm:%s278]
                  %338 = vst [vmem:[%s286 + $0x64] sm:%s278] %v337
                  %v339 = vld [vmem:[%s285 + $0xd0] sm:%s278]
                  %340 = vst [vmem:[%s286 + $0x68] sm:%s278] %v339
                  %v341 = vld [vmem:[%s285 + $0xd8] sm:%s278]
                  %342 = vst [vmem:[%s286 + $0x6c] sm:%s278] %v341
                  %v343 = vld [vmem:[%s285 + $0xe0] sm:%s278]
                  %344 = vst [vmem:[%s286 + $0x70] sm:%s278] %v343
                  %v345 = vld [vmem:[%s285 + $0xe8] sm:%s278]
                  %346 = vst [vmem:[%s286 + $0x74] sm:%s278] %v345
                  %v347 = vld [vmem:[%s285 + $0xf0] sm:%s278]
                  %348 = vst [vmem:[%s286 + $0x78] sm:%s278] %v347
                  %v349 = vld [vmem:[%s285 + $0xf8] sm:%s278]
                  %350 = vst [vmem:[%s286 + $0x7c] sm:%s278] %v349
                $region71: #{mlp_criteo_forward.1} parent=58 // loop_footer
                  %s284 = sadd.s32 1, %s280
                $region72: #{mlp_criteo_forward.1} parent=58 // loop_footer_branch
                  %279 = sbr.rel target = $region68
                $region73: #{mlp_criteo_forward.1} parent=58 // loop_exit
                  _
              $region59: #{mlp_criteo_forward.1} parent=43 // pred_fallthru
                _
            $region44: #{mlp_criteo_forward.1} parent=39 // pred_fallthru
              _
            // Predicated region
            $region45: #{mlp_criteo_forward.1} parent=39 // pred_check
              _
            $region46: #{mlp_criteo_forward.1} parent=39 // pred_check_branch
              %192 = sbr.rel (0) target = $region48
            $region47: #{mlp_criteo_forward.1} parent=39 // pred_region
              %s194 = ssub.s32 16, 1
              loop: start=0, step=1, limit=1
              $region49: #{mlp_criteo_forward.1} parent=47 // loop_pre_header
                _
              $region50: #{mlp_criteo_forward.1} parent=47 // loop_header
                %s196 = sphi 0, %s200
                %p197 = scmp.ge.s32.totalorder %s196, 1
                %s201 = sphi %s186, %s186
                %s202 = sphi %s184, %s184
              $region51: #{mlp_criteo_forward.1} parent=47 // loop_header_branch
                %199 = sbr.rel (%p197) target = $region55
              $region52: #{mlp_criteo_forward.1} parent=47 // loop_body
                %v203 = vld [vmem:[%s201] sm:%s194]
                %204 = vst [vmem:[%s202] sm:%s194] %v203
                %v205 = vld [vmem:[%s201 + $0x8] sm:%s194]
                %206 = vst [vmem:[%s202 + $0x4] sm:%s194] %v205
                %v207 = vld [vmem:[%s201 + $0x10] sm:%s194]
                %208 = vst [vmem:[%s202 + $0x8] sm:%s194] %v207
                %v209 = vld [vmem:[%s201 + $0x18] sm:%s194]
                %210 = vst [vmem:[%s202 + $0xc] sm:%s194] %v209
                %v211 = vld [vmem:[%s201 + $0x20] sm:%s194]
                %212 = vst [vmem:[%s202 + $0x10] sm:%s194] %v211
                %v213 = vld [vmem:[%s201 + $0x28] sm:%s194]
                %214 = vst [vmem:[%s202 + $0x14] sm:%s194] %v213
                %v215 = vld [vmem:[%s201 + $0x30] sm:%s194]
                %216 = vst [vmem:[%s202 + $0x18] sm:%s194] %v215
                %v217 = vld [vmem:[%s201 + $0x38] sm:%s194]
                %218 = vst [vmem:[%s202 + $0x1c] sm:%s194] %v217
                %v219 = vld [vmem:[%s201 + $0x40] sm:%s194]
                %220 = vst [vmem:[%s202 + $0x20] sm:%s194] %v219
                %v221 = vld [vmem:[%s201 + $0x48] sm:%s194]
                %222 = vst [vmem:[%s202 + $0x24] sm:%s194] %v221
                %v223 = vld [vmem:[%s201 + $0x50] sm:%s194]
                %224 = vst [vmem:[%s202 + $0x28] sm:%s194] %v223
                %v225 = vld [vmem:[%s201 + $0x58] sm:%s194]
                %226 = vst [vmem:[%s202 + $0x2c] sm:%s194] %v225
                %v227 = vld [vmem:[%s201 + $0x60] sm:%s194]
                %228 = vst [vmem:[%s202 + $0x30] sm:%s194] %v227
                %v229 = vld [vmem:[%s201 + $0x68] sm:%s194]
                %230 = vst [vmem:[%s202 + $0x34] sm:%s194] %v229
                %v231 = vld [vmem:[%s201 + $0x70] sm:%s194]
                %232 = vst [vmem:[%s202 + $0x38] sm:%s194] %v231
                %v233 = vld [vmem:[%s201 + $0x78] sm:%s194]
                %234 = vst [vmem:[%s202 + $0x3c] sm:%s194] %v233
                %v235 = vld [vmem:[%s201 + $0x80] sm:%s194]
                %236 = vst [vmem:[%s202 + $0x40] sm:%s194] %v235
                %v237 = vld [vmem:[%s201 + $0x88] sm:%s194]
                %238 = vst [vmem:[%s202 + $0x44] sm:%s194] %v237
                %v239 = vld [vmem:[%s201 + $0x90] sm:%s194]
                %240 = vst [vmem:[%s202 + $0x48] sm:%s194] %v239
                %v241 = vld [vmem:[%s201 + $0x98] sm:%s194]
                %242 = vst [vmem:[%s202 + $0x4c] sm:%s194] %v241
                %v243 = vld [vmem:[%s201 + $0xa0] sm:%s194]
                %244 = vst [vmem:[%s202 + $0x50] sm:%s194] %v243
                %v245 = vld [vmem:[%s201 + $0xa8] sm:%s194]
                %246 = vst [vmem:[%s202 + $0x54] sm:%s194] %v245
                %v247 = vld [vmem:[%s201 + $0xb0] sm:%s194]
                %248 = vst [vmem:[%s202 + $0x58] sm:%s194] %v247
                %v249 = vld [vmem:[%s201 + $0xb8] sm:%s194]
                %250 = vst [vmem:[%s202 + $0x5c] sm:%s194] %v249
                %v251 = vld [vmem:[%s201 + $0xc0] sm:%s194]
                %252 = vst [vmem:[%s202 + $0x60] sm:%s194] %v251
                %v253 = vld [vmem:[%s201 + $0xc8] sm:%s194]
                %254 = vst [vmem:[%s202 + $0x64] sm:%s194] %v253
                %v255 = vld [vmem:[%s201 + $0xd0] sm:%s194]
                %256 = vst [vmem:[%s202 + $0x68] sm:%s194] %v255
                %v257 = vld [vmem:[%s201 + $0xd8] sm:%s194]
                %258 = vst [vmem:[%s202 + $0x6c] sm:%s194] %v257
                %v259 = vld [vmem:[%s201 + $0xe0] sm:%s194]
                %260 = vst [vmem:[%s202 + $0x70] sm:%s194] %v259
                %v261 = vld [vmem:[%s201 + $0xe8] sm:%s194]
                %262 = vst [vmem:[%s202 + $0x74] sm:%s194] %v261
                %v263 = vld [vmem:[%s201 + $0xf0] sm:%s194]
                %264 = vst [vmem:[%s202 + $0x78] sm:%s194] %v263
                %v265 = vld [vmem:[%s201 + $0xf8] sm:%s194]
                %266 = vst [vmem:[%s202 + $0x7c] sm:%s194] %v265
              $region53: #{mlp_criteo_forward.1} parent=47 // loop_footer
                %s200 = sadd.s32 1, %s196
              $region54: #{mlp_criteo_forward.1} parent=47 // loop_footer_branch
                %195 = sbr.rel target = $region50
              $region55: #{mlp_criteo_forward.1} parent=47 // loop_exit
                _
            $region48: #{mlp_criteo_forward.1} parent=39 // pred_fallthru
              _
          $region40: #{mlp_criteo_forward.1} parent=35 // pred_fallthru
            _
          %351 = vnop
        $region36: #{mlp_criteo_forward.1} parent=31 // pred_fallthru
          _
      $region32: #{mlp_criteo_forward.1} parent=5 // pred_fallthru
        _
      %p352 = scmp.le.s32.totalorder 1, %s11
      %p353 = scmp.lt.s32.totalorder %s11, 3
      %p354 = pnand %p352, %p353
      %p355 = pneg %p354
      // Predicated region
      $region74: #{mlp_criteo_forward.1} parent=5 // pred_check
        _
      $region75: #{mlp_criteo_forward.1} parent=5 // pred_check_branch
        %357 = sbr.rel (%p354) target = $region77
      $region76: #{mlp_criteo_forward.1} parent=5 // pred_region
        %s358 = ssub.s32 %s11, 1
        %s359 = sand.u32 %s24, 1
        %s360 = sand.u32 %s24, 1
        %s361 = smul.addr %s360, 128
        %s362 = scalar_lea.vmem [#allocation2], %s361
        // Predicated region
        $region78: #{mlp_criteo_forward.1} parent=76 // pred_check
          %p363 = pneg %p37
        $region79: #{mlp_criteo_forward.1} parent=76 // pred_check_branch
          %365 = sbr.rel (%p363) target = $region81
        $region80: #{mlp_criteo_forward.1} parent=76 // pred_region
          _
        $region81: #{mlp_criteo_forward.1} parent=76 // pred_fallthru
          _
        %s366 = sand.u32 %s24, 1
        %s367 = sand.u32 %s24, 1
        %s368 = smul.addr %s367, 128
        %s369 = scalar_lea.vmem [#allocation2], %s368
        %p370 = pneg %p37
        %p371 = pneg %p34
        %p372 = pneg %p58
        %p373 = pneg %p55
        %p374 = pneg %p79
        %p375 = pneg %p76
        %p376 = pneg %p100
        %p377 = pneg %p97
        %p378 = pneg %p121
        %p379 = pneg %p118
        %p380 = pneg %p147
        %p381 = pneg %p144
        %p382 = scmp.lt.s32.totalorder %s16, 1
        %s383 = scalar_select %p382, %s16, 1
        %s384 = smul.addr %s383, 4
        %s385 = scalar_lea.vmem %s5, %s384
        %p386 = scmp.lt.s32.totalorder %s16, 1
        %s387 = scalar_select %p386, %s16, 1
        %s388 = smul.addr %s387, 4
        %s389 = scalar_lea.vmem %s5, %s388
        %v391 = vld [vmem:[%s362] sm:$0xf]
        %v392 = vld [vmem:[%s362 + $0x4] sm:$0xf]
        %v393 = vld [vmem:[%s362 + $0x8] sm:$0xf]
        %v394 = vld [vmem:[%s362 + $0xc] sm:$0xf]
        %v395 = vld [vmem:[%s362 + $0x10] sm:$0xf]
        %v396 = vld [vmem:[%s362 + $0x14] sm:$0xf]
        %v397 = vld [vmem:[%s362 + $0x18] sm:$0xf]
        %v398 = vld [vmem:[%s362 + $0x1c] sm:$0xf]
        %v399 = vld [vmem:[%s362 + $0x20] sm:$0xf]
        %v400 = vld [vmem:[%s362 + $0x24] sm:$0xf]
        %v401 = vld [vmem:[%s362 + $0x28] sm:$0xf]
        %v402 = vld [vmem:[%s362 + $0x2c] sm:$0xf]
        %v403 = vld [vmem:[%s362 + $0x30] sm:$0xf]
        %v404 = vld [vmem:[%s362 + $0x34] sm:$0xf]
        %v405 = vld [vmem:[%s362 + $0x38] sm:$0xf]
        %v406 = vld [vmem:[%s362 + $0x3c] sm:$0xf]
        %v407 = vld [vmem:[%s362 + $0x40] sm:$0xf]
        %v408 = vld [vmem:[%s362 + $0x44] sm:$0xf]
        %v409 = vld [vmem:[%s362 + $0x48] sm:$0xf]
        %v410 = vld [vmem:[%s362 + $0x4c] sm:$0xf]
        %v411 = vld [vmem:[%s362 + $0x50] sm:$0xf]
        %v412 = vld [vmem:[%s362 + $0x54] sm:$0xf]
        %v413 = vld [vmem:[%s362 + $0x58] sm:$0xf]
        %v414 = vld [vmem:[%s362 + $0x5c] sm:$0xf]
        %v415 = vld [vmem:[%s362 + $0x60] sm:$0xf]
        %v416 = vld [vmem:[%s362 + $0x64] sm:$0xf]
        %v417 = vld [vmem:[%s362 + $0x68] sm:$0xf]
        %v418 = vld [vmem:[%s362 + $0x6c] sm:$0xf]
        %v419 = vld [vmem:[%s362 + $0x70] sm:$0xf]
        %v420 = vld [vmem:[%s362 + $0x74] sm:$0xf]
        %v421 = vld [vmem:[%s362 + $0x78] sm:$0xf]
        %v422 = vld [vmem:[%s362 + $0x7c] sm:$0xf]
        %v423 = vld [vmem:[%s1] sm:$0xff]
        %v424 = vld [vmem:[%s1 + $0x8] sm:$0xff]
        %v425 = vld [vmem:[%s1 + $0x10] sm:$0xff]
        %v426 = vld [vmem:[%s1 + $0x18] sm:$0xff]
        %v427 = vld [vmem:[%s1 + $0x20] sm:$0xff]
        %v428 = vld [vmem:[%s1 + $0x28] sm:$0xff]
        %v429 = vld [vmem:[%s1 + $0x30] sm:$0xff]
        %v430 = vld [vmem:[%s1 + $0x38] sm:$0xff]
        %v431 = vld [vmem:[%s1 + $0x40] sm:$0xff]
        %v432 = vld [vmem:[%s1 + $0x48] sm:$0xff]
        %v433 = vld [vmem:[%s1 + $0x50] sm:$0xff]
        %v434 = vld [vmem:[%s1 + $0x58] sm:$0xff]
        %v435 = vld [vmem:[%s1 + $0x60] sm:$0xff]
        %v436 = vld [vmem:[%s1 + $0x68] sm:$0xff]
        %v437 = vld [vmem:[%s1 + $0x70] sm:$0xff]
        %v438 = vld [vmem:[%s1 + $0x78] sm:$0xff]
        %v439 = vld [vmem:[%s1 + $0x80] sm:$0xff]
        %v440 = vld [vmem:[%s1 + $0x88] sm:$0xff]
        %v441 = vld [vmem:[%s1 + $0x90] sm:$0xff]
        %v442 = vld [vmem:[%s1 + $0x98] sm:$0xff]
        %v443 = vld [vmem:[%s1 + $0xa0] sm:$0xff]
        %v444 = vld [vmem:[%s1 + $0xa8] sm:$0xff]
        %v445 = vld [vmem:[%s1 + $0xb0] sm:$0xff]
        %v446 = vld [vmem:[%s1 + $0xb8] sm:$0xff]
        %v447 = vld [vmem:[%s1 + $0xc0] sm:$0xff]
        %v448 = vld [vmem:[%s1 + $0xc8] sm:$0xff]
        %v449 = vld [vmem:[%s1 + $0xd0] sm:$0xff]
        %v450 = vld [vmem:[%s1 + $0xd8] sm:$0xff]
        %v451 = vld [vmem:[%s1 + $0xe0] sm:$0xff]
        %v452 = vld [vmem:[%s1 + $0xe8] sm:$0xff]
        %v453 = vld [vmem:[%s1 + $0xf0] sm:$0xff]
        %v454 = vld [vmem:[%s1 + $0xf8] sm:$0xff]
        %v455 = vld [vmem:[%s2] sm:$0xff]
        %v456 = vld [vmem:[%s2 + $0x8] sm:$0xff]
        %v457 = vld [vmem:[%s2 + $0x10] sm:$0xff]
        %v458 = vld [vmem:[%s2 + $0x18] sm:$0xff]
        %v459 = vld [vmem:[%s2 + $0x20] sm:$0xff]
        %v460 = vld [vmem:[%s2 + $0x28] sm:$0xff]
        %v461 = vld [vmem:[%s2 + $0x30] sm:$0xff]
        %v462 = vld [vmem:[%s2 + $0x38] sm:$0xff]
        %v463 = vld [vmem:[%s2 + $0x40] sm:$0xff]
        %v464 = vld [vmem:[%s2 + $0x48] sm:$0xff]
        %v465 = vld [vmem:[%s2 + $0x50] sm:$0xff]
        %v466 = vld [vmem:[%s2 + $0x58] sm:$0xff]
        %v467 = vld [vmem:[%s2 + $0x60] sm:$0xff]
        %v468 = vld [vmem:[%s2 + $0x68] sm:$0xff]
        %v469 = vld [vmem:[%s2 + $0x70] sm:$0xff]
        %v470 = vld [vmem:[%s2 + $0x78] sm:$0xff]
        %v471 = vld [vmem:[%s2 + $0x80] sm:$0xff]
        %v472 = vld [vmem:[%s2 + $0x88] sm:$0xff]
        %v473 = vld [vmem:[%s2 + $0x90] sm:$0xff]
        %v474 = vld [vmem:[%s2 + $0x98] sm:$0xff]
        %v475 = vld [vmem:[%s2 + $0xa0] sm:$0xff]
        %v476 = vld [vmem:[%s2 + $0xa8] sm:$0xff]
        %v477 = vld [vmem:[%s2 + $0xb0] sm:$0xff]
        %v478 = vld [vmem:[%s2 + $0xb8] sm:$0xff]
        %v479 = vld [vmem:[%s2 + $0xc0] sm:$0xff]
        %v480 = vld [vmem:[%s2 + $0xc8] sm:$0xff]
        %v481 = vld [vmem:[%s2 + $0xd0] sm:$0xff]
        %v482 = vld [vmem:[%s2 + $0xd8] sm:$0xff]
        %v483 = vld [vmem:[%s2 + $0xe0] sm:$0xff]
        %v484 = vld [vmem:[%s2 + $0xe8] sm:$0xff]
        %v485 = vld [vmem:[%s2 + $0xf0] sm:$0xff]
        %v486 = vld [vmem:[%s2 + $0xf8] sm:$0xff]
        %488 = vset.pattern.permute.xlu0 0
        %489 = vperm.xlu0 %488, %v455
        %v490 = vpop.permute.xlu0 %489
        %493 = vset.pattern.permute.xlu0 0
        %494 = vperm.xlu0 %493, %v456
        %v495 = vpop.permute.xlu0 %494
        %498 = vset.pattern.permute.xlu0 0
        %499 = vperm.xlu0 %498, %v457
        %v500 = vpop.permute.xlu0 %499
        %503 = vset.pattern.permute.xlu0 0
        %504 = vperm.xlu0 %503, %v458
        %v505 = vpop.permute.xlu0 %504
        %508 = vset.pattern.permute.xlu0 0
        %509 = vperm.xlu0 %508, %v459
        %v510 = vpop.permute.xlu0 %509
        %513 = vset.pattern.permute.xlu0 0
        %514 = vperm.xlu0 %513, %v460
        %v515 = vpop.permute.xlu0 %514
        %518 = vset.pattern.permute.xlu0 0
        %519 = vperm.xlu0 %518, %v461
        %v520 = vpop.permute.xlu0 %519
        %523 = vset.pattern.permute.xlu0 0
        %524 = vperm.xlu0 %523, %v462
        %v525 = vpop.permute.xlu0 %524
        %528 = vset.pattern.permute.xlu0 0
        %529 = vperm.xlu0 %528, %v463
        %v530 = vpop.permute.xlu0 %529
        %533 = vset.pattern.permute.xlu0 0
        %534 = vperm.xlu0 %533, %v464
        %v535 = vpop.permute.xlu0 %534
        %538 = vset.pattern.permute.xlu0 0
        %539 = vperm.xlu0 %538, %v465
        %v540 = vpop.permute.xlu0 %539
        %543 = vset.pattern.permute.xlu0 0
        %544 = vperm.xlu0 %543, %v466
        %v545 = vpop.permute.xlu0 %544
        %548 = vset.pattern.permute.xlu0 0
        %549 = vperm.xlu0 %548, %v467
        %v550 = vpop.permute.xlu0 %549
        %553 = vset.pattern.permute.xlu0 0
        %554 = vperm.xlu0 %553, %v468
        %v555 = vpop.permute.xlu0 %554
        %558 = vset.pattern.permute.xlu0 0
        %559 = vperm.xlu0 %558, %v469
        %v560 = vpop.permute.xlu0 %559
        %563 = vset.pattern.permute.xlu0 0
        %564 = vperm.xlu0 %563, %v470
        %v565 = vpop.permute.xlu0 %564
        %568 = vset.pattern.permute.xlu0 0
        %569 = vperm.xlu0 %568, %v471
        %v570 = vpop.permute.xlu0 %569
        %573 = vset.pattern.permute.xlu0 0
        %574 = vperm.xlu0 %573, %v472
        %v575 = vpop.permute.xlu0 %574
        %578 = vset.pattern.permute.xlu0 0
        %579 = vperm.xlu0 %578, %v473
        %v580 = vpop.permute.xlu0 %579
        %583 = vset.pattern.permute.xlu0 0
        %584 = vperm.xlu0 %583, %v474
        %v585 = vpop.permute.xlu0 %584
        %588 = vset.pattern.permute.xlu0 0
        %589 = vperm.xlu0 %588, %v475
        %v590 = vpop.permute.xlu0 %589
        %593 = vset.pattern.permute.xlu0 0
        %594 = vperm.xlu0 %593, %v476
        %v595 = vpop.permute.xlu0 %594
        %598 = vset.pattern.permute.xlu0 0
        %599 = vperm.xlu0 %598, %v477
        %v600 = vpop.permute.xlu0 %599
        %603 = vset.pattern.permute.xlu0 0
        %604 = vperm.xlu0 %603, %v478
        %v605 = vpop.permute.xlu0 %604
        %608 = vset.pattern.permute.xlu0 0
        %609 = vperm.xlu0 %608, %v479
        %v610 = vpop.permute.xlu0 %609
        %613 = vset.pattern.permute.xlu0 0
        %614 = vperm.xlu0 %613, %v480
        %v615 = vpop.permute.xlu0 %614
        %618 = vset.pattern.permute.xlu0 0
        %619 = vperm.xlu0 %618, %v481
        %v620 = vpop.permute.xlu0 %619
        %623 = vset.pattern.permute.xlu0 0
        %624 = vperm.xlu0 %623, %v482
        %v625 = vpop.permute.xlu0 %624
        %628 = vset.pattern.permute.xlu0 0
        %629 = vperm.xlu0 %628, %v483
        %v630 = vpop.permute.xlu0 %629
        %633 = vset.pattern.permute.xlu0 0
        %634 = vperm.xlu0 %633, %v484
        %v635 = vpop.permute.xlu0 %634
        %638 = vset.pattern.permute.xlu0 0
        %639 = vperm.xlu0 %638, %v485
        %v640 = vpop.permute.xlu0 %639
        %643 = vset.pattern.permute.xlu0 0
        %644 = vperm.xlu0 %643, %v486
        %v645 = vpop.permute.xlu0 %644
        %v679 = vunpack.c.l.b16 %v423
        %v680 = vunpack.c.h.b16 %v423
        %v681 = vunpack.c.l.b16 %v424
        %v682 = vunpack.c.h.b16 %v424
        %v683 = vunpack.c.l.b16 %v425
        %v684 = vunpack.c.h.b16 %v425
        %v685 = vunpack.c.l.b16 %v426
        %v686 = vunpack.c.h.b16 %v426
        %v687 = vunpack.c.l.b16 %v427
        %v688 = vunpack.c.h.b16 %v427
        %v689 = vunpack.c.l.b16 %v428
        %v690 = vunpack.c.h.b16 %v428
        %v691 = vunpack.c.l.b16 %v429
        %v692 = vunpack.c.h.b16 %v429
        %v693 = vunpack.c.l.b16 %v430
        %v694 = vunpack.c.h.b16 %v430
        %v695 = vunpack.c.l.b16 %v431
        %v696 = vunpack.c.h.b16 %v431
        %v697 = vunpack.c.l.b16 %v432
        %v698 = vunpack.c.h.b16 %v432
        %v699 = vunpack.c.l.b16 %v433
        %v700 = vunpack.c.h.b16 %v433
        %v701 = vunpack.c.l.b16 %v434
        %v702 = vunpack.c.h.b16 %v434
        %v703 = vunpack.c.l.b16 %v435
        %v704 = vunpack.c.h.b16 %v435
        %v705 = vunpack.c.l.b16 %v436
        %v706 = vunpack.c.h.b16 %v436
        %v707 = vunpack.c.l.b16 %v437
        %v708 = vunpack.c.h.b16 %v437
        %v709 = vunpack.c.l.b16 %v438
        %v710 = vunpack.c.h.b16 %v438
        %v711 = vunpack.c.l.b16 %v439
        %v712 = vunpack.c.h.b16 %v439
        %v713 = vunpack.c.l.b16 %v440
        %v714 = vunpack.c.h.b16 %v440
        %v715 = vunpack.c.l.b16 %v441
        %v716 = vunpack.c.h.b16 %v441
        %v717 = vunpack.c.l.b16 %v442
        %v718 = vunpack.c.h.b16 %v442
        %v719 = vunpack.c.l.b16 %v443
        %v720 = vunpack.c.h.b16 %v443
        %v721 = vunpack.c.l.b16 %v444
        %v722 = vunpack.c.h.b16 %v444
        %v723 = vunpack.c.l.b16 %v445
        %v724 = vunpack.c.h.b16 %v445
        %v725 = vunpack.c.l.b16 %v446
        %v726 = vunpack.c.h.b16 %v446
        %v727 = vunpack.c.l.b16 %v447
        %v728 = vunpack.c.h.b16 %v447
        %v729 = vunpack.c.l.b16 %v448
        %v730 = vunpack.c.h.b16 %v448
        %v731 = vunpack.c.l.b16 %v449
        %v732 = vunpack.c.h.b16 %v449
        %v733 = vunpack.c.l.b16 %v450
        %v734 = vunpack.c.h.b16 %v450
        %v735 = vunpack.c.l.b16 %v451
        %v736 = vunpack.c.h.b16 %v451
        %v737 = vunpack.c.l.b16 %v452
        %v738 = vunpack.c.h.b16 %v452
        %v739 = vunpack.c.l.b16 %v453
        %v740 = vunpack.c.h.b16 %v453
        %v741 = vunpack.c.l.b16 %v454
        %v742 = vunpack.c.h.b16 %v454
        %v743 = vpack.c.b16 %v681, %v679
        %v744 = vpack.c.b16 %v682, %v680
        %v745 = vpack.c.b16 %v685, %v683
        %v746 = vpack.c.b16 %v686, %v684
        %v747 = vpack.c.b16 %v689, %v687
        %v748 = vpack.c.b16 %v690, %v688
        %v749 = vpack.c.b16 %v693, %v691
        %v750 = vpack.c.b16 %v694, %v692
        %v751 = vpack.c.b16 %v697, %v695
        %v752 = vpack.c.b16 %v698, %v696
        %v753 = vpack.c.b16 %v701, %v699
        %v754 = vpack.c.b16 %v702, %v700
        %v755 = vpack.c.b16 %v705, %v703
        %v756 = vpack.c.b16 %v706, %v704
        %v757 = vpack.c.b16 %v709, %v707
        %v758 = vpack.c.b16 %v710, %v708
        %v759 = vpack.c.b16 %v713, %v711
        %v760 = vpack.c.b16 %v714, %v712
        %v761 = vpack.c.b16 %v717, %v715
        %v762 = vpack.c.b16 %v718, %v716
        %v763 = vpack.c.b16 %v721, %v719
        %v764 = vpack.c.b16 %v722, %v720
        %v765 = vpack.c.b16 %v725, %v723
        %v766 = vpack.c.b16 %v726, %v724
        %v767 = vpack.c.b16 %v729, %v727
        %v768 = vpack.c.b16 %v730, %v728
        %v769 = vpack.c.b16 %v733, %v731
        %v770 = vpack.c.b16 %v734, %v732
        %v771 = vpack.c.b16 %v737, %v735
        %v772 = vpack.c.b16 %v738, %v736
        %v773 = vpack.c.b16 %v741, %v739
        %v774 = vpack.c.b16 %v742, %v740
        %v839 = vunpack.c.l.b16 %v391
        %v840 = vunpack.c.l.b16 %v392
        %v841 = vunpack.c.l.b16 %v393
        %v842 = vunpack.c.l.b16 %v394
        %v843 = vunpack.c.l.b16 %v395
        %v844 = vunpack.c.l.b16 %v396
        %v845 = vunpack.c.l.b16 %v397
        %v846 = vunpack.c.l.b16 %v398
        %v847 = vunpack.c.l.b16 %v399
        %v848 = vunpack.c.l.b16 %v400
        %v849 = vunpack.c.l.b16 %v401
        %v850 = vunpack.c.l.b16 %v402
        %v851 = vunpack.c.l.b16 %v403
        %v852 = vunpack.c.l.b16 %v404
        %v853 = vunpack.c.l.b16 %v405
        %v854 = vunpack.c.l.b16 %v406
        %v855 = vunpack.c.l.b16 %v407
        %v856 = vunpack.c.l.b16 %v408
        %v857 = vunpack.c.l.b16 %v409
        %v858 = vunpack.c.l.b16 %v410
        %v859 = vunpack.c.l.b16 %v411
        %v860 = vunpack.c.l.b16 %v412
        %v861 = vunpack.c.l.b16 %v413
        %v862 = vunpack.c.l.b16 %v414
        %v863 = vunpack.c.l.b16 %v415
        %v864 = vunpack.c.l.b16 %v416
        %v865 = vunpack.c.l.b16 %v417
        %v866 = vunpack.c.l.b16 %v418
        %v867 = vunpack.c.l.b16 %v419
        %v868 = vunpack.c.l.b16 %v420
        %v869 = vunpack.c.l.b16 %v421
        %v870 = vunpack.c.l.b16 %v422
        %v871 = vpack.c.b16 %v840, %v839
        %v872 = vpack.c.b16 %v842, %v841
        %v873 = vpack.c.b16 %v844, %v843
        %v874 = vpack.c.b16 %v846, %v845
        %v875 = vpack.c.b16 %v848, %v847
        %v876 = vpack.c.b16 %v850, %v849
        %v877 = vpack.c.b16 %v852, %v851
        %v878 = vpack.c.b16 %v854, %v853
        %v879 = vpack.c.b16 %v856, %v855
        %v880 = vpack.c.b16 %v858, %v857
        %v881 = vpack.c.b16 %v860, %v859
        %v882 = vpack.c.b16 %v862, %v861
        %v883 = vpack.c.b16 %v864, %v863
        %v884 = vpack.c.b16 %v866, %v865
        %v885 = vpack.c.b16 %v868, %v867
        %v886 = vpack.c.b16 %v870, %v869
        %903 = vmatprep.subr.bf16.mxu0 0
        %904 = vmatpush1.bf16.msra.mxu0 %v878
        %905 = vmatprep.subr.bf16.mxu0 0
        %906 = vmatpush1.bf16.msra.mxu0 %v877
        %907 = vmatprep.subr.bf16.mxu0 0
        %908 = vmatpush1.bf16.msra.mxu0 %v876
        %909 = vmatprep.subr.bf16.mxu0 0
        %910 = vmatpush1.bf16.msra.mxu0 %v875
        %911 = vmatprep.subr.bf16.mxu0 0
        %912 = vmatpush1.bf16.msra.mxu0 %v874
        %913 = vmatprep.subr.bf16.mxu0 0
        %914 = vmatpush1.bf16.msra.mxu0 %v873
        %915 = vmatprep.subr.bf16.mxu0 0
        %916 = vmatpush1.bf16.msra.mxu0 %v872
        %917 = vmatprep.subr.bf16.mxu0 0
        %918 = vmatpush1.bf16.msra.mxu0 %v871
        %919 = vmatprep.subr.bf16.mxu0 0
        %920 = vmatpush2.bf16.msra.mxu0 %v886
        %921 = vmatprep.subr.bf16.mxu0 0
        %922 = vmatpush2.bf16.msra.mxu0 %v885
        %923 = vmatprep.subr.bf16.mxu0 0
        %924 = vmatpush2.bf16.msra.mxu0 %v884
        %925 = vmatprep.subr.bf16.mxu0 0
        %926 = vmatpush2.bf16.msra.mxu0 %v883
        %927 = vmatprep.subr.bf16.mxu0 0
        %928 = vmatpush2.bf16.msra.mxu0 %v882
        %929 = vmatprep.subr.bf16.mxu0 0
        %930 = vmatpush2.bf16.msra.mxu0 %v881
        %931 = vmatprep.subr.bf16.mxu0 0
        %932 = vmatpush2.bf16.msra.mxu0 %v880
        %933 = vmatprep.subr.bf16.mxu0 0
        %934 = vmatpush2.bf16.msra.mxu0 %v879
        %935 = vmatprep.mubr.bf16.mxu0 %v744
        %936 = vmatmul.mubr.bf16.gmra.mxu0 %v743
        %v937 = vpop.f32.mrf.mxu0
        %v938 = vadd.f32 %v490, %v937
        %v939 = vpop.f32.mrf.mxu0
        %v940 = vpop.f32.mrf.mxu0
        %v941 = vadd.f32 %v495, %v940
        %v942 = vpop.f32.mrf.mxu0
        %943 = vmatprep.mubr.bf16.mxu0 %v746
        %944 = vmatmul.mubr.bf16.gmra.mxu0 %v745
        %v945 = vpop.f32.mrf.mxu0
        %v946 = vadd.f32 %v500, %v945
        %v947 = vpop.f32.mrf.mxu0
        %v948 = vpop.f32.mrf.mxu0
        %v949 = vadd.f32 %v505, %v948
        %v950 = vpop.f32.mrf.mxu0
        %951 = vmatprep.mubr.bf16.mxu0 %v748
        %952 = vmatmul.mubr.bf16.gmra.mxu0 %v747
        %v953 = vpop.f32.mrf.mxu0
        %v954 = vadd.f32 %v510, %v953
        %v955 = vpop.f32.mrf.mxu0
        %v956 = vpop.f32.mrf.mxu0
        %v957 = vadd.f32 %v515, %v956
        %v958 = vpop.f32.mrf.mxu0
        %959 = vmatprep.mubr.bf16.mxu0 %v750
        %960 = vmatmul.mubr.bf16.gmra.mxu0 %v749
        %v961 = vpop.f32.mrf.mxu0
        %v962 = vadd.f32 %v520, %v961
        %v963 = vpop.f32.mrf.mxu0
        %v964 = vpop.f32.mrf.mxu0
        %v965 = vadd.f32 %v525, %v964
        %v966 = vpop.f32.mrf.mxu0
        %967 = vmatprep.mubr.bf16.mxu0 %v752
        %968 = vmatmul.mubr.bf16.gmra.mxu0 %v751
        %v969 = vpop.f32.mrf.mxu0
        %v970 = vadd.f32 %v530, %v969
        %v971 = vpop.f32.mrf.mxu0
        %v972 = vpop.f32.mrf.mxu0
        %v973 = vadd.f32 %v535, %v972
        %v974 = vpop.f32.mrf.mxu0
        %975 = vmatprep.mubr.bf16.mxu0 %v754
        %976 = vmatmul.mubr.bf16.gmra.mxu0 %v753
        %v977 = vpop.f32.mrf.mxu0
        %v978 = vadd.f32 %v540, %v977
        %v979 = vpop.f32.mrf.mxu0
        %v980 = vpop.f32.mrf.mxu0
        %v981 = vadd.f32 %v545, %v980
        %v982 = vpop.f32.mrf.mxu0
        %983 = vmatprep.mubr.bf16.mxu0 %v756
        %984 = vmatmul.mubr.bf16.gmra.mxu0 %v755
        %v985 = vpop.f32.mrf.mxu0
        %v986 = vadd.f32 %v550, %v985
        %v987 = vpop.f32.mrf.mxu0
        %v988 = vpop.f32.mrf.mxu0
        %v989 = vadd.f32 %v555, %v988
        %v990 = vpop.f32.mrf.mxu0
        %991 = vmatprep.mubr.bf16.mxu0 %v758
        %992 = vmatmul.mubr.bf16.gmra.mxu0 %v757
        %v993 = vpop.f32.mrf.mxu0
        %v994 = vadd.f32 %v560, %v993
        %v995 = vpop.f32.mrf.mxu0
        %v996 = vpop.f32.mrf.mxu0
        %v997 = vadd.f32 %v565, %v996
        %v998 = vpop.f32.mrf.mxu0
        %999 = vmatprep.mubr.bf16.mxu0 %v760
        %1000 = vmatmul.mubr.bf16.gmra.mxu0 %v759
        %v1001 = vpop.f32.mrf.mxu0
        %v1002 = vadd.f32 %v570, %v1001
        %v1003 = vpop.f32.mrf.mxu0
        %v1004 = vpop.f32.mrf.mxu0
        %v1005 = vadd.f32 %v575, %v1004
        %v1006 = vpop.f32.mrf.mxu0
        %1007 = vmatprep.mubr.bf16.mxu0 %v762
        %1008 = vmatmul.mubr.bf16.gmra.mxu0 %v761
        %v1009 = vpop.f32.mrf.mxu0
        %v1010 = vadd.f32 %v580, %v1009
        %v1011 = vpop.f32.mrf.mxu0
        %v1012 = vpop.f32.mrf.mxu0
        %v1013 = vadd.f32 %v585, %v1012
        %v1014 = vpop.f32.mrf.mxu0
        %1015 = vmatprep.mubr.bf16.mxu0 %v764
        %1016 = vmatmul.mubr.bf16.gmra.mxu0 %v763
        %v1017 = vpop.f32.mrf.mxu0
        %v1018 = vadd.f32 %v590, %v1017
        %v1019 = vpop.f32.mrf.mxu0
        %v1020 = vpop.f32.mrf.mxu0
        %v1021 = vadd.f32 %v595, %v1020
        %v1022 = vpop.f32.mrf.mxu0
        %1023 = vmatprep.mubr.bf16.mxu0 %v766
        %1024 = vmatmul.mubr.bf16.gmra.mxu0 %v765
        %v1025 = vpop.f32.mrf.mxu0
        %v1026 = vadd.f32 %v600, %v1025
        %v1027 = vpop.f32.mrf.mxu0
        %v1028 = vpop.f32.mrf.mxu0
        %v1029 = vadd.f32 %v605, %v1028
        %v1030 = vpop.f32.mrf.mxu0
        %1031 = vmatprep.mubr.bf16.mxu0 %v768
        %1032 = vmatmul.mubr.bf16.gmra.mxu0 %v767
        %v1033 = vpop.f32.mrf.mxu0
        %v1034 = vadd.f32 %v610, %v1033
        %v1035 = vpop.f32.mrf.mxu0
        %v1036 = vpop.f32.mrf.mxu0
        %v1037 = vadd.f32 %v615, %v1036
        %v1038 = vpop.f32.mrf.mxu0
        %1039 = vmatprep.mubr.bf16.mxu0 %v770
        %1040 = vmatmul.mubr.bf16.gmra.mxu0 %v769
        %v1041 = vpop.f32.mrf.mxu0
        %v1042 = vadd.f32 %v620, %v1041
        %v1043 = vpop.f32.mrf.mxu0
        %v1044 = vpop.f32.mrf.mxu0
        %v1045 = vadd.f32 %v625, %v1044
        %v1046 = vpop.f32.mrf.mxu0
        %1047 = vmatprep.mubr.bf16.mxu0 %v772
        %1048 = vmatmul.mubr.bf16.gmra.mxu0 %v771
        %v1049 = vpop.f32.mrf.mxu0
        %v1050 = vadd.f32 %v630, %v1049
        %v1051 = vpop.f32.mrf.mxu0
        %v1052 = vpop.f32.mrf.mxu0
        %v1053 = vadd.f32 %v635, %v1052
        %v1054 = vpop.f32.mrf.mxu0
        %1055 = vmatprep.mubr.bf16.mxu0 %v774
        %1056 = vmatmul.mubr.bf16.gmra.mxu0 %v773
        %v1057 = vpop.f32.mrf.mxu0
        %v1058 = vadd.f32 %v640, %v1057
        %v1059 = vpop.f32.mrf.mxu0
        %v1060 = vpop.f32.mrf.mxu0
        %v1061 = vadd.f32 %v645, %v1060
        %v1062 = vpop.f32.mrf.mxu0
        %1063 = vdwg.mxu0
        %v1064 = vmax.f32 %v938, 0.0
        %v1065 = vmax.f32 %v941, 0.0
        %v1066 = vmax.f32 %v946, 0.0
        %v1067 = vmax.f32 %v949, 0.0
        %v1068 = vmax.f32 %v954, 0.0
        %v1069 = vmax.f32 %v957, 0.0
        %v1070 = vmax.f32 %v962, 0.0
        %v1071 = vmax.f32 %v965, 0.0
        %v1072 = vmax.f32 %v970, 0.0
        %v1073 = vmax.f32 %v973, 0.0
        %v1074 = vmax.f32 %v978, 0.0
        %v1075 = vmax.f32 %v981, 0.0
        %v1076 = vmax.f32 %v986, 0.0
        %v1077 = vmax.f32 %v989, 0.0
        %v1078 = vmax.f32 %v994, 0.0
        %v1079 = vmax.f32 %v997, 0.0
        %v1080 = vmax.f32 %v1002, 0.0
        %v1081 = vmax.f32 %v1005, 0.0
        %v1082 = vmax.f32 %v1010, 0.0
        %v1083 = vmax.f32 %v1013, 0.0
        %v1084 = vmax.f32 %v1018, 0.0
        %v1085 = vmax.f32 %v1021, 0.0
        %v1086 = vmax.f32 %v1026, 0.0
        %v1087 = vmax.f32 %v1029, 0.0
        %v1088 = vmax.f32 %v1034, 0.0
        %v1089 = vmax.f32 %v1037, 0.0
        %v1090 = vmax.f32 %v1042, 0.0
        %v1091 = vmax.f32 %v1045, 0.0
        %v1092 = vmax.f32 %v1050, 0.0
        %v1093 = vmax.f32 %v1053, 0.0
        %v1094 = vmax.f32 %v1058, 0.0
        %v1095 = vmax.f32 %v1061, 0.0
        %v1096 = vpack.c.bf16 %v1065, %v1064
        %v1097 = vpack.c.bf16 %v1067, %v1066
        %v1098 = vpack.c.bf16 %v1069, %v1068
        %v1099 = vpack.c.bf16 %v1071, %v1070
        %v1100 = vpack.c.bf16 %v1073, %v1072
        %v1101 = vpack.c.bf16 %v1075, %v1074
        %v1102 = vpack.c.bf16 %v1077, %v1076
        %v1103 = vpack.c.bf16 %v1079, %v1078
        %v1104 = vpack.c.bf16 %v1081, %v1080
        %v1105 = vpack.c.bf16 %v1083, %v1082
        %v1106 = vpack.c.bf16 %v1085, %v1084
        %v1107 = vpack.c.bf16 %v1087, %v1086
        %v1108 = vpack.c.bf16 %v1089, %v1088
        %v1109 = vpack.c.bf16 %v1091, %v1090
        %v1110 = vpack.c.bf16 %v1093, %v1092
        %v1111 = vpack.c.bf16 %v1095, %v1094
        %s1112 = scalar_lea.vmem %s1, 256
        %v1113 = vld [vmem:[%s1112] sm:$0xff]
        %v1114 = vld [vmem:[%s1112 + $0x8] sm:$0xff]
        %v1115 = vld [vmem:[%s1112 + $0x10] sm:$0xff]
        %v1116 = vld [vmem:[%s1112 + $0x18] sm:$0xff]
        %v1117 = vld [vmem:[%s1112 + $0x20] sm:$0xff]
        %v1118 = vld [vmem:[%s1112 + $0x28] sm:$0xff]
        %v1119 = vld [vmem:[%s1112 + $0x30] sm:$0xff]
        %v1120 = vld [vmem:[%s1112 + $0x38] sm:$0xff]
        %v1121 = vld [vmem:[%s1112 + $0x40] sm:$0xff]
        %v1122 = vld [vmem:[%s1112 + $0x48] sm:$0xff]
        %v1123 = vld [vmem:[%s1112 + $0x50] sm:$0xff]
        %v1124 = vld [vmem:[%s1112 + $0x58] sm:$0xff]
        %v1125 = vld [vmem:[%s1112 + $0x60] sm:$0xff]
        %v1126 = vld [vmem:[%s1112 + $0x68] sm:$0xff]
        %v1127 = vld [vmem:[%s1112 + $0x70] sm:$0xff]
        %v1128 = vld [vmem:[%s1112 + $0x78] sm:$0xff]
        %v1129 = vld [vmem:[%s1112 + $0x80] sm:$0xff]
        %v1130 = vld [vmem:[%s1112 + $0x88] sm:$0xff]
        %v1131 = vld [vmem:[%s1112 + $0x90] sm:$0xff]
        %v1132 = vld [vmem:[%s1112 + $0x98] sm:$0xff]
        %v1133 = vld [vmem:[%s1112 + $0xa0] sm:$0xff]
        %v1134 = vld [vmem:[%s1112 + $0xa8] sm:$0xff]
        %v1135 = vld [vmem:[%s1112 + $0xb0] sm:$0xff]
        %v1136 = vld [vmem:[%s1112 + $0xb8] sm:$0xff]
        %v1137 = vld [vmem:[%s1112 + $0xc0] sm:$0xff]
        %v1138 = vld [vmem:[%s1112 + $0xc8] sm:$0xff]
        %v1139 = vld [vmem:[%s1112 + $0xd0] sm:$0xff]
        %v1140 = vld [vmem:[%s1112 + $0xd8] sm:$0xff]
        %v1141 = vld [vmem:[%s1112 + $0xe0] sm:$0xff]
        %v1142 = vld [vmem:[%s1112 + $0xe8] sm:$0xff]
        %v1143 = vld [vmem:[%s1112 + $0xf0] sm:$0xff]
        %v1144 = vld [vmem:[%s1112 + $0xf8] sm:$0xff]
        %s1145 = scalar_lea.vmem %s2, 256
        %v1146 = vld [vmem:[%s1145] sm:$0xff]
        %v1147 = vld [vmem:[%s1145 + $0x8] sm:$0xff]
        %v1148 = vld [vmem:[%s1145 + $0x10] sm:$0xff]
        %v1149 = vld [vmem:[%s1145 + $0x18] sm:$0xff]
        %v1150 = vld [vmem:[%s1145 + $0x20] sm:$0xff]
        %v1151 = vld [vmem:[%s1145 + $0x28] sm:$0xff]
        %v1152 = vld [vmem:[%s1145 + $0x30] sm:$0xff]
        %v1153 = vld [vmem:[%s1145 + $0x38] sm:$0xff]
        %v1154 = vld [vmem:[%s1145 + $0x40] sm:$0xff]
        %v1155 = vld [vmem:[%s1145 + $0x48] sm:$0xff]
        %v1156 = vld [vmem:[%s1145 + $0x50] sm:$0xff]
        %v1157 = vld [vmem:[%s1145 + $0x58] sm:$0xff]
        %v1158 = vld [vmem:[%s1145 + $0x60] sm:$0xff]
        %v1159 = vld [vmem:[%s1145 + $0x68] sm:$0xff]
        %v1160 = vld [vmem:[%s1145 + $0x70] sm:$0xff]
        %v1161 = vld [vmem:[%s1145 + $0x78] sm:$0xff]
        %v1162 = vld [vmem:[%s1145 + $0x80] sm:$0xff]
        %v1163 = vld [vmem:[%s1145 + $0x88] sm:$0xff]
        %v1164 = vld [vmem:[%s1145 + $0x90] sm:$0xff]
        %v1165 = vld [vmem:[%s1145 + $0x98] sm:$0xff]
        %v1166 = vld [vmem:[%s1145 + $0xa0] sm:$0xff]
        %v1167 = vld [vmem:[%s1145 + $0xa8] sm:$0xff]
        %v1168 = vld [vmem:[%s1145 + $0xb0] sm:$0xff]
        %v1169 = vld [vmem:[%s1145 + $0xb8] sm:$0xff]
        %v1170 = vld [vmem:[%s1145 + $0xc0] sm:$0xff]
        %v1171 = vld [vmem:[%s1145 + $0xc8] sm:$0xff]
        %v1172 = vld [vmem:[%s1145 + $0xd0] sm:$0xff]
        %v1173 = vld [vmem:[%s1145 + $0xd8] sm:$0xff]
        %v1174 = vld [vmem:[%s1145 + $0xe0] sm:$0xff]
        %v1175 = vld [vmem:[%s1145 + $0xe8] sm:$0xff]
        %v1176 = vld [vmem:[%s1145 + $0xf0] sm:$0xff]
        %v1177 = vld [vmem:[%s1145 + $0xf8] sm:$0xff]
        %1179 = vset.pattern.permute.xlu0 0
        %1180 = vperm.xlu0 %1179, %v1146
        %v1181 = vpop.permute.xlu0 %1180
        %1184 = vset.pattern.permute.xlu0 0
        %1185 = vperm.xlu0 %1184, %v1147
        %v1186 = vpop.permute.xlu0 %1185
        %1189 = vset.pattern.permute.xlu0 0
        %1190 = vperm.xlu0 %1189, %v1148
        %v1191 = vpop.permute.xlu0 %1190
        %1194 = vset.pattern.permute.xlu0 0
        %1195 = vperm.xlu0 %1194, %v1149
        %v1196 = vpop.permute.xlu0 %1195
        %1199 = vset.pattern.permute.xlu0 0
        %1200 = vperm.xlu0 %1199, %v1150
        %v1201 = vpop.permute.xlu0 %1200
        %1204 = vset.pattern.permute.xlu0 0
        %1205 = vperm.xlu0 %1204, %v1151
        %v1206 = vpop.permute.xlu0 %1205
        %1209 = vset.pattern.permute.xlu0 0
        %1210 = vperm.xlu0 %1209, %v1152
        %v1211 = vpop.permute.xlu0 %1210
        %1214 = vset.pattern.permute.xlu0 0
        %1215 = vperm.xlu0 %1214, %v1153
        %v1216 = vpop.permute.xlu0 %1215
        %1219 = vset.pattern.permute.xlu0 0
        %1220 = vperm.xlu0 %1219, %v1154
        %v1221 = vpop.permute.xlu0 %1220
        %1224 = vset.pattern.permute.xlu0 0
        %1225 = vperm.xlu0 %1224, %v1155
        %v1226 = vpop.permute.xlu0 %1225
        %1229 = vset.pattern.permute.xlu0 0
        %1230 = vperm.xlu0 %1229, %v1156
        %v1231 = vpop.permute.xlu0 %1230
        %1234 = vset.pattern.permute.xlu0 0
        %1235 = vperm.xlu0 %1234, %v1157
        %v1236 = vpop.permute.xlu0 %1235
        %1239 = vset.pattern.permute.xlu0 0
        %1240 = vperm.xlu0 %1239, %v1158
        %v1241 = vpop.permute.xlu0 %1240
        %1244 = vset.pattern.permute.xlu0 0
        %1245 = vperm.xlu0 %1244, %v1159
        %v1246 = vpop.permute.xlu0 %1245
        %1249 = vset.pattern.permute.xlu0 0
        %1250 = vperm.xlu0 %1249, %v1160
        %v1251 = vpop.permute.xlu0 %1250
        %1254 = vset.pattern.permute.xlu0 0
        %1255 = vperm.xlu0 %1254, %v1161
        %v1256 = vpop.permute.xlu0 %1255
        %1259 = vset.pattern.permute.xlu0 0
        %1260 = vperm.xlu0 %1259, %v1162
        %v1261 = vpop.permute.xlu0 %1260
        %1264 = vset.pattern.permute.xlu0 0
        %1265 = vperm.xlu0 %1264, %v1163
        %v1266 = vpop.permute.xlu0 %1265
        %1269 = vset.pattern.permute.xlu0 0
        %1270 = vperm.xlu0 %1269, %v1164
        %v1271 = vpop.permute.xlu0 %1270
        %1274 = vset.pattern.permute.xlu0 0
        %1275 = vperm.xlu0 %1274, %v1165
        %v1276 = vpop.permute.xlu0 %1275
        %1279 = vset.pattern.permute.xlu0 0
        %1280 = vperm.xlu0 %1279, %v1166
        %v1281 = vpop.permute.xlu0 %1280
        %1284 = vset.pattern.permute.xlu0 0
        %1285 = vperm.xlu0 %1284, %v1167
        %v1286 = vpop.permute.xlu0 %1285
        %1289 = vset.pattern.permute.xlu0 0
        %1290 = vperm.xlu0 %1289, %v1168
        %v1291 = vpop.permute.xlu0 %1290
        %1294 = vset.pattern.permute.xlu0 0
        %1295 = vperm.xlu0 %1294, %v1169
        %v1296 = vpop.permute.xlu0 %1295
        %1299 = vset.pattern.permute.xlu0 0
        %1300 = vperm.xlu0 %1299, %v1170
        %v1301 = vpop.permute.xlu0 %1300
        %1304 = vset.pattern.permute.xlu0 0
        %1305 = vperm.xlu0 %1304, %v1171
        %v1306 = vpop.permute.xlu0 %1305
        %1309 = vset.pattern.permute.xlu0 0
        %1310 = vperm.xlu0 %1309, %v1172
        %v1311 = vpop.permute.xlu0 %1310
        %1314 = vset.pattern.permute.xlu0 0
        %1315 = vperm.xlu0 %1314, %v1173
        %v1316 = vpop.permute.xlu0 %1315
        %1319 = vset.pattern.permute.xlu0 0
        %1320 = vperm.xlu0 %1319, %v1174
        %v1321 = vpop.permute.xlu0 %1320
        %1324 = vset.pattern.permute.xlu0 0
        %1325 = vperm.xlu0 %1324, %v1175
        %v1326 = vpop.permute.xlu0 %1325
        %1329 = vset.pattern.permute.xlu0 0
        %1330 = vperm.xlu0 %1329, %v1176
        %v1331 = vpop.permute.xlu0 %1330
        %1334 = vset.pattern.permute.xlu0 0
        %1335 = vperm.xlu0 %1334, %v1177
        %v1336 = vpop.permute.xlu0 %1335
        %v1370 = vunpack.c.l.b16 %v1113
        %v1371 = vunpack.c.h.b16 %v1113
        %v1372 = vunpack.c.l.b16 %v1114
        %v1373 = vunpack.c.h.b16 %v1114
        %v1374 = vunpack.c.l.b16 %v1115
        %v1375 = vunpack.c.h.b16 %v1115
        %v1376 = vunpack.c.l.b16 %v1116
        %v1377 = vunpack.c.h.b16 %v1116
        %v1378 = vunpack.c.l.b16 %v1117
        %v1379 = vunpack.c.h.b16 %v1117
        %v1380 = vunpack.c.l.b16 %v1118
        %v1381 = vunpack.c.h.b16 %v1118
        %v1382 = vunpack.c.l.b16 %v1119
        %v1383 = vunpack.c.h.b16 %v1119
        %v1384 = vunpack.c.l.b16 %v1120
        %v1385 = vunpack.c.h.b16 %v1120
        %v1386 = vunpack.c.l.b16 %v1121
        %v1387 = vunpack.c.h.b16 %v1121
        %v1388 = vunpack.c.l.b16 %v1122
        %v1389 = vunpack.c.h.b16 %v1122
        %v1390 = vunpack.c.l.b16 %v1123
        %v1391 = vunpack.c.h.b16 %v1123
        %v1392 = vunpack.c.l.b16 %v1124
        %v1393 = vunpack.c.h.b16 %v1124
        %v1394 = vunpack.c.l.b16 %v1125
        %v1395 = vunpack.c.h.b16 %v1125
        %v1396 = vunpack.c.l.b16 %v1126
        %v1397 = vunpack.c.h.b16 %v1126
        %v1398 = vunpack.c.l.b16 %v1127
        %v1399 = vunpack.c.h.b16 %v1127
        %v1400 = vunpack.c.l.b16 %v1128
        %v1401 = vunpack.c.h.b16 %v1128
        %v1402 = vunpack.c.l.b16 %v1129
        %v1403 = vunpack.c.h.b16 %v1129
        %v1404 = vunpack.c.l.b16 %v1130
        %v1405 = vunpack.c.h.b16 %v1130
        %v1406 = vunpack.c.l.b16 %v1131
        %v1407 = vunpack.c.h.b16 %v1131
        %v1408 = vunpack.c.l.b16 %v1132
        %v1409 = vunpack.c.h.b16 %v1132
        %v1410 = vunpack.c.l.b16 %v1133
        %v1411 = vunpack.c.h.b16 %v1133
        %v1412 = vunpack.c.l.b16 %v1134
        %v1413 = vunpack.c.h.b16 %v1134
        %v1414 = vunpack.c.l.b16 %v1135
        %v1415 = vunpack.c.h.b16 %v1135
        %v1416 = vunpack.c.l.b16 %v1136
        %v1417 = vunpack.c.h.b16 %v1136
        %v1418 = vunpack.c.l.b16 %v1137
        %v1419 = vunpack.c.h.b16 %v1137
        %v1420 = vunpack.c.l.b16 %v1138
        %v1421 = vunpack.c.h.b16 %v1138
        %v1422 = vunpack.c.l.b16 %v1139
        %v1423 = vunpack.c.h.b16 %v1139
        %v1424 = vunpack.c.l.b16 %v1140
        %v1425 = vunpack.c.h.b16 %v1140
        %v1426 = vunpack.c.l.b16 %v1141
        %v1427 = vunpack.c.h.b16 %v1141
        %v1428 = vunpack.c.l.b16 %v1142
        %v1429 = vunpack.c.h.b16 %v1142
        %v1430 = vunpack.c.l.b16 %v1143
        %v1431 = vunpack.c.h.b16 %v1143
        %v1432 = vunpack.c.l.b16 %v1144
        %v1433 = vunpack.c.h.b16 %v1144
        %v1434 = vpack.c.b16 %v1372, %v1370
        %v1435 = vpack.c.b16 %v1373, %v1371
        %v1436 = vpack.c.b16 %v1376, %v1374
        %v1437 = vpack.c.b16 %v1377, %v1375
        %v1438 = vpack.c.b16 %v1380, %v1378
        %v1439 = vpack.c.b16 %v1381, %v1379
        %v1440 = vpack.c.b16 %v1384, %v1382
        %v1441 = vpack.c.b16 %v1385, %v1383
        %v1442 = vpack.c.b16 %v1388, %v1386
        %v1443 = vpack.c.b16 %v1389, %v1387
        %v1444 = vpack.c.b16 %v1392, %v1390
        %v1445 = vpack.c.b16 %v1393, %v1391
        %v1446 = vpack.c.b16 %v1396, %v1394
        %v1447 = vpack.c.b16 %v1397, %v1395
        %v1448 = vpack.c.b16 %v1400, %v1398
        %v1449 = vpack.c.b16 %v1401, %v1399
        %v1450 = vpack.c.b16 %v1404, %v1402
        %v1451 = vpack.c.b16 %v1405, %v1403
        %v1452 = vpack.c.b16 %v1408, %v1406
        %v1453 = vpack.c.b16 %v1409, %v1407
        %v1454 = vpack.c.b16 %v1412, %v1410
        %v1455 = vpack.c.b16 %v1413, %v1411
        %v1456 = vpack.c.b16 %v1416, %v1414
        %v1457 = vpack.c.b16 %v1417, %v1415
        %v1458 = vpack.c.b16 %v1420, %v1418
        %v1459 = vpack.c.b16 %v1421, %v1419
        %v1460 = vpack.c.b16 %v1424, %v1422
        %v1461 = vpack.c.b16 %v1425, %v1423
        %v1462 = vpack.c.b16 %v1428, %v1426
        %v1463 = vpack.c.b16 %v1429, %v1427
        %v1464 = vpack.c.b16 %v1432, %v1430
        %v1465 = vpack.c.b16 %v1433, %v1431
        %1498 = vmatprep.subr.bf16.mxu0 0
        %1499 = vmatpush1.bf16.msra.mxu0 %v1103
        %1500 = vmatprep.subr.bf16.mxu0 0
        %1501 = vmatpush1.bf16.msra.mxu0 %v1102
        %1502 = vmatprep.subr.bf16.mxu0 0
        %1503 = vmatpush1.bf16.msra.mxu0 %v1101
        %1504 = vmatprep.subr.bf16.mxu0 0
        %1505 = vmatpush1.bf16.msra.mxu0 %v1100
        %1506 = vmatprep.subr.bf16.mxu0 0
        %1507 = vmatpush1.bf16.msra.mxu0 %v1099
        %1508 = vmatprep.subr.bf16.mxu0 0
        %1509 = vmatpush1.bf16.msra.mxu0 %v1098
        %1510 = vmatprep.subr.bf16.mxu0 0
        %1511 = vmatpush1.bf16.msra.mxu0 %v1097
        %1512 = vmatprep.subr.bf16.mxu0 0
        %1513 = vmatpush1.bf16.msra.mxu0 %v1096
        %1514 = vmatprep.subr.bf16.mxu0 0
        %1515 = vmatpush2.bf16.msra.mxu0 %v1111
        %1516 = vmatprep.subr.bf16.mxu0 0
        %1517 = vmatpush2.bf16.msra.mxu0 %v1110
        %1518 = vmatprep.subr.bf16.mxu0 0
        %1519 = vmatpush2.bf16.msra.mxu0 %v1109
        %1520 = vmatprep.subr.bf16.mxu0 0
        %1521 = vmatpush2.bf16.msra.mxu0 %v1108
        %1522 = vmatprep.subr.bf16.mxu0 0
        %1523 = vmatpush2.bf16.msra.mxu0 %v1107
        %1524 = vmatprep.subr.bf16.mxu0 0
        %1525 = vmatpush2.bf16.msra.mxu0 %v1106
        %1526 = vmatprep.subr.bf16.mxu0 0
        %1527 = vmatpush2.bf16.msra.mxu0 %v1105
        %1528 = vmatprep.subr.bf16.mxu0 0
        %1529 = vmatpush2.bf16.msra.mxu0 %v1104
        %1530 = vmatprep.mubr.bf16.mxu0 %v1435
        %1531 = vmatmul.mubr.bf16.gmra.mxu0 %v1434
        %v1532 = vpop.f32.mrf.mxu0
        %v1533 = vadd.f32 %v1181, %v1532
        %v1534 = vpop.f32.mrf.mxu0
        %v1535 = vpop.f32.mrf.mxu0
        %v1536 = vadd.f32 %v1186, %v1535
        %v1537 = vpop.f32.mrf.mxu0
        %1538 = vmatprep.mubr.bf16.mxu0 %v1437
        %1539 = vmatmul.mubr.bf16.gmra.mxu0 %v1436
        %v1540 = vpop.f32.mrf.mxu0
        %v1541 = vadd.f32 %v1191, %v1540
        %v1542 = vpop.f32.mrf.mxu0
        %v1543 = vpop.f32.mrf.mxu0
        %v1544 = vadd.f32 %v1196, %v1543
        %v1545 = vpop.f32.mrf.mxu0
        %1546 = vmatprep.mubr.bf16.mxu0 %v1439
        %1547 = vmatmul.mubr.bf16.gmra.mxu0 %v1438
        %v1548 = vpop.f32.mrf.mxu0
        %v1549 = vadd.f32 %v1201, %v1548
        %v1550 = vpop.f32.mrf.mxu0
        %v1551 = vpop.f32.mrf.mxu0
        %v1552 = vadd.f32 %v1206, %v1551
        %v1553 = vpop.f32.mrf.mxu0
        %1554 = vmatprep.mubr.bf16.mxu0 %v1441
        %1555 = vmatmul.mubr.bf16.gmra.mxu0 %v1440
        %v1556 = vpop.f32.mrf.mxu0
        %v1557 = vadd.f32 %v1211, %v1556
        %v1558 = vpop.f32.mrf.mxu0
        %v1559 = vpop.f32.mrf.mxu0
        %v1560 = vadd.f32 %v1216, %v1559
        %v1561 = vpop.f32.mrf.mxu0
        %1562 = vmatprep.mubr.bf16.mxu0 %v1443
        %1563 = vmatmul.mubr.bf16.gmra.mxu0 %v1442
        %v1564 = vpop.f32.mrf.mxu0
        %v1565 = vadd.f32 %v1221, %v1564
        %v1566 = vpop.f32.mrf.mxu0
        %v1567 = vpop.f32.mrf.mxu0
        %v1568 = vadd.f32 %v1226, %v1567
        %v1569 = vpop.f32.mrf.mxu0
        %1570 = vmatprep.mubr.bf16.mxu0 %v1445
        %1571 = vmatmul.mubr.bf16.gmra.mxu0 %v1444
        %v1572 = vpop.f32.mrf.mxu0
        %v1573 = vadd.f32 %v1231, %v1572
        %v1574 = vpop.f32.mrf.mxu0
        %v1575 = vpop.f32.mrf.mxu0
        %v1576 = vadd.f32 %v1236, %v1575
        %v1577 = vpop.f32.mrf.mxu0
        %1578 = vmatprep.mubr.bf16.mxu0 %v1447
        %1579 = vmatmul.mubr.bf16.gmra.mxu0 %v1446
        %v1580 = vpop.f32.mrf.mxu0
        %v1581 = vadd.f32 %v1241, %v1580
        %v1582 = vpop.f32.mrf.mxu0
        %v1583 = vpop.f32.mrf.mxu0
        %v1584 = vadd.f32 %v1246, %v1583
        %v1585 = vpop.f32.mrf.mxu0
        %1586 = vmatprep.mubr.bf16.mxu0 %v1449
        %1587 = vmatmul.mubr.bf16.gmra.mxu0 %v1448
        %v1588 = vpop.f32.mrf.mxu0
        %v1589 = vadd.f32 %v1251, %v1588
        %v1590 = vpop.f32.mrf.mxu0
        %v1591 = vpop.f32.mrf.mxu0
        %v1592 = vadd.f32 %v1256, %v1591
        %v1593 = vpop.f32.mrf.mxu0
        %1594 = vmatprep.mubr.bf16.mxu0 %v1451
        %1595 = vmatmul.mubr.bf16.gmra.mxu0 %v1450
        %v1596 = vpop.f32.mrf.mxu0
        %v1597 = vadd.f32 %v1261, %v1596
        %v1598 = vpop.f32.mrf.mxu0
        %v1599 = vpop.f32.mrf.mxu0
        %v1600 = vadd.f32 %v1266, %v1599
        %v1601 = vpop.f32.mrf.mxu0
        %1602 = vmatprep.mubr.bf16.mxu0 %v1453
        %1603 = vmatmul.mubr.bf16.gmra.mxu0 %v1452
        %v1604 = vpop.f32.mrf.mxu0
        %v1605 = vadd.f32 %v1271, %v1604
        %v1606 = vpop.f32.mrf.mxu0
        %v1607 = vpop.f32.mrf.mxu0
        %v1608 = vadd.f32 %v1276, %v1607
        %v1609 = vpop.f32.mrf.mxu0
        %1610 = vmatprep.mubr.bf16.mxu0 %v1455
        %1611 = vmatmul.mubr.bf16.gmra.mxu0 %v1454
        %v1612 = vpop.f32.mrf.mxu0
        %v1613 = vadd.f32 %v1281, %v1612
        %v1614 = vpop.f32.mrf.mxu0
        %v1615 = vpop.f32.mrf.mxu0
        %v1616 = vadd.f32 %v1286, %v1615
        %v1617 = vpop.f32.mrf.mxu0
        %1618 = vmatprep.mubr.bf16.mxu0 %v1457
        %1619 = vmatmul.mubr.bf16.gmra.mxu0 %v1456
        %v1620 = vpop.f32.mrf.mxu0
        %v1621 = vadd.f32 %v1291, %v1620
        %v1622 = vpop.f32.mrf.mxu0
        %v1623 = vpop.f32.mrf.mxu0
        %v1624 = vadd.f32 %v1296, %v1623
        %v1625 = vpop.f32.mrf.mxu0
        %1626 = vmatprep.mubr.bf16.mxu0 %v1459
        %1627 = vmatmul.mubr.bf16.gmra.mxu0 %v1458
        %v1628 = vpop.f32.mrf.mxu0
        %v1629 = vadd.f32 %v1301, %v1628
        %v1630 = vpop.f32.mrf.mxu0
        %v1631 = vpop.f32.mrf.mxu0
        %v1632 = vadd.f32 %v1306, %v1631
        %v1633 = vpop.f32.mrf.mxu0
        %1634 = vmatprep.mubr.bf16.mxu0 %v1461
        %1635 = vmatmul.mubr.bf16.gmra.mxu0 %v1460
        %v1636 = vpop.f32.mrf.mxu0
        %v1637 = vadd.f32 %v1311, %v1636
        %v1638 = vpop.f32.mrf.mxu0
        %v1639 = vpop.f32.mrf.mxu0
        %v1640 = vadd.f32 %v1316, %v1639
        %v1641 = vpop.f32.mrf.mxu0
        %1642 = vmatprep.mubr.bf16.mxu0 %v1463
        %1643 = vmatmul.mubr.bf16.gmra.mxu0 %v1462
        %v1644 = vpop.f32.mrf.mxu0
        %v1645 = vadd.f32 %v1321, %v1644
        %v1646 = vpop.f32.mrf.mxu0
        %v1647 = vpop.f32.mrf.mxu0
        %v1648 = vadd.f32 %v1326, %v1647
        %v1649 = vpop.f32.mrf.mxu0
        %1650 = vmatprep.mubr.bf16.mxu0 %v1465
        %1651 = vmatmul.mubr.bf16.gmra.mxu0 %v1464
        %v1652 = vpop.f32.mrf.mxu0
        %v1653 = vadd.f32 %v1331, %v1652
        %v1654 = vpop.f32.mrf.mxu0
        %v1655 = vpop.f32.mrf.mxu0
        %v1656 = vadd.f32 %v1336, %v1655
        %v1657 = vpop.f32.mrf.mxu0
        %1658 = vdwg.mxu0
        %v1659 = vmax.f32 %v1533, 0.0
        %v1660 = vmax.f32 %v1536, 0.0
        %v1661 = vmax.f32 %v1541, 0.0
        %v1662 = vmax.f32 %v1544, 0.0
        %v1663 = vmax.f32 %v1549, 0.0
        %v1664 = vmax.f32 %v1552, 0.0
        %v1665 = vmax.f32 %v1557, 0.0
        %v1666 = vmax.f32 %v1560, 0.0
        %v1667 = vmax.f32 %v1565, 0.0
        %v1668 = vmax.f32 %v1568, 0.0
        %v1669 = vmax.f32 %v1573, 0.0
        %v1670 = vmax.f32 %v1576, 0.0
        %v1671 = vmax.f32 %v1581, 0.0
        %v1672 = vmax.f32 %v1584, 0.0
        %v1673 = vmax.f32 %v1589, 0.0
        %v1674 = vmax.f32 %v1592, 0.0
        %v1675 = vmax.f32 %v1597, 0.0
        %v1676 = vmax.f32 %v1600, 0.0
        %v1677 = vmax.f32 %v1605, 0.0
        %v1678 = vmax.f32 %v1608, 0.0
        %v1679 = vmax.f32 %v1613, 0.0
        %v1680 = vmax.f32 %v1616, 0.0
        %v1681 = vmax.f32 %v1621, 0.0
        %v1682 = vmax.f32 %v1624, 0.0
        %v1683 = vmax.f32 %v1629, 0.0
        %v1684 = vmax.f32 %v1632, 0.0
        %v1685 = vmax.f32 %v1637, 0.0
        %v1686 = vmax.f32 %v1640, 0.0
        %v1687 = vmax.f32 %v1645, 0.0
        %v1688 = vmax.f32 %v1648, 0.0
        %v1689 = vmax.f32 %v1653, 0.0
        %v1690 = vmax.f32 %v1656, 0.0
        %v1691 = vpack.c.bf16 %v1660, %v1659
        %v1692 = vpack.c.bf16 %v1662, %v1661
        %v1693 = vpack.c.bf16 %v1664, %v1663
        %v1694 = vpack.c.bf16 %v1666, %v1665
        %v1695 = vpack.c.bf16 %v1668, %v1667
        %v1696 = vpack.c.bf16 %v1670, %v1669
        %v1697 = vpack.c.bf16 %v1672, %v1671
        %v1698 = vpack.c.bf16 %v1674, %v1673
        %v1699 = vpack.c.bf16 %v1676, %v1675
        %v1700 = vpack.c.bf16 %v1678, %v1677
        %v1701 = vpack.c.bf16 %v1680, %v1679
        %v1702 = vpack.c.bf16 %v1682, %v1681
        %v1703 = vpack.c.bf16 %v1684, %v1683
        %v1704 = vpack.c.bf16 %v1686, %v1685
        %v1705 = vpack.c.bf16 %v1688, %v1687
        %v1706 = vpack.c.bf16 %v1690, %v1689
        %s1707 = scalar_lea.vmem %s1, 512
        %v1708 = vld [vmem:[%s1707] sm:$0xff]
        %v1709 = vld [vmem:[%s1707 + $0x8] sm:$0xff]
        %v1710 = vld [vmem:[%s1707 + $0x10] sm:$0xff]
        %v1711 = vld [vmem:[%s1707 + $0x18] sm:$0xff]
        %v1712 = vld [vmem:[%s1707 + $0x20] sm:$0xff]
        %v1713 = vld [vmem:[%s1707 + $0x28] sm:$0xff]
        %v1714 = vld [vmem:[%s1707 + $0x30] sm:$0xff]
        %v1715 = vld [vmem:[%s1707 + $0x38] sm:$0xff]
        %v1716 = vld [vmem:[%s1707 + $0x40] sm:$0xff]
        %v1717 = vld [vmem:[%s1707 + $0x48] sm:$0xff]
        %v1718 = vld [vmem:[%s1707 + $0x50] sm:$0xff]
        %v1719 = vld [vmem:[%s1707 + $0x58] sm:$0xff]
        %v1720 = vld [vmem:[%s1707 + $0x60] sm:$0xff]
        %v1721 = vld [vmem:[%s1707 + $0x68] sm:$0xff]
        %v1722 = vld [vmem:[%s1707 + $0x70] sm:$0xff]
        %v1723 = vld [vmem:[%s1707 + $0x78] sm:$0xff]
        %v1724 = vld [vmem:[%s1707 + $0x80] sm:$0xff]
        %v1725 = vld [vmem:[%s1707 + $0x88] sm:$0xff]
        %v1726 = vld [vmem:[%s1707 + $0x90] sm:$0xff]
        %v1727 = vld [vmem:[%s1707 + $0x98] sm:$0xff]
        %v1728 = vld [vmem:[%s1707 + $0xa0] sm:$0xff]
        %v1729 = vld [vmem:[%s1707 + $0xa8] sm:$0xff]
        %v1730 = vld [vmem:[%s1707 + $0xb0] sm:$0xff]
        %v1731 = vld [vmem:[%s1707 + $0xb8] sm:$0xff]
        %v1732 = vld [vmem:[%s1707 + $0xc0] sm:$0xff]
        %v1733 = vld [vmem:[%s1707 + $0xc8] sm:$0xff]
        %v1734 = vld [vmem:[%s1707 + $0xd0] sm:$0xff]
        %v1735 = vld [vmem:[%s1707 + $0xd8] sm:$0xff]
        %v1736 = vld [vmem:[%s1707 + $0xe0] sm:$0xff]
        %v1737 = vld [vmem:[%s1707 + $0xe8] sm:$0xff]
        %v1738 = vld [vmem:[%s1707 + $0xf0] sm:$0xff]
        %v1739 = vld [vmem:[%s1707 + $0xf8] sm:$0xff]
        %s1740 = scalar_lea.vmem %s2, 512
        %v1741 = vld [vmem:[%s1740] sm:$0xff]
        %v1742 = vld [vmem:[%s1740 + $0x8] sm:$0xff]
        %v1743 = vld [vmem:[%s1740 + $0x10] sm:$0xff]
        %v1744 = vld [vmem:[%s1740 + $0x18] sm:$0xff]
        %v1745 = vld [vmem:[%s1740 + $0x20] sm:$0xff]
        %v1746 = vld [vmem:[%s1740 + $0x28] sm:$0xff]
        %v1747 = vld [vmem:[%s1740 + $0x30] sm:$0xff]
        %v1748 = vld [vmem:[%s1740 + $0x38] sm:$0xff]
        %v1749 = vld [vmem:[%s1740 + $0x40] sm:$0xff]
        %v1750 = vld [vmem:[%s1740 + $0x48] sm:$0xff]
        %v1751 = vld [vmem:[%s1740 + $0x50] sm:$0xff]
        %v1752 = vld [vmem:[%s1740 + $0x58] sm:$0xff]
        %v1753 = vld [vmem:[%s1740 + $0x60] sm:$0xff]
        %v1754 = vld [vmem:[%s1740 + $0x68] sm:$0xff]
        %v1755 = vld [vmem:[%s1740 + $0x70] sm:$0xff]
        %v1756 = vld [vmem:[%s1740 + $0x78] sm:$0xff]
        %v1757 = vld [vmem:[%s1740 + $0x80] sm:$0xff]
        %v1758 = vld [vmem:[%s1740 + $0x88] sm:$0xff]
        %v1759 = vld [vmem:[%s1740 + $0x90] sm:$0xff]
        %v1760 = vld [vmem:[%s1740 + $0x98] sm:$0xff]
        %v1761 = vld [vmem:[%s1740 + $0xa0] sm:$0xff]
        %v1762 = vld [vmem:[%s1740 + $0xa8] sm:$0xff]
        %v1763 = vld [vmem:[%s1740 + $0xb0] sm:$0xff]
        %v1764 = vld [vmem:[%s1740 + $0xb8] sm:$0xff]
        %v1765 = vld [vmem:[%s1740 + $0xc0] sm:$0xff]
        %v1766 = vld [vmem:[%s1740 + $0xc8] sm:$0xff]
        %v1767 = vld [vmem:[%s1740 + $0xd0] sm:$0xff]
        %v1768 = vld [vmem:[%s1740 + $0xd8] sm:$0xff]
        %v1769 = vld [vmem:[%s1740 + $0xe0] sm:$0xff]
        %v1770 = vld [vmem:[%s1740 + $0xe8] sm:$0xff]
        %v1771 = vld [vmem:[%s1740 + $0xf0] sm:$0xff]
        %v1772 = vld [vmem:[%s1740 + $0xf8] sm:$0xff]
        %1774 = vset.pattern.permute.xlu0 0
        %1775 = vperm.xlu0 %1774, %v1741
        %v1776 = vpop.permute.xlu0 %1775
        %1779 = vset.pattern.permute.xlu0 0
        %1780 = vperm.xlu0 %1779, %v1742
        %v1781 = vpop.permute.xlu0 %1780
        %1784 = vset.pattern.permute.xlu0 0
        %1785 = vperm.xlu0 %1784, %v1743
        %v1786 = vpop.permute.xlu0 %1785
        %1789 = vset.pattern.permute.xlu0 0
        %1790 = vperm.xlu0 %1789, %v1744
        %v1791 = vpop.permute.xlu0 %1790
        %1794 = vset.pattern.permute.xlu0 0
        %1795 = vperm.xlu0 %1794, %v1745
        %v1796 = vpop.permute.xlu0 %1795
        %1799 = vset.pattern.permute.xlu0 0
        %1800 = vperm.xlu0 %1799, %v1746
        %v1801 = vpop.permute.xlu0 %1800
        %1804 = vset.pattern.permute.xlu0 0
        %1805 = vperm.xlu0 %1804, %v1747
        %v1806 = vpop.permute.xlu0 %1805
        %1809 = vset.pattern.permute.xlu0 0
        %1810 = vperm.xlu0 %1809, %v1748
        %v1811 = vpop.permute.xlu0 %1810
        %1814 = vset.pattern.permute.xlu0 0
        %1815 = vperm.xlu0 %1814, %v1749
        %v1816 = vpop.permute.xlu0 %1815
        %1819 = vset.pattern.permute.xlu0 0
        %1820 = vperm.xlu0 %1819, %v1750
        %v1821 = vpop.permute.xlu0 %1820
        %1824 = vset.pattern.permute.xlu0 0
        %1825 = vperm.xlu0 %1824, %v1751
        %v1826 = vpop.permute.xlu0 %1825
        %1829 = vset.pattern.permute.xlu0 0
        %1830 = vperm.xlu0 %1829, %v1752
        %v1831 = vpop.permute.xlu0 %1830
        %1834 = vset.pattern.permute.xlu0 0
        %1835 = vperm.xlu0 %1834, %v1753
        %v1836 = vpop.permute.xlu0 %1835
        %1839 = vset.pattern.permute.xlu0 0
        %1840 = vperm.xlu0 %1839, %v1754
        %v1841 = vpop.permute.xlu0 %1840
        %1844 = vset.pattern.permute.xlu0 0
        %1845 = vperm.xlu0 %1844, %v1755
        %v1846 = vpop.permute.xlu0 %1845
        %1849 = vset.pattern.permute.xlu0 0
        %1850 = vperm.xlu0 %1849, %v1756
        %v1851 = vpop.permute.xlu0 %1850
        %1854 = vset.pattern.permute.xlu0 0
        %1855 = vperm.xlu0 %1854, %v1757
        %v1856 = vpop.permute.xlu0 %1855
        %1859 = vset.pattern.permute.xlu0 0
        %1860 = vperm.xlu0 %1859, %v1758
        %v1861 = vpop.permute.xlu0 %1860
        %1864 = vset.pattern.permute.xlu0 0
        %1865 = vperm.xlu0 %1864, %v1759
        %v1866 = vpop.permute.xlu0 %1865
        %1869 = vset.pattern.permute.xlu0 0
        %1870 = vperm.xlu0 %1869, %v1760
        %v1871 = vpop.permute.xlu0 %1870
        %1874 = vset.pattern.permute.xlu0 0
        %1875 = vperm.xlu0 %1874, %v1761
        %v1876 = vpop.permute.xlu0 %1875
        %1879 = vset.pattern.permute.xlu0 0
        %1880 = vperm.xlu0 %1879, %v1762
        %v1881 = vpop.permute.xlu0 %1880
        %1884 = vset.pattern.permute.xlu0 0
        %1885 = vperm.xlu0 %1884, %v1763
        %v1886 = vpop.permute.xlu0 %1885
        %1889 = vset.pattern.permute.xlu0 0
        %1890 = vperm.xlu0 %1889, %v1764
        %v1891 = vpop.permute.xlu0 %1890
        %1894 = vset.pattern.permute.xlu0 0
        %1895 = vperm.xlu0 %1894, %v1765
        %v1896 = vpop.permute.xlu0 %1895
        %1899 = vset.pattern.permute.xlu0 0
        %1900 = vperm.xlu0 %1899, %v1766
        %v1901 = vpop.permute.xlu0 %1900
        %1904 = vset.pattern.permute.xlu0 0
        %1905 = vperm.xlu0 %1904, %v1767
        %v1906 = vpop.permute.xlu0 %1905
        %1909 = vset.pattern.permute.xlu0 0
        %1910 = vperm.xlu0 %1909, %v1768
        %v1911 = vpop.permute.xlu0 %1910
        %1914 = vset.pattern.permute.xlu0 0
        %1915 = vperm.xlu0 %1914, %v1769
        %v1916 = vpop.permute.xlu0 %1915
        %1919 = vset.pattern.permute.xlu0 0
        %1920 = vperm.xlu0 %1919, %v1770
        %v1921 = vpop.permute.xlu0 %1920
        %1924 = vset.pattern.permute.xlu0 0
        %1925 = vperm.xlu0 %1924, %v1771
        %v1926 = vpop.permute.xlu0 %1925
        %1929 = vset.pattern.permute.xlu0 0
        %1930 = vperm.xlu0 %1929, %v1772
        %v1931 = vpop.permute.xlu0 %1930
        %v1965 = vunpack.c.l.b16 %v1708
        %v1966 = vunpack.c.h.b16 %v1708
        %v1967 = vunpack.c.l.b16 %v1709
        %v1968 = vunpack.c.h.b16 %v1709
        %v1969 = vunpack.c.l.b16 %v1710
        %v1970 = vunpack.c.h.b16 %v1710
        %v1971 = vunpack.c.l.b16 %v1711
        %v1972 = vunpack.c.h.b16 %v1711
        %v1973 = vunpack.c.l.b16 %v1712
        %v1974 = vunpack.c.h.b16 %v1712
        %v1975 = vunpack.c.l.b16 %v1713
        %v1976 = vunpack.c.h.b16 %v1713
        %v1977 = vunpack.c.l.b16 %v1714
        %v1978 = vunpack.c.h.b16 %v1714
        %v1979 = vunpack.c.l.b16 %v1715
        %v1980 = vunpack.c.h.b16 %v1715
        %v1981 = vunpack.c.l.b16 %v1716
        %v1982 = vunpack.c.h.b16 %v1716
        %v1983 = vunpack.c.l.b16 %v1717
        %v1984 = vunpack.c.h.b16 %v1717
        %v1985 = vunpack.c.l.b16 %v1718
        %v1986 = vunpack.c.h.b16 %v1718
        %v1987 = vunpack.c.l.b16 %v1719
        %v1988 = vunpack.c.h.b16 %v1719
        %v1989 = vunpack.c.l.b16 %v1720
        %v1990 = vunpack.c.h.b16 %v1720
        %v1991 = vunpack.c.l.b16 %v1721
        %v1992 = vunpack.c.h.b16 %v1721
        %v1993 = vunpack.c.l.b16 %v1722
        %v1994 = vunpack.c.h.b16 %v1722
        %v1995 = vunpack.c.l.b16 %v1723
        %v1996 = vunpack.c.h.b16 %v1723
        %v1997 = vunpack.c.l.b16 %v1724
        %v1998 = vunpack.c.h.b16 %v1724
        %v1999 = vunpack.c.l.b16 %v1725
        %v2000 = vunpack.c.h.b16 %v1725
        %v2001 = vunpack.c.l.b16 %v1726
        %v2002 = vunpack.c.h.b16 %v1726
        %v2003 = vunpack.c.l.b16 %v1727
        %v2004 = vunpack.c.h.b16 %v1727
        %v2005 = vunpack.c.l.b16 %v1728
        %v2006 = vunpack.c.h.b16 %v1728
        %v2007 = vunpack.c.l.b16 %v1729
        %v2008 = vunpack.c.h.b16 %v1729
        %v2009 = vunpack.c.l.b16 %v1730
        %v2010 = vunpack.c.h.b16 %v1730
        %v2011 = vunpack.c.l.b16 %v1731
        %v2012 = vunpack.c.h.b16 %v1731
        %v2013 = vunpack.c.l.b16 %v1732
        %v2014 = vunpack.c.h.b16 %v1732
        %v2015 = vunpack.c.l.b16 %v1733
        %v2016 = vunpack.c.h.b16 %v1733
        %v2017 = vunpack.c.l.b16 %v1734
        %v2018 = vunpack.c.h.b16 %v1734
        %v2019 = vunpack.c.l.b16 %v1735
        %v2020 = vunpack.c.h.b16 %v1735
        %v2021 = vunpack.c.l.b16 %v1736
        %v2022 = vunpack.c.h.b16 %v1736
        %v2023 = vunpack.c.l.b16 %v1737
        %v2024 = vunpack.c.h.b16 %v1737
        %v2025 = vunpack.c.l.b16 %v1738
        %v2026 = vunpack.c.h.b16 %v1738
        %v2027 = vunpack.c.l.b16 %v1739
        %v2028 = vunpack.c.h.b16 %v1739
        %v2029 = vpack.c.b16 %v1967, %v1965
        %v2030 = vpack.c.b16 %v1968, %v1966
        %v2031 = vpack.c.b16 %v1971, %v1969
        %v2032 = vpack.c.b16 %v1972, %v1970
        %v2033 = vpack.c.b16 %v1975, %v1973
        %v2034 = vpack.c.b16 %v1976, %v1974
        %v2035 = vpack.c.b16 %v1979, %v1977
        %v2036 = vpack.c.b16 %v1980, %v1978
        %v2037 = vpack.c.b16 %v1983, %v1981
        %v2038 = vpack.c.b16 %v1984, %v1982
        %v2039 = vpack.c.b16 %v1987, %v1985
        %v2040 = vpack.c.b16 %v1988, %v1986
        %v2041 = vpack.c.b16 %v1991, %v1989
        %v2042 = vpack.c.b16 %v1992, %v1990
        %v2043 = vpack.c.b16 %v1995, %v1993
        %v2044 = vpack.c.b16 %v1996, %v1994
        %v2045 = vpack.c.b16 %v1999, %v1997
        %v2046 = vpack.c.b16 %v2000, %v1998
        %v2047 = vpack.c.b16 %v2003, %v2001
        %v2048 = vpack.c.b16 %v2004, %v2002
        %v2049 = vpack.c.b16 %v2007, %v2005
        %v2050 = vpack.c.b16 %v2008, %v2006
        %v2051 = vpack.c.b16 %v2011, %v2009
        %v2052 = vpack.c.b16 %v2012, %v2010
        %v2053 = vpack.c.b16 %v2015, %v2013
        %v2054 = vpack.c.b16 %v2016, %v2014
        %v2055 = vpack.c.b16 %v2019, %v2017
        %v2056 = vpack.c.b16 %v2020, %v2018
        %v2057 = vpack.c.b16 %v2023, %v2021
        %v2058 = vpack.c.b16 %v2024, %v2022
        %v2059 = vpack.c.b16 %v2027, %v2025
        %v2060 = vpack.c.b16 %v2028, %v2026
        %2093 = vmatprep.subr.bf16.mxu0 0
        %2094 = vmatpush1.bf16.msra.mxu0 %v1698
        %2095 = vmatprep.subr.bf16.mxu0 0
        %2096 = vmatpush1.bf16.msra.mxu0 %v1697
        %2097 = vmatprep.subr.bf16.mxu0 0
        %2098 = vmatpush1.bf16.msra.mxu0 %v1696
        %2099 = vmatprep.subr.bf16.mxu0 0
        %2100 = vmatpush1.bf16.msra.mxu0 %v1695
        %2101 = vmatprep.subr.bf16.mxu0 0
        %2102 = vmatpush1.bf16.msra.mxu0 %v1694
        %2103 = vmatprep.subr.bf16.mxu0 0
        %2104 = vmatpush1.bf16.msra.mxu0 %v1693
        %2105 = vmatprep.subr.bf16.mxu0 0
        %2106 = vmatpush1.bf16.msra.mxu0 %v1692
        %2107 = vmatprep.subr.bf16.mxu0 0
        %2108 = vmatpush1.bf16.msra.mxu0 %v1691
        %2109 = vmatprep.subr.bf16.mxu0 0
        %2110 = vmatpush2.bf16.msra.mxu0 %v1706
        %2111 = vmatprep.subr.bf16.mxu0 0
        %2112 = vmatpush2.bf16.msra.mxu0 %v1705
        %2113 = vmatprep.subr.bf16.mxu0 0
        %2114 = vmatpush2.bf16.msra.mxu0 %v1704
        %2115 = vmatprep.subr.bf16.mxu0 0
        %2116 = vmatpush2.bf16.msra.mxu0 %v1703
        %2117 = vmatprep.subr.bf16.mxu0 0
        %2118 = vmatpush2.bf16.msra.mxu0 %v1702
        %2119 = vmatprep.subr.bf16.mxu0 0
        %2120 = vmatpush2.bf16.msra.mxu0 %v1701
        %2121 = vmatprep.subr.bf16.mxu0 0
        %2122 = vmatpush2.bf16.msra.mxu0 %v1700
        %2123 = vmatprep.subr.bf16.mxu0 0
        %2124 = vmatpush2.bf16.msra.mxu0 %v1699
        %2125 = vmatprep.mubr.bf16.mxu0 %v2030
        %2126 = vmatmul.mubr.bf16.gmra.mxu0 %v2029
        %v2127 = vpop.f32.mrf.mxu0
        %v2128 = vadd.f32 %v1776, %v2127
        %v2129 = vpop.f32.mrf.mxu0
        %v2130 = vpop.f32.mrf.mxu0
        %v2131 = vadd.f32 %v1781, %v2130
        %v2132 = vpop.f32.mrf.mxu0
        %2133 = vmatprep.mubr.bf16.mxu0 %v2032
        %2134 = vmatmul.mubr.bf16.gmra.mxu0 %v2031
        %v2135 = vpop.f32.mrf.mxu0
        %v2136 = vadd.f32 %v1786, %v2135
        %v2137 = vpop.f32.mrf.mxu0
        %v2138 = vpop.f32.mrf.mxu0
        %v2139 = vadd.f32 %v1791, %v2138
        %v2140 = vpop.f32.mrf.mxu0
        %2141 = vmatprep.mubr.bf16.mxu0 %v2034
        %2142 = vmatmul.mubr.bf16.gmra.mxu0 %v2033
        %v2143 = vpop.f32.mrf.mxu0
        %v2144 = vadd.f32 %v1796, %v2143
        %v2145 = vpop.f32.mrf.mxu0
        %v2146 = vpop.f32.mrf.mxu0
        %v2147 = vadd.f32 %v1801, %v2146
        %v2148 = vpop.f32.mrf.mxu0
        %2149 = vmatprep.mubr.bf16.mxu0 %v2036
        %2150 = vmatmul.mubr.bf16.gmra.mxu0 %v2035
        %v2151 = vpop.f32.mrf.mxu0
        %v2152 = vadd.f32 %v1806, %v2151
        %v2153 = vpop.f32.mrf.mxu0
        %v2154 = vpop.f32.mrf.mxu0
        %v2155 = vadd.f32 %v1811, %v2154
        %v2156 = vpop.f32.mrf.mxu0
        %2157 = vmatprep.mubr.bf16.mxu0 %v2038
        %2158 = vmatmul.mubr.bf16.gmra.mxu0 %v2037
        %v2159 = vpop.f32.mrf.mxu0
        %v2160 = vadd.f32 %v1816, %v2159
        %v2161 = vpop.f32.mrf.mxu0
        %v2162 = vpop.f32.mrf.mxu0
        %v2163 = vadd.f32 %v1821, %v2162
        %v2164 = vpop.f32.mrf.mxu0
        %2165 = vmatprep.mubr.bf16.mxu0 %v2040
        %2166 = vmatmul.mubr.bf16.gmra.mxu0 %v2039
        %v2167 = vpop.f32.mrf.mxu0
        %v2168 = vadd.f32 %v1826, %v2167
        %v2169 = vpop.f32.mrf.mxu0
        %v2170 = vpop.f32.mrf.mxu0
        %v2171 = vadd.f32 %v1831, %v2170
        %v2172 = vpop.f32.mrf.mxu0
        %2173 = vmatprep.mubr.bf16.mxu0 %v2042
        %2174 = vmatmul.mubr.bf16.gmra.mxu0 %v2041
        %v2175 = vpop.f32.mrf.mxu0
        %v2176 = vadd.f32 %v1836, %v2175
        %v2177 = vpop.f32.mrf.mxu0
        %v2178 = vpop.f32.mrf.mxu0
        %v2179 = vadd.f32 %v1841, %v2178
        %v2180 = vpop.f32.mrf.mxu0
        %2181 = vmatprep.mubr.bf16.mxu0 %v2044
        %2182 = vmatmul.mubr.bf16.gmra.mxu0 %v2043
        %v2183 = vpop.f32.mrf.mxu0
        %v2184 = vadd.f32 %v1846, %v2183
        %v2185 = vpop.f32.mrf.mxu0
        %v2186 = vpop.f32.mrf.mxu0
        %v2187 = vadd.f32 %v1851, %v2186
        %v2188 = vpop.f32.mrf.mxu0
        %2189 = vmatprep.mubr.bf16.mxu0 %v2046
        %2190 = vmatmul.mubr.bf16.gmra.mxu0 %v2045
        %v2191 = vpop.f32.mrf.mxu0
        %v2192 = vadd.f32 %v1856, %v2191
        %v2193 = vpop.f32.mrf.mxu0
        %v2194 = vpop.f32.mrf.mxu0
        %v2195 = vadd.f32 %v1861, %v2194
        %v2196 = vpop.f32.mrf.mxu0
        %2197 = vmatprep.mubr.bf16.mxu0 %v2048
        %2198 = vmatmul.mubr.bf16.gmra.mxu0 %v2047
        %v2199 = vpop.f32.mrf.mxu0
        %v2200 = vadd.f32 %v1866, %v2199
        %v2201 = vpop.f32.mrf.mxu0
        %v2202 = vpop.f32.mrf.mxu0
        %v2203 = vadd.f32 %v1871, %v2202
        %v2204 = vpop.f32.mrf.mxu0
        %2205 = vmatprep.mubr.bf16.mxu0 %v2050
        %2206 = vmatmul.mubr.bf16.gmra.mxu0 %v2049
        %v2207 = vpop.f32.mrf.mxu0
        %v2208 = vadd.f32 %v1876, %v2207
        %v2209 = vpop.f32.mrf.mxu0
        %v2210 = vpop.f32.mrf.mxu0
        %v2211 = vadd.f32 %v1881, %v2210
        %v2212 = vpop.f32.mrf.mxu0
        %2213 = vmatprep.mubr.bf16.mxu0 %v2052
        %2214 = vmatmul.mubr.bf16.gmra.mxu0 %v2051
        %v2215 = vpop.f32.mrf.mxu0
        %v2216 = vadd.f32 %v1886, %v2215
        %v2217 = vpop.f32.mrf.mxu0
        %v2218 = vpop.f32.mrf.mxu0
        %v2219 = vadd.f32 %v1891, %v2218
        %v2220 = vpop.f32.mrf.mxu0
        %2221 = vmatprep.mubr.bf16.mxu0 %v2054
        %2222 = vmatmul.mubr.bf16.gmra.mxu0 %v2053
        %v2223 = vpop.f32.mrf.mxu0
        %v2224 = vadd.f32 %v1896, %v2223
        %v2225 = vpop.f32.mrf.mxu0
        %v2226 = vpop.f32.mrf.mxu0
        %v2227 = vadd.f32 %v1901, %v2226
        %v2228 = vpop.f32.mrf.mxu0
        %2229 = vmatprep.mubr.bf16.mxu0 %v2056
        %2230 = vmatmul.mubr.bf16.gmra.mxu0 %v2055
        %v2231 = vpop.f32.mrf.mxu0
        %v2232 = vadd.f32 %v1906, %v2231
        %v2233 = vpop.f32.mrf.mxu0
        %v2234 = vpop.f32.mrf.mxu0
        %v2235 = vadd.f32 %v1911, %v2234
        %v2236 = vpop.f32.mrf.mxu0
        %2237 = vmatprep.mubr.bf16.mxu0 %v2058
        %2238 = vmatmul.mubr.bf16.gmra.mxu0 %v2057
        %v2239 = vpop.f32.mrf.mxu0
        %v2240 = vadd.f32 %v1916, %v2239
        %v2241 = vpop.f32.mrf.mxu0
        %v2242 = vpop.f32.mrf.mxu0
        %v2243 = vadd.f32 %v1921, %v2242
        %v2244 = vpop.f32.mrf.mxu0
        %2245 = vmatprep.mubr.bf16.mxu0 %v2060
        %2246 = vmatmul.mubr.bf16.gmra.mxu0 %v2059
        %v2247 = vpop.f32.mrf.mxu0
        %v2248 = vadd.f32 %v1926, %v2247
        %v2249 = vpop.f32.mrf.mxu0
        %v2250 = vpop.f32.mrf.mxu0
        %v2251 = vadd.f32 %v1931, %v2250
        %v2252 = vpop.f32.mrf.mxu0
        %2253 = vdwg.mxu0
        %v2254 = vmax.f32 %v2128, 0.0
        %v2255 = vmax.f32 %v2131, 0.0
        %v2256 = vmax.f32 %v2136, 0.0
        %v2257 = vmax.f32 %v2139, 0.0
        %v2258 = vmax.f32 %v2144, 0.0
        %v2259 = vmax.f32 %v2147, 0.0
        %v2260 = vmax.f32 %v2152, 0.0
        %v2261 = vmax.f32 %v2155, 0.0
        %v2262 = vmax.f32 %v2160, 0.0
        %v2263 = vmax.f32 %v2163, 0.0
        %v2264 = vmax.f32 %v2168, 0.0
        %v2265 = vmax.f32 %v2171, 0.0
        %v2266 = vmax.f32 %v2176, 0.0
        %v2267 = vmax.f32 %v2179, 0.0
        %v2268 = vmax.f32 %v2184, 0.0
        %v2269 = vmax.f32 %v2187, 0.0
        %v2270 = vmax.f32 %v2192, 0.0
        %v2271 = vmax.f32 %v2195, 0.0
        %v2272 = vmax.f32 %v2200, 0.0
        %v2273 = vmax.f32 %v2203, 0.0
        %v2274 = vmax.f32 %v2208, 0.0
        %v2275 = vmax.f32 %v2211, 0.0
        %v2276 = vmax.f32 %v2216, 0.0
        %v2277 = vmax.f32 %v2219, 0.0
        %v2278 = vmax.f32 %v2224, 0.0
        %v2279 = vmax.f32 %v2227, 0.0
        %v2280 = vmax.f32 %v2232, 0.0
        %v2281 = vmax.f32 %v2235, 0.0
        %v2282 = vmax.f32 %v2240, 0.0
        %v2283 = vmax.f32 %v2243, 0.0
        %v2284 = vmax.f32 %v2248, 0.0
        %v2285 = vmax.f32 %v2251, 0.0
        %v2286 = vpack.c.bf16 %v2255, %v2254
        %v2287 = vpack.c.bf16 %v2257, %v2256
        %v2288 = vpack.c.bf16 %v2259, %v2258
        %v2289 = vpack.c.bf16 %v2261, %v2260
        %v2290 = vpack.c.bf16 %v2263, %v2262
        %v2291 = vpack.c.bf16 %v2265, %v2264
        %v2292 = vpack.c.bf16 %v2267, %v2266
        %v2293 = vpack.c.bf16 %v2269, %v2268
        %v2294 = vpack.c.bf16 %v2271, %v2270
        %v2295 = vpack.c.bf16 %v2273, %v2272
        %v2296 = vpack.c.bf16 %v2275, %v2274
        %v2297 = vpack.c.bf16 %v2277, %v2276
        %v2298 = vpack.c.bf16 %v2279, %v2278
        %v2299 = vpack.c.bf16 %v2281, %v2280
        %v2300 = vpack.c.bf16 %v2283, %v2282
        %v2301 = vpack.c.bf16 %v2285, %v2284
        %s2302 = scalar_lea.vmem %s1, 768
        %v2303 = vld [vmem:[%s2302] sm:$0xff]
        %v2304 = vld [vmem:[%s2302 + $0x8] sm:$0xff]
        %v2305 = vld [vmem:[%s2302 + $0x10] sm:$0xff]
        %v2306 = vld [vmem:[%s2302 + $0x18] sm:$0xff]
        %v2307 = vld [vmem:[%s2302 + $0x20] sm:$0xff]
        %v2308 = vld [vmem:[%s2302 + $0x28] sm:$0xff]
        %v2309 = vld [vmem:[%s2302 + $0x30] sm:$0xff]
        %v2310 = vld [vmem:[%s2302 + $0x38] sm:$0xff]
        %v2311 = vld [vmem:[%s2302 + $0x40] sm:$0xff]
        %v2312 = vld [vmem:[%s2302 + $0x48] sm:$0xff]
        %v2313 = vld [vmem:[%s2302 + $0x50] sm:$0xff]
        %v2314 = vld [vmem:[%s2302 + $0x58] sm:$0xff]
        %v2315 = vld [vmem:[%s2302 + $0x60] sm:$0xff]
        %v2316 = vld [vmem:[%s2302 + $0x68] sm:$0xff]
        %v2317 = vld [vmem:[%s2302 + $0x70] sm:$0xff]
        %v2318 = vld [vmem:[%s2302 + $0x78] sm:$0xff]
        %v2319 = vld [vmem:[%s2302 + $0x80] sm:$0xff]
        %v2320 = vld [vmem:[%s2302 + $0x88] sm:$0xff]
        %v2321 = vld [vmem:[%s2302 + $0x90] sm:$0xff]
        %v2322 = vld [vmem:[%s2302 + $0x98] sm:$0xff]
        %v2323 = vld [vmem:[%s2302 + $0xa0] sm:$0xff]
        %v2324 = vld [vmem:[%s2302 + $0xa8] sm:$0xff]
        %v2325 = vld [vmem:[%s2302 + $0xb0] sm:$0xff]
        %v2326 = vld [vmem:[%s2302 + $0xb8] sm:$0xff]
        %v2327 = vld [vmem:[%s2302 + $0xc0] sm:$0xff]
        %v2328 = vld [vmem:[%s2302 + $0xc8] sm:$0xff]
        %v2329 = vld [vmem:[%s2302 + $0xd0] sm:$0xff]
        %v2330 = vld [vmem:[%s2302 + $0xd8] sm:$0xff]
        %v2331 = vld [vmem:[%s2302 + $0xe0] sm:$0xff]
        %v2332 = vld [vmem:[%s2302 + $0xe8] sm:$0xff]
        %v2333 = vld [vmem:[%s2302 + $0xf0] sm:$0xff]
        %v2334 = vld [vmem:[%s2302 + $0xf8] sm:$0xff]
        %s2335 = scalar_lea.vmem %s2, 768
        %v2336 = vld [vmem:[%s2335] sm:$0xff]
        %v2337 = vld [vmem:[%s2335 + $0x8] sm:$0xff]
        %v2338 = vld [vmem:[%s2335 + $0x10] sm:$0xff]
        %v2339 = vld [vmem:[%s2335 + $0x18] sm:$0xff]
        %v2340 = vld [vmem:[%s2335 + $0x20] sm:$0xff]
        %v2341 = vld [vmem:[%s2335 + $0x28] sm:$0xff]
        %v2342 = vld [vmem:[%s2335 + $0x30] sm:$0xff]
        %v2343 = vld [vmem:[%s2335 + $0x38] sm:$0xff]
        %v2344 = vld [vmem:[%s2335 + $0x40] sm:$0xff]
        %v2345 = vld [vmem:[%s2335 + $0x48] sm:$0xff]
        %v2346 = vld [vmem:[%s2335 + $0x50] sm:$0xff]
        %v2347 = vld [vmem:[%s2335 + $0x58] sm:$0xff]
        %v2348 = vld [vmem:[%s2335 + $0x60] sm:$0xff]
        %v2349 = vld [vmem:[%s2335 + $0x68] sm:$0xff]
        %v2350 = vld [vmem:[%s2335 + $0x70] sm:$0xff]
        %v2351 = vld [vmem:[%s2335 + $0x78] sm:$0xff]
        %v2352 = vld [vmem:[%s2335 + $0x80] sm:$0xff]
        %v2353 = vld [vmem:[%s2335 + $0x88] sm:$0xff]
        %v2354 = vld [vmem:[%s2335 + $0x90] sm:$0xff]
        %v2355 = vld [vmem:[%s2335 + $0x98] sm:$0xff]
        %v2356 = vld [vmem:[%s2335 + $0xa0] sm:$0xff]
        %v2357 = vld [vmem:[%s2335 + $0xa8] sm:$0xff]
        %v2358 = vld [vmem:[%s2335 + $0xb0] sm:$0xff]
        %v2359 = vld [vmem:[%s2335 + $0xb8] sm:$0xff]
        %v2360 = vld [vmem:[%s2335 + $0xc0] sm:$0xff]
        %v2361 = vld [vmem:[%s2335 + $0xc8] sm:$0xff]
        %v2362 = vld [vmem:[%s2335 + $0xd0] sm:$0xff]
        %v2363 = vld [vmem:[%s2335 + $0xd8] sm:$0xff]
        %v2364 = vld [vmem:[%s2335 + $0xe0] sm:$0xff]
        %v2365 = vld [vmem:[%s2335 + $0xe8] sm:$0xff]
        %v2366 = vld [vmem:[%s2335 + $0xf0] sm:$0xff]
        %v2367 = vld [vmem:[%s2335 + $0xf8] sm:$0xff]
        %2369 = vset.pattern.permute.xlu0 0
        %2370 = vperm.xlu0 %2369, %v2336
        %v2371 = vpop.permute.xlu0 %2370
        %2374 = vset.pattern.permute.xlu0 0
        %2375 = vperm.xlu0 %2374, %v2337
        %v2376 = vpop.permute.xlu0 %2375
        %2379 = vset.pattern.permute.xlu0 0
        %2380 = vperm.xlu0 %2379, %v2338
        %v2381 = vpop.permute.xlu0 %2380
        %2384 = vset.pattern.permute.xlu0 0
        %2385 = vperm.xlu0 %2384, %v2339
        %v2386 = vpop.permute.xlu0 %2385
        %2389 = vset.pattern.permute.xlu0 0
        %2390 = vperm.xlu0 %2389, %v2340
        %v2391 = vpop.permute.xlu0 %2390
        %2394 = vset.pattern.permute.xlu0 0
        %2395 = vperm.xlu0 %2394, %v2341
        %v2396 = vpop.permute.xlu0 %2395
        %2399 = vset.pattern.permute.xlu0 0
        %2400 = vperm.xlu0 %2399, %v2342
        %v2401 = vpop.permute.xlu0 %2400
        %2404 = vset.pattern.permute.xlu0 0
        %2405 = vperm.xlu0 %2404, %v2343
        %v2406 = vpop.permute.xlu0 %2405
        %2409 = vset.pattern.permute.xlu0 0
        %2410 = vperm.xlu0 %2409, %v2344
        %v2411 = vpop.permute.xlu0 %2410
        %2414 = vset.pattern.permute.xlu0 0
        %2415 = vperm.xlu0 %2414, %v2345
        %v2416 = vpop.permute.xlu0 %2415
        %2419 = vset.pattern.permute.xlu0 0
        %2420 = vperm.xlu0 %2419, %v2346
        %v2421 = vpop.permute.xlu0 %2420
        %2424 = vset.pattern.permute.xlu0 0
        %2425 = vperm.xlu0 %2424, %v2347
        %v2426 = vpop.permute.xlu0 %2425
        %2429 = vset.pattern.permute.xlu0 0
        %2430 = vperm.xlu0 %2429, %v2348
        %v2431 = vpop.permute.xlu0 %2430
        %2434 = vset.pattern.permute.xlu0 0
        %2435 = vperm.xlu0 %2434, %v2349
        %v2436 = vpop.permute.xlu0 %2435
        %2439 = vset.pattern.permute.xlu0 0
        %2440 = vperm.xlu0 %2439, %v2350
        %v2441 = vpop.permute.xlu0 %2440
        %2444 = vset.pattern.permute.xlu0 0
        %2445 = vperm.xlu0 %2444, %v2351
        %v2446 = vpop.permute.xlu0 %2445
        %2449 = vset.pattern.permute.xlu0 0
        %2450 = vperm.xlu0 %2449, %v2352
        %v2451 = vpop.permute.xlu0 %2450
        %2454 = vset.pattern.permute.xlu0 0
        %2455 = vperm.xlu0 %2454, %v2353
        %v2456 = vpop.permute.xlu0 %2455
        %2459 = vset.pattern.permute.xlu0 0
        %2460 = vperm.xlu0 %2459, %v2354
        %v2461 = vpop.permute.xlu0 %2460
        %2464 = vset.pattern.permute.xlu0 0
        %2465 = vperm.xlu0 %2464, %v2355
        %v2466 = vpop.permute.xlu0 %2465
        %2469 = vset.pattern.permute.xlu0 0
        %2470 = vperm.xlu0 %2469, %v2356
        %v2471 = vpop.permute.xlu0 %2470
        %2474 = vset.pattern.permute.xlu0 0
        %2475 = vperm.xlu0 %2474, %v2357
        %v2476 = vpop.permute.xlu0 %2475
        %2479 = vset.pattern.permute.xlu0 0
        %2480 = vperm.xlu0 %2479, %v2358
        %v2481 = vpop.permute.xlu0 %2480
        %2484 = vset.pattern.permute.xlu0 0
        %2485 = vperm.xlu0 %2484, %v2359
        %v2486 = vpop.permute.xlu0 %2485
        %2489 = vset.pattern.permute.xlu0 0
        %2490 = vperm.xlu0 %2489, %v2360
        %v2491 = vpop.permute.xlu0 %2490
        %2494 = vset.pattern.permute.xlu0 0
        %2495 = vperm.xlu0 %2494, %v2361
        %v2496 = vpop.permute.xlu0 %2495
        %2499 = vset.pattern.permute.xlu0 0
        %2500 = vperm.xlu0 %2499, %v2362
        %v2501 = vpop.permute.xlu0 %2500
        %2504 = vset.pattern.permute.xlu0 0
        %2505 = vperm.xlu0 %2504, %v2363
        %v2506 = vpop.permute.xlu0 %2505
        %2509 = vset.pattern.permute.xlu0 0
        %2510 = vperm.xlu0 %2509, %v2364
        %v2511 = vpop.permute.xlu0 %2510
        %2514 = vset.pattern.permute.xlu0 0
        %2515 = vperm.xlu0 %2514, %v2365
        %v2516 = vpop.permute.xlu0 %2515
        %2519 = vset.pattern.permute.xlu0 0
        %2520 = vperm.xlu0 %2519, %v2366
        %v2521 = vpop.permute.xlu0 %2520
        %2524 = vset.pattern.permute.xlu0 0
        %2525 = vperm.xlu0 %2524, %v2367
        %v2526 = vpop.permute.xlu0 %2525
        %v2560 = vunpack.c.l.b16 %v2303
        %v2561 = vunpack.c.h.b16 %v2303
        %v2562 = vunpack.c.l.b16 %v2304
        %v2563 = vunpack.c.h.b16 %v2304
        %v2564 = vunpack.c.l.b16 %v2305
        %v2565 = vunpack.c.h.b16 %v2305
        %v2566 = vunpack.c.l.b16 %v2306
        %v2567 = vunpack.c.h.b16 %v2306
        %v2568 = vunpack.c.l.b16 %v2307
        %v2569 = vunpack.c.h.b16 %v2307
        %v2570 = vunpack.c.l.b16 %v2308
        %v2571 = vunpack.c.h.b16 %v2308
        %v2572 = vunpack.c.l.b16 %v2309
        %v2573 = vunpack.c.h.b16 %v2309
        %v2574 = vunpack.c.l.b16 %v2310
        %v2575 = vunpack.c.h.b16 %v2310
        %v2576 = vunpack.c.l.b16 %v2311
        %v2577 = vunpack.c.h.b16 %v2311
        %v2578 = vunpack.c.l.b16 %v2312
        %v2579 = vunpack.c.h.b16 %v2312
        %v2580 = vunpack.c.l.b16 %v2313
        %v2581 = vunpack.c.h.b16 %v2313
        %v2582 = vunpack.c.l.b16 %v2314
        %v2583 = vunpack.c.h.b16 %v2314
        %v2584 = vunpack.c.l.b16 %v2315
        %v2585 = vunpack.c.h.b16 %v2315
        %v2586 = vunpack.c.l.b16 %v2316
        %v2587 = vunpack.c.h.b16 %v2316
        %v2588 = vunpack.c.l.b16 %v2317
        %v2589 = vunpack.c.h.b16 %v2317
        %v2590 = vunpack.c.l.b16 %v2318
        %v2591 = vunpack.c.h.b16 %v2318
        %v2592 = vunpack.c.l.b16 %v2319
        %v2593 = vunpack.c.h.b16 %v2319
        %v2594 = vunpack.c.l.b16 %v2320
        %v2595 = vunpack.c.h.b16 %v2320
        %v2596 = vunpack.c.l.b16 %v2321
        %v2597 = vunpack.c.h.b16 %v2321
        %v2598 = vunpack.c.l.b16 %v2322
        %v2599 = vunpack.c.h.b16 %v2322
        %v2600 = vunpack.c.l.b16 %v2323
        %v2601 = vunpack.c.h.b16 %v2323
        %v2602 = vunpack.c.l.b16 %v2324
        %v2603 = vunpack.c.h.b16 %v2324
        %v2604 = vunpack.c.l.b16 %v2325
        %v2605 = vunpack.c.h.b16 %v2325
        %v2606 = vunpack.c.l.b16 %v2326
        %v2607 = vunpack.c.h.b16 %v2326
        %v2608 = vunpack.c.l.b16 %v2327
        %v2609 = vunpack.c.h.b16 %v2327
        %v2610 = vunpack.c.l.b16 %v2328
        %v2611 = vunpack.c.h.b16 %v2328
        %v2612 = vunpack.c.l.b16 %v2329
        %v2613 = vunpack.c.h.b16 %v2329
        %v2614 = vunpack.c.l.b16 %v2330
        %v2615 = vunpack.c.h.b16 %v2330
        %v2616 = vunpack.c.l.b16 %v2331
        %v2617 = vunpack.c.h.b16 %v2331
        %v2618 = vunpack.c.l.b16 %v2332
        %v2619 = vunpack.c.h.b16 %v2332
        %v2620 = vunpack.c.l.b16 %v2333
        %v2621 = vunpack.c.h.b16 %v2333
        %v2622 = vunpack.c.l.b16 %v2334
        %v2623 = vunpack.c.h.b16 %v2334
        %v2624 = vpack.c.b16 %v2562, %v2560
        %v2625 = vpack.c.b16 %v2563, %v2561
        %v2626 = vpack.c.b16 %v2566, %v2564
        %v2627 = vpack.c.b16 %v2567, %v2565
        %v2628 = vpack.c.b16 %v2570, %v2568
        %v2629 = vpack.c.b16 %v2571, %v2569
        %v2630 = vpack.c.b16 %v2574, %v2572
        %v2631 = vpack.c.b16 %v2575, %v2573
        %v2632 = vpack.c.b16 %v2578, %v2576
        %v2633 = vpack.c.b16 %v2579, %v2577
        %v2634 = vpack.c.b16 %v2582, %v2580
        %v2635 = vpack.c.b16 %v2583, %v2581
        %v2636 = vpack.c.b16 %v2586, %v2584
        %v2637 = vpack.c.b16 %v2587, %v2585
        %v2638 = vpack.c.b16 %v2590, %v2588
        %v2639 = vpack.c.b16 %v2591, %v2589
        %v2640 = vpack.c.b16 %v2594, %v2592
        %v2641 = vpack.c.b16 %v2595, %v2593
        %v2642 = vpack.c.b16 %v2598, %v2596
        %v2643 = vpack.c.b16 %v2599, %v2597
        %v2644 = vpack.c.b16 %v2602, %v2600
        %v2645 = vpack.c.b16 %v2603, %v2601
        %v2646 = vpack.c.b16 %v2606, %v2604
        %v2647 = vpack.c.b16 %v2607, %v2605
        %v2648 = vpack.c.b16 %v2610, %v2608
        %v2649 = vpack.c.b16 %v2611, %v2609
        %v2650 = vpack.c.b16 %v2614, %v2612
        %v2651 = vpack.c.b16 %v2615, %v2613
        %v2652 = vpack.c.b16 %v2618, %v2616
        %v2653 = vpack.c.b16 %v2619, %v2617
        %v2654 = vpack.c.b16 %v2622, %v2620
        %v2655 = vpack.c.b16 %v2623, %v2621
        %2688 = vmatprep.subr.bf16.mxu0 0
        %2689 = vmatpush1.bf16.msra.mxu0 %v2293
        %2690 = vmatprep.subr.bf16.mxu0 0
        %2691 = vmatpush1.bf16.msra.mxu0 %v2292
        %2692 = vmatprep.subr.bf16.mxu0 0
        %2693 = vmatpush1.bf16.msra.mxu0 %v2291
        %2694 = vmatprep.subr.bf16.mxu0 0
        %2695 = vmatpush1.bf16.msra.mxu0 %v2290
        %2696 = vmatprep.subr.bf16.mxu0 0
        %2697 = vmatpush1.bf16.msra.mxu0 %v2289
        %2698 = vmatprep.subr.bf16.mxu0 0
        %2699 = vmatpush1.bf16.msra.mxu0 %v2288
        %2700 = vmatprep.subr.bf16.mxu0 0
        %2701 = vmatpush1.bf16.msra.mxu0 %v2287
        %2702 = vmatprep.subr.bf16.mxu0 0
        %2703 = vmatpush1.bf16.msra.mxu0 %v2286
        %2704 = vmatprep.subr.bf16.mxu0 0
        %2705 = vmatpush2.bf16.msra.mxu0 %v2301
        %2706 = vmatprep.subr.bf16.mxu0 0
        %2707 = vmatpush2.bf16.msra.mxu0 %v2300
        %2708 = vmatprep.subr.bf16.mxu0 0
        %2709 = vmatpush2.bf16.msra.mxu0 %v2299
        %2710 = vmatprep.subr.bf16.mxu0 0
        %2711 = vmatpush2.bf16.msra.mxu0 %v2298
        %2712 = vmatprep.subr.bf16.mxu0 0
        %2713 = vmatpush2.bf16.msra.mxu0 %v2297
        %2714 = vmatprep.subr.bf16.mxu0 0
        %2715 = vmatpush2.bf16.msra.mxu0 %v2296
        %2716 = vmatprep.subr.bf16.mxu0 0
        %2717 = vmatpush2.bf16.msra.mxu0 %v2295
        %2718 = vmatprep.subr.bf16.mxu0 0
        %2719 = vmatpush2.bf16.msra.mxu0 %v2294
        %2720 = vmatprep.mubr.bf16.mxu0 %v2625
        %2721 = vmatmul.mubr.bf16.gmra.mxu0 %v2624
        %v2722 = vpop.f32.mrf.mxu0
        %v2723 = vadd.f32 %v2371, %v2722
        %v2724 = vpop.f32.mrf.mxu0
        %v2725 = vpop.f32.mrf.mxu0
        %v2726 = vadd.f32 %v2376, %v2725
        %v2727 = vpop.f32.mrf.mxu0
        %2728 = vmatprep.mubr.bf16.mxu0 %v2627
        %2729 = vmatmul.mubr.bf16.gmra.mxu0 %v2626
        %v2730 = vpop.f32.mrf.mxu0
        %v2731 = vadd.f32 %v2381, %v2730
        %v2732 = vpop.f32.mrf.mxu0
        %v2733 = vpop.f32.mrf.mxu0
        %v2734 = vadd.f32 %v2386, %v2733
        %v2735 = vpop.f32.mrf.mxu0
        %2736 = vmatprep.mubr.bf16.mxu0 %v2629
        %2737 = vmatmul.mubr.bf16.gmra.mxu0 %v2628
        %v2738 = vpop.f32.mrf.mxu0
        %v2739 = vadd.f32 %v2391, %v2738
        %v2740 = vpop.f32.mrf.mxu0
        %v2741 = vpop.f32.mrf.mxu0
        %v2742 = vadd.f32 %v2396, %v2741
        %v2743 = vpop.f32.mrf.mxu0
        %2744 = vmatprep.mubr.bf16.mxu0 %v2631
        %2745 = vmatmul.mubr.bf16.gmra.mxu0 %v2630
        %v2746 = vpop.f32.mrf.mxu0
        %v2747 = vadd.f32 %v2401, %v2746
        %v2748 = vpop.f32.mrf.mxu0
        %v2749 = vpop.f32.mrf.mxu0
        %v2750 = vadd.f32 %v2406, %v2749
        %v2751 = vpop.f32.mrf.mxu0
        %2752 = vmatprep.mubr.bf16.mxu0 %v2633
        %2753 = vmatmul.mubr.bf16.gmra.mxu0 %v2632
        %v2754 = vpop.f32.mrf.mxu0
        %v2755 = vadd.f32 %v2411, %v2754
        %v2756 = vpop.f32.mrf.mxu0
        %v2757 = vpop.f32.mrf.mxu0
        %v2758 = vadd.f32 %v2416, %v2757
        %v2759 = vpop.f32.mrf.mxu0
        %2760 = vmatprep.mubr.bf16.mxu0 %v2635
        %2761 = vmatmul.mubr.bf16.gmra.mxu0 %v2634
        %v2762 = vpop.f32.mrf.mxu0
        %v2763 = vadd.f32 %v2421, %v2762
        %v2764 = vpop.f32.mrf.mxu0
        %v2765 = vpop.f32.mrf.mxu0
        %v2766 = vadd.f32 %v2426, %v2765
        %v2767 = vpop.f32.mrf.mxu0
        %2768 = vmatprep.mubr.bf16.mxu0 %v2637
        %2769 = vmatmul.mubr.bf16.gmra.mxu0 %v2636
        %v2770 = vpop.f32.mrf.mxu0
        %v2771 = vadd.f32 %v2431, %v2770
        %v2772 = vpop.f32.mrf.mxu0
        %v2773 = vpop.f32.mrf.mxu0
        %v2774 = vadd.f32 %v2436, %v2773
        %v2775 = vpop.f32.mrf.mxu0
        %2776 = vmatprep.mubr.bf16.mxu0 %v2639
        %2777 = vmatmul.mubr.bf16.gmra.mxu0 %v2638
        %v2778 = vpop.f32.mrf.mxu0
        %v2779 = vadd.f32 %v2441, %v2778
        %v2780 = vpop.f32.mrf.mxu0
        %v2781 = vpop.f32.mrf.mxu0
        %v2782 = vadd.f32 %v2446, %v2781
        %v2783 = vpop.f32.mrf.mxu0
        %2784 = vmatprep.mubr.bf16.mxu0 %v2641
        %2785 = vmatmul.mubr.bf16.gmra.mxu0 %v2640
        %v2786 = vpop.f32.mrf.mxu0
        %v2787 = vadd.f32 %v2451, %v2786
        %v2788 = vpop.f32.mrf.mxu0
        %v2789 = vpop.f32.mrf.mxu0
        %v2790 = vadd.f32 %v2456, %v2789
        %v2791 = vpop.f32.mrf.mxu0
        %2792 = vmatprep.mubr.bf16.mxu0 %v2643
        %2793 = vmatmul.mubr.bf16.gmra.mxu0 %v2642
        %v2794 = vpop.f32.mrf.mxu0
        %v2795 = vadd.f32 %v2461, %v2794
        %v2796 = vpop.f32.mrf.mxu0
        %v2797 = vpop.f32.mrf.mxu0
        %v2798 = vadd.f32 %v2466, %v2797
        %v2799 = vpop.f32.mrf.mxu0
        %2800 = vmatprep.mubr.bf16.mxu0 %v2645
        %2801 = vmatmul.mubr.bf16.gmra.mxu0 %v2644
        %v2802 = vpop.f32.mrf.mxu0
        %v2803 = vadd.f32 %v2471, %v2802
        %v2804 = vpop.f32.mrf.mxu0
        %v2805 = vpop.f32.mrf.mxu0
        %v2806 = vadd.f32 %v2476, %v2805
        %v2807 = vpop.f32.mrf.mxu0
        %2808 = vmatprep.mubr.bf16.mxu0 %v2647
        %2809 = vmatmul.mubr.bf16.gmra.mxu0 %v2646
        %v2810 = vpop.f32.mrf.mxu0
        %v2811 = vadd.f32 %v2481, %v2810
        %v2812 = vpop.f32.mrf.mxu0
        %v2813 = vpop.f32.mrf.mxu0
        %v2814 = vadd.f32 %v2486, %v2813
        %v2815 = vpop.f32.mrf.mxu0
        %2816 = vmatprep.mubr.bf16.mxu0 %v2649
        %2817 = vmatmul.mubr.bf16.gmra.mxu0 %v2648
        %v2818 = vpop.f32.mrf.mxu0
        %v2819 = vadd.f32 %v2491, %v2818
        %v2820 = vpop.f32.mrf.mxu0
        %v2821 = vpop.f32.mrf.mxu0
        %v2822 = vadd.f32 %v2496, %v2821
        %v2823 = vpop.f32.mrf.mxu0
        %2824 = vmatprep.mubr.bf16.mxu0 %v2651
        %2825 = vmatmul.mubr.bf16.gmra.mxu0 %v2650
        %v2826 = vpop.f32.mrf.mxu0
        %v2827 = vadd.f32 %v2501, %v2826
        %v2828 = vpop.f32.mrf.mxu0
        %v2829 = vpop.f32.mrf.mxu0
        %v2830 = vadd.f32 %v2506, %v2829
        %v2831 = vpop.f32.mrf.mxu0
        %2832 = vmatprep.mubr.bf16.mxu0 %v2653
        %2833 = vmatmul.mubr.bf16.gmra.mxu0 %v2652
        %v2834 = vpop.f32.mrf.mxu0
        %v2835 = vadd.f32 %v2511, %v2834
        %v2836 = vpop.f32.mrf.mxu0
        %v2837 = vpop.f32.mrf.mxu0
        %v2838 = vadd.f32 %v2516, %v2837
        %v2839 = vpop.f32.mrf.mxu0
        %2840 = vmatprep.mubr.bf16.mxu0 %v2655
        %2841 = vmatmul.mubr.bf16.gmra.mxu0 %v2654
        %v2842 = vpop.f32.mrf.mxu0
        %v2843 = vadd.f32 %v2521, %v2842
        %v2844 = vpop.f32.mrf.mxu0
        %v2845 = vpop.f32.mrf.mxu0
        %v2846 = vadd.f32 %v2526, %v2845
        %v2847 = vpop.f32.mrf.mxu0
        %2848 = vdwg.mxu0
        %v2849 = vmax.f32 %v2723, 0.0
        %v2850 = vmax.f32 %v2726, 0.0
        %v2851 = vmax.f32 %v2731, 0.0
        %v2852 = vmax.f32 %v2734, 0.0
        %v2853 = vmax.f32 %v2739, 0.0
        %v2854 = vmax.f32 %v2742, 0.0
        %v2855 = vmax.f32 %v2747, 0.0
        %v2856 = vmax.f32 %v2750, 0.0
        %v2857 = vmax.f32 %v2755, 0.0
        %v2858 = vmax.f32 %v2758, 0.0
        %v2859 = vmax.f32 %v2763, 0.0
        %v2860 = vmax.f32 %v2766, 0.0
        %v2861 = vmax.f32 %v2771, 0.0
        %v2862 = vmax.f32 %v2774, 0.0
        %v2863 = vmax.f32 %v2779, 0.0
        %v2864 = vmax.f32 %v2782, 0.0
        %v2865 = vmax.f32 %v2787, 0.0
        %v2866 = vmax.f32 %v2790, 0.0
        %v2867 = vmax.f32 %v2795, 0.0
        %v2868 = vmax.f32 %v2798, 0.0
        %v2869 = vmax.f32 %v2803, 0.0
        %v2870 = vmax.f32 %v2806, 0.0
        %v2871 = vmax.f32 %v2811, 0.0
        %v2872 = vmax.f32 %v2814, 0.0
        %v2873 = vmax.f32 %v2819, 0.0
        %v2874 = vmax.f32 %v2822, 0.0
        %v2875 = vmax.f32 %v2827, 0.0
        %v2876 = vmax.f32 %v2830, 0.0
        %v2877 = vmax.f32 %v2835, 0.0
        %v2878 = vmax.f32 %v2838, 0.0
        %v2879 = vmax.f32 %v2843, 0.0
        %v2880 = vmax.f32 %v2846, 0.0
        %v2881 = vpack.c.bf16 %v2850, %v2849
        %v2882 = vpack.c.bf16 %v2852, %v2851
        %v2883 = vpack.c.bf16 %v2854, %v2853
        %v2884 = vpack.c.bf16 %v2856, %v2855
        %v2885 = vpack.c.bf16 %v2858, %v2857
        %v2886 = vpack.c.bf16 %v2860, %v2859
        %v2887 = vpack.c.bf16 %v2862, %v2861
        %v2888 = vpack.c.bf16 %v2864, %v2863
        %v2889 = vpack.c.bf16 %v2866, %v2865
        %v2890 = vpack.c.bf16 %v2868, %v2867
        %v2891 = vpack.c.bf16 %v2870, %v2869
        %v2892 = vpack.c.bf16 %v2872, %v2871
        %v2893 = vpack.c.bf16 %v2874, %v2873
        %v2894 = vpack.c.bf16 %v2876, %v2875
        %v2895 = vpack.c.bf16 %v2878, %v2877
        %v2896 = vpack.c.bf16 %v2880, %v2879
        %s2897 = scalar_lea.vmem %s1, 1024
        %v2898 = vld [vmem:[%s2897] sm:$0xff]
        %v2899 = vld [vmem:[%s2897 + $0x8] sm:$0xff]
        %v2900 = vld [vmem:[%s2897 + $0x10] sm:$0xff]
        %v2901 = vld [vmem:[%s2897 + $0x18] sm:$0xff]
        %v2902 = vld [vmem:[%s2897 + $0x20] sm:$0xff]
        %v2903 = vld [vmem:[%s2897 + $0x28] sm:$0xff]
        %v2904 = vld [vmem:[%s2897 + $0x30] sm:$0xff]
        %v2905 = vld [vmem:[%s2897 + $0x38] sm:$0xff]
        %v2906 = vld [vmem:[%s2897 + $0x40] sm:$0xff]
        %v2907 = vld [vmem:[%s2897 + $0x48] sm:$0xff]
        %v2908 = vld [vmem:[%s2897 + $0x50] sm:$0xff]
        %v2909 = vld [vmem:[%s2897 + $0x58] sm:$0xff]
        %v2910 = vld [vmem:[%s2897 + $0x60] sm:$0xff]
        %v2911 = vld [vmem:[%s2897 + $0x68] sm:$0xff]
        %v2912 = vld [vmem:[%s2897 + $0x70] sm:$0xff]
        %v2913 = vld [vmem:[%s2897 + $0x78] sm:$0xff]
        %v2914 = vld [vmem:[%s2897 + $0x80] sm:$0xff]
        %v2915 = vld [vmem:[%s2897 + $0x88] sm:$0xff]
        %v2916 = vld [vmem:[%s2897 + $0x90] sm:$0xff]
        %v2917 = vld [vmem:[%s2897 + $0x98] sm:$0xff]
        %v2918 = vld [vmem:[%s2897 + $0xa0] sm:$0xff]
        %v2919 = vld [vmem:[%s2897 + $0xa8] sm:$0xff]
        %v2920 = vld [vmem:[%s2897 + $0xb0] sm:$0xff]
        %v2921 = vld [vmem:[%s2897 + $0xb8] sm:$0xff]
        %v2922 = vld [vmem:[%s2897 + $0xc0] sm:$0xff]
        %v2923 = vld [vmem:[%s2897 + $0xc8] sm:$0xff]
        %v2924 = vld [vmem:[%s2897 + $0xd0] sm:$0xff]
        %v2925 = vld [vmem:[%s2897 + $0xd8] sm:$0xff]
        %v2926 = vld [vmem:[%s2897 + $0xe0] sm:$0xff]
        %v2927 = vld [vmem:[%s2897 + $0xe8] sm:$0xff]
        %v2928 = vld [vmem:[%s2897 + $0xf0] sm:$0xff]
        %v2929 = vld [vmem:[%s2897 + $0xf8] sm:$0xff]
        %s2930 = scalar_lea.vmem %s2, 1024
        %v2931 = vld [vmem:[%s2930] sm:$0xff]
        %v2932 = vld [vmem:[%s2930 + $0x8] sm:$0xff]
        %v2933 = vld [vmem:[%s2930 + $0x10] sm:$0xff]
        %v2934 = vld [vmem:[%s2930 + $0x18] sm:$0xff]
        %v2935 = vld [vmem:[%s2930 + $0x20] sm:$0xff]
        %v2936 = vld [vmem:[%s2930 + $0x28] sm:$0xff]
        %v2937 = vld [vmem:[%s2930 + $0x30] sm:$0xff]
        %v2938 = vld [vmem:[%s2930 + $0x38] sm:$0xff]
        %v2939 = vld [vmem:[%s2930 + $0x40] sm:$0xff]
        %v2940 = vld [vmem:[%s2930 + $0x48] sm:$0xff]
        %v2941 = vld [vmem:[%s2930 + $0x50] sm:$0xff]
        %v2942 = vld [vmem:[%s2930 + $0x58] sm:$0xff]
        %v2943 = vld [vmem:[%s2930 + $0x60] sm:$0xff]
        %v2944 = vld [vmem:[%s2930 + $0x68] sm:$0xff]
        %v2945 = vld [vmem:[%s2930 + $0x70] sm:$0xff]
        %v2946 = vld [vmem:[%s2930 + $0x78] sm:$0xff]
        %v2947 = vld [vmem:[%s2930 + $0x80] sm:$0xff]
        %v2948 = vld [vmem:[%s2930 + $0x88] sm:$0xff]
        %v2949 = vld [vmem:[%s2930 + $0x90] sm:$0xff]
        %v2950 = vld [vmem:[%s2930 + $0x98] sm:$0xff]
        %v2951 = vld [vmem:[%s2930 + $0xa0] sm:$0xff]
        %v2952 = vld [vmem:[%s2930 + $0xa8] sm:$0xff]
        %v2953 = vld [vmem:[%s2930 + $0xb0] sm:$0xff]
        %v2954 = vld [vmem:[%s2930 + $0xb8] sm:$0xff]
        %v2955 = vld [vmem:[%s2930 + $0xc0] sm:$0xff]
        %v2956 = vld [vmem:[%s2930 + $0xc8] sm:$0xff]
        %v2957 = vld [vmem:[%s2930 + $0xd0] sm:$0xff]
        %v2958 = vld [vmem:[%s2930 + $0xd8] sm:$0xff]
        %v2959 = vld [vmem:[%s2930 + $0xe0] sm:$0xff]
        %v2960 = vld [vmem:[%s2930 + $0xe8] sm:$0xff]
        %v2961 = vld [vmem:[%s2930 + $0xf0] sm:$0xff]
        %v2962 = vld [vmem:[%s2930 + $0xf8] sm:$0xff]
        %2964 = vset.pattern.permute.xlu0 0
        %2965 = vperm.xlu0 %2964, %v2931
        %v2966 = vpop.permute.xlu0 %2965
        %2969 = vset.pattern.permute.xlu0 0
        %2970 = vperm.xlu0 %2969, %v2932
        %v2971 = vpop.permute.xlu0 %2970
        %2974 = vset.pattern.permute.xlu0 0
        %2975 = vperm.xlu0 %2974, %v2933
        %v2976 = vpop.permute.xlu0 %2975
        %2979 = vset.pattern.permute.xlu0 0
        %2980 = vperm.xlu0 %2979, %v2934
        %v2981 = vpop.permute.xlu0 %2980
        %2984 = vset.pattern.permute.xlu0 0
        %2985 = vperm.xlu0 %2984, %v2935
        %v2986 = vpop.permute.xlu0 %2985
        %2989 = vset.pattern.permute.xlu0 0
        %2990 = vperm.xlu0 %2989, %v2936
        %v2991 = vpop.permute.xlu0 %2990
        %2994 = vset.pattern.permute.xlu0 0
        %2995 = vperm.xlu0 %2994, %v2937
        %v2996 = vpop.permute.xlu0 %2995
        %2999 = vset.pattern.permute.xlu0 0
        %3000 = vperm.xlu0 %2999, %v2938
        %v3001 = vpop.permute.xlu0 %3000
        %3004 = vset.pattern.permute.xlu0 0
        %3005 = vperm.xlu0 %3004, %v2939
        %v3006 = vpop.permute.xlu0 %3005
        %3009 = vset.pattern.permute.xlu0 0
        %3010 = vperm.xlu0 %3009, %v2940
        %v3011 = vpop.permute.xlu0 %3010
        %3014 = vset.pattern.permute.xlu0 0
        %3015 = vperm.xlu0 %3014, %v2941
        %v3016 = vpop.permute.xlu0 %3015
        %3019 = vset.pattern.permute.xlu0 0
        %3020 = vperm.xlu0 %3019, %v2942
        %v3021 = vpop.permute.xlu0 %3020
        %3024 = vset.pattern.permute.xlu0 0
        %3025 = vperm.xlu0 %3024, %v2943
        %v3026 = vpop.permute.xlu0 %3025
        %3029 = vset.pattern.permute.xlu0 0
        %3030 = vperm.xlu0 %3029, %v2944
        %v3031 = vpop.permute.xlu0 %3030
        %3034 = vset.pattern.permute.xlu0 0
        %3035 = vperm.xlu0 %3034, %v2945
        %v3036 = vpop.permute.xlu0 %3035
        %3039 = vset.pattern.permute.xlu0 0
        %3040 = vperm.xlu0 %3039, %v2946
        %v3041 = vpop.permute.xlu0 %3040
        %3044 = vset.pattern.permute.xlu0 0
        %3045 = vperm.xlu0 %3044, %v2947
        %v3046 = vpop.permute.xlu0 %3045
        %3049 = vset.pattern.permute.xlu0 0
        %3050 = vperm.xlu0 %3049, %v2948
        %v3051 = vpop.permute.xlu0 %3050
        %3054 = vset.pattern.permute.xlu0 0
        %3055 = vperm.xlu0 %3054, %v2949
        %v3056 = vpop.permute.xlu0 %3055
        %3059 = vset.pattern.permute.xlu0 0
        %3060 = vperm.xlu0 %3059, %v2950
        %v3061 = vpop.permute.xlu0 %3060
        %3064 = vset.pattern.permute.xlu0 0
        %3065 = vperm.xlu0 %3064, %v2951
        %v3066 = vpop.permute.xlu0 %3065
        %3069 = vset.pattern.permute.xlu0 0
        %3070 = vperm.xlu0 %3069, %v2952
        %v3071 = vpop.permute.xlu0 %3070
        %3074 = vset.pattern.permute.xlu0 0
        %3075 = vperm.xlu0 %3074, %v2953
        %v3076 = vpop.permute.xlu0 %3075
        %3079 = vset.pattern.permute.xlu0 0
        %3080 = vperm.xlu0 %3079, %v2954
        %v3081 = vpop.permute.xlu0 %3080
        %3084 = vset.pattern.permute.xlu0 0
        %3085 = vperm.xlu0 %3084, %v2955
        %v3086 = vpop.permute.xlu0 %3085
        %3089 = vset.pattern.permute.xlu0 0
        %3090 = vperm.xlu0 %3089, %v2956
        %v3091 = vpop.permute.xlu0 %3090
        %3094 = vset.pattern.permute.xlu0 0
        %3095 = vperm.xlu0 %3094, %v2957
        %v3096 = vpop.permute.xlu0 %3095
        %3099 = vset.pattern.permute.xlu0 0
        %3100 = vperm.xlu0 %3099, %v2958
        %v3101 = vpop.permute.xlu0 %3100
        %3104 = vset.pattern.permute.xlu0 0
        %3105 = vperm.xlu0 %3104, %v2959
        %v3106 = vpop.permute.xlu0 %3105
        %3109 = vset.pattern.permute.xlu0 0
        %3110 = vperm.xlu0 %3109, %v2960
        %v3111 = vpop.permute.xlu0 %3110
        %3114 = vset.pattern.permute.xlu0 0
        %3115 = vperm.xlu0 %3114, %v2961
        %v3116 = vpop.permute.xlu0 %3115
        %3119 = vset.pattern.permute.xlu0 0
        %3120 = vperm.xlu0 %3119, %v2962
        %v3121 = vpop.permute.xlu0 %3120
        %v3155 = vunpack.c.l.b16 %v2898
        %v3156 = vunpack.c.h.b16 %v2898
        %v3157 = vunpack.c.l.b16 %v2899
        %v3158 = vunpack.c.h.b16 %v2899
        %v3159 = vunpack.c.l.b16 %v2900
        %v3160 = vunpack.c.h.b16 %v2900
        %v3161 = vunpack.c.l.b16 %v2901
        %v3162 = vunpack.c.h.b16 %v2901
        %v3163 = vunpack.c.l.b16 %v2902
        %v3164 = vunpack.c.h.b16 %v2902
        %v3165 = vunpack.c.l.b16 %v2903
        %v3166 = vunpack.c.h.b16 %v2903
        %v3167 = vunpack.c.l.b16 %v2904
        %v3168 = vunpack.c.h.b16 %v2904
        %v3169 = vunpack.c.l.b16 %v2905
        %v3170 = vunpack.c.h.b16 %v2905
        %v3171 = vunpack.c.l.b16 %v2906
        %v3172 = vunpack.c.h.b16 %v2906
        %v3173 = vunpack.c.l.b16 %v2907
        %v3174 = vunpack.c.h.b16 %v2907
        %v3175 = vunpack.c.l.b16 %v2908
        %v3176 = vunpack.c.h.b16 %v2908
        %v3177 = vunpack.c.l.b16 %v2909
        %v3178 = vunpack.c.h.b16 %v2909
        %v3179 = vunpack.c.l.b16 %v2910
        %v3180 = vunpack.c.h.b16 %v2910
        %v3181 = vunpack.c.l.b16 %v2911
        %v3182 = vunpack.c.h.b16 %v2911
        %v3183 = vunpack.c.l.b16 %v2912
        %v3184 = vunpack.c.h.b16 %v2912
        %v3185 = vunpack.c.l.b16 %v2913
        %v3186 = vunpack.c.h.b16 %v2913
        %v3187 = vunpack.c.l.b16 %v2914
        %v3188 = vunpack.c.h.b16 %v2914
        %v3189 = vunpack.c.l.b16 %v2915
        %v3190 = vunpack.c.h.b16 %v2915
        %v3191 = vunpack.c.l.b16 %v2916
        %v3192 = vunpack.c.h.b16 %v2916
        %v3193 = vunpack.c.l.b16 %v2917
        %v3194 = vunpack.c.h.b16 %v2917
        %v3195 = vunpack.c.l.b16 %v2918
        %v3196 = vunpack.c.h.b16 %v2918
        %v3197 = vunpack.c.l.b16 %v2919
        %v3198 = vunpack.c.h.b16 %v2919
        %v3199 = vunpack.c.l.b16 %v2920
        %v3200 = vunpack.c.h.b16 %v2920
        %v3201 = vunpack.c.l.b16 %v2921
        %v3202 = vunpack.c.h.b16 %v2921
        %v3203 = vunpack.c.l.b16 %v2922
        %v3204 = vunpack.c.h.b16 %v2922
        %v3205 = vunpack.c.l.b16 %v2923
        %v3206 = vunpack.c.h.b16 %v2923
        %v3207 = vunpack.c.l.b16 %v2924
        %v3208 = vunpack.c.h.b16 %v2924
        %v3209 = vunpack.c.l.b16 %v2925
        %v3210 = vunpack.c.h.b16 %v2925
        %v3211 = vunpack.c.l.b16 %v2926
        %v3212 = vunpack.c.h.b16 %v2926
        %v3213 = vunpack.c.l.b16 %v2927
        %v3214 = vunpack.c.h.b16 %v2927
        %v3215 = vunpack.c.l.b16 %v2928
        %v3216 = vunpack.c.h.b16 %v2928
        %v3217 = vunpack.c.l.b16 %v2929
        %v3218 = vunpack.c.h.b16 %v2929
        %v3219 = vpack.c.b16 %v3157, %v3155
        %v3220 = vpack.c.b16 %v3158, %v3156
        %v3221 = vpack.c.b16 %v3161, %v3159
        %v3222 = vpack.c.b16 %v3162, %v3160
        %v3223 = vpack.c.b16 %v3165, %v3163
        %v3224 = vpack.c.b16 %v3166, %v3164
        %v3225 = vpack.c.b16 %v3169, %v3167
        %v3226 = vpack.c.b16 %v3170, %v3168
        %v3227 = vpack.c.b16 %v3173, %v3171
        %v3228 = vpack.c.b16 %v3174, %v3172
        %v3229 = vpack.c.b16 %v3177, %v3175
        %v3230 = vpack.c.b16 %v3178, %v3176
        %v3231 = vpack.c.b16 %v3181, %v3179
        %v3232 = vpack.c.b16 %v3182, %v3180
        %v3233 = vpack.c.b16 %v3185, %v3183
        %v3234 = vpack.c.b16 %v3186, %v3184
        %v3235 = vpack.c.b16 %v3189, %v3187
        %v3236 = vpack.c.b16 %v3190, %v3188
        %v3237 = vpack.c.b16 %v3193, %v3191
        %v3238 = vpack.c.b16 %v3194, %v3192
        %v3239 = vpack.c.b16 %v3197, %v3195
        %v3240 = vpack.c.b16 %v3198, %v3196
        %v3241 = vpack.c.b16 %v3201, %v3199
        %v3242 = vpack.c.b16 %v3202, %v3200
        %v3243 = vpack.c.b16 %v3205, %v3203
        %v3244 = vpack.c.b16 %v3206, %v3204
        %v3245 = vpack.c.b16 %v3209, %v3207
        %v3246 = vpack.c.b16 %v3210, %v3208
        %v3247 = vpack.c.b16 %v3213, %v3211
        %v3248 = vpack.c.b16 %v3214, %v3212
        %v3249 = vpack.c.b16 %v3217, %v3215
        %v3250 = vpack.c.b16 %v3218, %v3216
        %3283 = vmatprep.subr.bf16.mxu0 0
        %3284 = vmatpush1.bf16.msra.mxu0 %v2888
        %3285 = vmatprep.subr.bf16.mxu0 0
        %3286 = vmatpush1.bf16.msra.mxu0 %v2887
        %3287 = vmatprep.subr.bf16.mxu0 0
        %3288 = vmatpush1.bf16.msra.mxu0 %v2886
        %3289 = vmatprep.subr.bf16.mxu0 0
        %3290 = vmatpush1.bf16.msra.mxu0 %v2885
        %3291 = vmatprep.subr.bf16.mxu0 0
        %3292 = vmatpush1.bf16.msra.mxu0 %v2884
        %3293 = vmatprep.subr.bf16.mxu0 0
        %3294 = vmatpush1.bf16.msra.mxu0 %v2883
        %3295 = vmatprep.subr.bf16.mxu0 0
        %3296 = vmatpush1.bf16.msra.mxu0 %v2882
        %3297 = vmatprep.subr.bf16.mxu0 0
        %3298 = vmatpush1.bf16.msra.mxu0 %v2881
        %3299 = vmatprep.subr.bf16.mxu0 0
        %3300 = vmatpush2.bf16.msra.mxu0 %v2896
        %3301 = vmatprep.subr.bf16.mxu0 0
        %3302 = vmatpush2.bf16.msra.mxu0 %v2895
        %3303 = vmatprep.subr.bf16.mxu0 0
        %3304 = vmatpush2.bf16.msra.mxu0 %v2894
        %3305 = vmatprep.subr.bf16.mxu0 0
        %3306 = vmatpush2.bf16.msra.mxu0 %v2893
        %3307 = vmatprep.subr.bf16.mxu0 0
        %3308 = vmatpush2.bf16.msra.mxu0 %v2892
        %3309 = vmatprep.subr.bf16.mxu0 0
        %3310 = vmatpush2.bf16.msra.mxu0 %v2891
        %3311 = vmatprep.subr.bf16.mxu0 0
        %3312 = vmatpush2.bf16.msra.mxu0 %v2890
        %3313 = vmatprep.subr.bf16.mxu0 0
        %3314 = vmatpush2.bf16.msra.mxu0 %v2889
        %3315 = vmatprep.mubr.bf16.mxu0 %v3220
        %3316 = vmatmul.mubr.bf16.gmra.mxu0 %v3219
        %v3317 = vpop.f32.mrf.mxu0
        %v3318 = vadd.f32 %v2966, %v3317
        %v3319 = vpop.f32.mrf.mxu0
        %v3320 = vpop.f32.mrf.mxu0
        %v3321 = vadd.f32 %v2971, %v3320
        %v3322 = vpop.f32.mrf.mxu0
        %3323 = vmatprep.mubr.bf16.mxu0 %v3222
        %3324 = vmatmul.mubr.bf16.gmra.mxu0 %v3221
        %v3325 = vpop.f32.mrf.mxu0
        %v3326 = vadd.f32 %v2976, %v3325
        %v3327 = vpop.f32.mrf.mxu0
        %v3328 = vpop.f32.mrf.mxu0
        %v3329 = vadd.f32 %v2981, %v3328
        %v3330 = vpop.f32.mrf.mxu0
        %3331 = vmatprep.mubr.bf16.mxu0 %v3224
        %3332 = vmatmul.mubr.bf16.gmra.mxu0 %v3223
        %v3333 = vpop.f32.mrf.mxu0
        %v3334 = vadd.f32 %v2986, %v3333
        %v3335 = vpop.f32.mrf.mxu0
        %v3336 = vpop.f32.mrf.mxu0
        %v3337 = vadd.f32 %v2991, %v3336
        %v3338 = vpop.f32.mrf.mxu0
        %3339 = vmatprep.mubr.bf16.mxu0 %v3226
        %3340 = vmatmul.mubr.bf16.gmra.mxu0 %v3225
        %v3341 = vpop.f32.mrf.mxu0
        %v3342 = vadd.f32 %v2996, %v3341
        %v3343 = vpop.f32.mrf.mxu0
        %v3344 = vpop.f32.mrf.mxu0
        %v3345 = vadd.f32 %v3001, %v3344
        %v3346 = vpop.f32.mrf.mxu0
        %3347 = vmatprep.mubr.bf16.mxu0 %v3228
        %3348 = vmatmul.mubr.bf16.gmra.mxu0 %v3227
        %v3349 = vpop.f32.mrf.mxu0
        %v3350 = vadd.f32 %v3006, %v3349
        %v3351 = vpop.f32.mrf.mxu0
        %v3352 = vpop.f32.mrf.mxu0
        %v3353 = vadd.f32 %v3011, %v3352
        %v3354 = vpop.f32.mrf.mxu0
        %3355 = vmatprep.mubr.bf16.mxu0 %v3230
        %3356 = vmatmul.mubr.bf16.gmra.mxu0 %v3229
        %v3357 = vpop.f32.mrf.mxu0
        %v3358 = vadd.f32 %v3016, %v3357
        %v3359 = vpop.f32.mrf.mxu0
        %v3360 = vpop.f32.mrf.mxu0
        %v3361 = vadd.f32 %v3021, %v3360
        %v3362 = vpop.f32.mrf.mxu0
        %3363 = vmatprep.mubr.bf16.mxu0 %v3232
        %3364 = vmatmul.mubr.bf16.gmra.mxu0 %v3231
        %v3365 = vpop.f32.mrf.mxu0
        %v3366 = vadd.f32 %v3026, %v3365
        %v3367 = vpop.f32.mrf.mxu0
        %v3368 = vpop.f32.mrf.mxu0
        %v3369 = vadd.f32 %v3031, %v3368
        %v3370 = vpop.f32.mrf.mxu0
        %3371 = vmatprep.mubr.bf16.mxu0 %v3234
        %3372 = vmatmul.mubr.bf16.gmra.mxu0 %v3233
        %v3373 = vpop.f32.mrf.mxu0
        %v3374 = vadd.f32 %v3036, %v3373
        %v3375 = vpop.f32.mrf.mxu0
        %v3376 = vpop.f32.mrf.mxu0
        %v3377 = vadd.f32 %v3041, %v3376
        %v3378 = vpop.f32.mrf.mxu0
        %3379 = vmatprep.mubr.bf16.mxu0 %v3236
        %3380 = vmatmul.mubr.bf16.gmra.mxu0 %v3235
        %v3381 = vpop.f32.mrf.mxu0
        %v3382 = vadd.f32 %v3046, %v3381
        %v3383 = vpop.f32.mrf.mxu0
        %v3384 = vpop.f32.mrf.mxu0
        %v3385 = vadd.f32 %v3051, %v3384
        %v3386 = vpop.f32.mrf.mxu0
        %3387 = vmatprep.mubr.bf16.mxu0 %v3238
        %3388 = vmatmul.mubr.bf16.gmra.mxu0 %v3237
        %v3389 = vpop.f32.mrf.mxu0
        %v3390 = vadd.f32 %v3056, %v3389
        %v3391 = vpop.f32.mrf.mxu0
        %v3392 = vpop.f32.mrf.mxu0
        %v3393 = vadd.f32 %v3061, %v3392
        %v3394 = vpop.f32.mrf.mxu0
        %3395 = vmatprep.mubr.bf16.mxu0 %v3240
        %3396 = vmatmul.mubr.bf16.gmra.mxu0 %v3239
        %v3397 = vpop.f32.mrf.mxu0
        %v3398 = vadd.f32 %v3066, %v3397
        %v3399 = vpop.f32.mrf.mxu0
        %v3400 = vpop.f32.mrf.mxu0
        %v3401 = vadd.f32 %v3071, %v3400
        %v3402 = vpop.f32.mrf.mxu0
        %3403 = vmatprep.mubr.bf16.mxu0 %v3242
        %3404 = vmatmul.mubr.bf16.gmra.mxu0 %v3241
        %v3405 = vpop.f32.mrf.mxu0
        %v3406 = vadd.f32 %v3076, %v3405
        %v3407 = vpop.f32.mrf.mxu0
        %v3408 = vpop.f32.mrf.mxu0
        %v3409 = vadd.f32 %v3081, %v3408
        %v3410 = vpop.f32.mrf.mxu0
        %3411 = vmatprep.mubr.bf16.mxu0 %v3244
        %3412 = vmatmul.mubr.bf16.gmra.mxu0 %v3243
        %v3413 = vpop.f32.mrf.mxu0
        %v3414 = vadd.f32 %v3086, %v3413
        %v3415 = vpop.f32.mrf.mxu0
        %v3416 = vpop.f32.mrf.mxu0
        %v3417 = vadd.f32 %v3091, %v3416
        %v3418 = vpop.f32.mrf.mxu0
        %3419 = vmatprep.mubr.bf16.mxu0 %v3246
        %3420 = vmatmul.mubr.bf16.gmra.mxu0 %v3245
        %v3421 = vpop.f32.mrf.mxu0
        %v3422 = vadd.f32 %v3096, %v3421
        %v3423 = vpop.f32.mrf.mxu0
        %v3424 = vpop.f32.mrf.mxu0
        %v3425 = vadd.f32 %v3101, %v3424
        %v3426 = vpop.f32.mrf.mxu0
        %3427 = vmatprep.mubr.bf16.mxu0 %v3248
        %3428 = vmatmul.mubr.bf16.gmra.mxu0 %v3247
        %v3429 = vpop.f32.mrf.mxu0
        %v3430 = vadd.f32 %v3106, %v3429
        %v3431 = vpop.f32.mrf.mxu0
        %v3432 = vpop.f32.mrf.mxu0
        %v3433 = vadd.f32 %v3111, %v3432
        %v3434 = vpop.f32.mrf.mxu0
        %3435 = vmatprep.mubr.bf16.mxu0 %v3250
        %3436 = vmatmul.mubr.bf16.gmra.mxu0 %v3249
        %v3437 = vpop.f32.mrf.mxu0
        %v3438 = vadd.f32 %v3116, %v3437
        %v3439 = vpop.f32.mrf.mxu0
        %v3440 = vpop.f32.mrf.mxu0
        %v3441 = vadd.f32 %v3121, %v3440
        %v3442 = vpop.f32.mrf.mxu0
        %3443 = vdwg.mxu0
        %v3444 = vmax.f32 %v3318, 0.0
        %v3445 = vmax.f32 %v3321, 0.0
        %v3446 = vmax.f32 %v3326, 0.0
        %v3447 = vmax.f32 %v3329, 0.0
        %v3448 = vmax.f32 %v3334, 0.0
        %v3449 = vmax.f32 %v3337, 0.0
        %v3450 = vmax.f32 %v3342, 0.0
        %v3451 = vmax.f32 %v3345, 0.0
        %v3452 = vmax.f32 %v3350, 0.0
        %v3453 = vmax.f32 %v3353, 0.0
        %v3454 = vmax.f32 %v3358, 0.0
        %v3455 = vmax.f32 %v3361, 0.0
        %v3456 = vmax.f32 %v3366, 0.0
        %v3457 = vmax.f32 %v3369, 0.0
        %v3458 = vmax.f32 %v3374, 0.0
        %v3459 = vmax.f32 %v3377, 0.0
        %v3460 = vmax.f32 %v3382, 0.0
        %v3461 = vmax.f32 %v3385, 0.0
        %v3462 = vmax.f32 %v3390, 0.0
        %v3463 = vmax.f32 %v3393, 0.0
        %v3464 = vmax.f32 %v3398, 0.0
        %v3465 = vmax.f32 %v3401, 0.0
        %v3466 = vmax.f32 %v3406, 0.0
        %v3467 = vmax.f32 %v3409, 0.0
        %v3468 = vmax.f32 %v3414, 0.0
        %v3469 = vmax.f32 %v3417, 0.0
        %v3470 = vmax.f32 %v3422, 0.0
        %v3471 = vmax.f32 %v3425, 0.0
        %v3472 = vmax.f32 %v3430, 0.0
        %v3473 = vmax.f32 %v3433, 0.0
        %v3474 = vmax.f32 %v3438, 0.0
        %v3475 = vmax.f32 %v3441, 0.0
        %v3476 = vpack.c.bf16 %v3445, %v3444
        %v3477 = vpack.c.bf16 %v3447, %v3446
        %v3478 = vpack.c.bf16 %v3449, %v3448
        %v3479 = vpack.c.bf16 %v3451, %v3450
        %v3480 = vpack.c.bf16 %v3453, %v3452
        %v3481 = vpack.c.bf16 %v3455, %v3454
        %v3482 = vpack.c.bf16 %v3457, %v3456
        %v3483 = vpack.c.bf16 %v3459, %v3458
        %v3484 = vpack.c.bf16 %v3461, %v3460
        %v3485 = vpack.c.bf16 %v3463, %v3462
        %v3486 = vpack.c.bf16 %v3465, %v3464
        %v3487 = vpack.c.bf16 %v3467, %v3466
        %v3488 = vpack.c.bf16 %v3469, %v3468
        %v3489 = vpack.c.bf16 %v3471, %v3470
        %v3490 = vpack.c.bf16 %v3473, %v3472
        %v3491 = vpack.c.bf16 %v3475, %v3474
        %s3492 = scalar_lea.vmem %s1, 1280
        %v3493 = vld [vmem:[%s3492] sm:$0xff]
        %v3494 = vld [vmem:[%s3492 + $0x8] sm:$0xff]
        %v3495 = vld [vmem:[%s3492 + $0x10] sm:$0xff]
        %v3496 = vld [vmem:[%s3492 + $0x18] sm:$0xff]
        %v3497 = vld [vmem:[%s3492 + $0x20] sm:$0xff]
        %v3498 = vld [vmem:[%s3492 + $0x28] sm:$0xff]
        %v3499 = vld [vmem:[%s3492 + $0x30] sm:$0xff]
        %v3500 = vld [vmem:[%s3492 + $0x38] sm:$0xff]
        %v3501 = vld [vmem:[%s3492 + $0x40] sm:$0xff]
        %v3502 = vld [vmem:[%s3492 + $0x48] sm:$0xff]
        %v3503 = vld [vmem:[%s3492 + $0x50] sm:$0xff]
        %v3504 = vld [vmem:[%s3492 + $0x58] sm:$0xff]
        %v3505 = vld [vmem:[%s3492 + $0x60] sm:$0xff]
        %v3506 = vld [vmem:[%s3492 + $0x68] sm:$0xff]
        %v3507 = vld [vmem:[%s3492 + $0x70] sm:$0xff]
        %v3508 = vld [vmem:[%s3492 + $0x78] sm:$0xff]
        %v3509 = vld [vmem:[%s3492 + $0x80] sm:$0xff]
        %v3510 = vld [vmem:[%s3492 + $0x88] sm:$0xff]
        %v3511 = vld [vmem:[%s3492 + $0x90] sm:$0xff]
        %v3512 = vld [vmem:[%s3492 + $0x98] sm:$0xff]
        %v3513 = vld [vmem:[%s3492 + $0xa0] sm:$0xff]
        %v3514 = vld [vmem:[%s3492 + $0xa8] sm:$0xff]
        %v3515 = vld [vmem:[%s3492 + $0xb0] sm:$0xff]
        %v3516 = vld [vmem:[%s3492 + $0xb8] sm:$0xff]
        %v3517 = vld [vmem:[%s3492 + $0xc0] sm:$0xff]
        %v3518 = vld [vmem:[%s3492 + $0xc8] sm:$0xff]
        %v3519 = vld [vmem:[%s3492 + $0xd0] sm:$0xff]
        %v3520 = vld [vmem:[%s3492 + $0xd8] sm:$0xff]
        %v3521 = vld [vmem:[%s3492 + $0xe0] sm:$0xff]
        %v3522 = vld [vmem:[%s3492 + $0xe8] sm:$0xff]
        %v3523 = vld [vmem:[%s3492 + $0xf0] sm:$0xff]
        %v3524 = vld [vmem:[%s3492 + $0xf8] sm:$0xff]
        %s3525 = scalar_lea.vmem %s2, 1280
        %v3526 = vld [vmem:[%s3525] sm:$0xff]
        %v3527 = vld [vmem:[%s3525 + $0x8] sm:$0xff]
        %v3528 = vld [vmem:[%s3525 + $0x10] sm:$0xff]
        %v3529 = vld [vmem:[%s3525 + $0x18] sm:$0xff]
        %v3530 = vld [vmem:[%s3525 + $0x20] sm:$0xff]
        %v3531 = vld [vmem:[%s3525 + $0x28] sm:$0xff]
        %v3532 = vld [vmem:[%s3525 + $0x30] sm:$0xff]
        %v3533 = vld [vmem:[%s3525 + $0x38] sm:$0xff]
        %v3534 = vld [vmem:[%s3525 + $0x40] sm:$0xff]
        %v3535 = vld [vmem:[%s3525 + $0x48] sm:$0xff]
        %v3536 = vld [vmem:[%s3525 + $0x50] sm:$0xff]
        %v3537 = vld [vmem:[%s3525 + $0x58] sm:$0xff]
        %v3538 = vld [vmem:[%s3525 + $0x60] sm:$0xff]
        %v3539 = vld [vmem:[%s3525 + $0x68] sm:$0xff]
        %v3540 = vld [vmem:[%s3525 + $0x70] sm:$0xff]
        %v3541 = vld [vmem:[%s3525 + $0x78] sm:$0xff]
        %v3542 = vld [vmem:[%s3525 + $0x80] sm:$0xff]
        %v3543 = vld [vmem:[%s3525 + $0x88] sm:$0xff]
        %v3544 = vld [vmem:[%s3525 + $0x90] sm:$0xff]
        %v3545 = vld [vmem:[%s3525 + $0x98] sm:$0xff]
        %v3546 = vld [vmem:[%s3525 + $0xa0] sm:$0xff]
        %v3547 = vld [vmem:[%s3525 + $0xa8] sm:$0xff]
        %v3548 = vld [vmem:[%s3525 + $0xb0] sm:$0xff]
        %v3549 = vld [vmem:[%s3525 + $0xb8] sm:$0xff]
        %v3550 = vld [vmem:[%s3525 + $0xc0] sm:$0xff]
        %v3551 = vld [vmem:[%s3525 + $0xc8] sm:$0xff]
        %v3552 = vld [vmem:[%s3525 + $0xd0] sm:$0xff]
        %v3553 = vld [vmem:[%s3525 + $0xd8] sm:$0xff]
        %v3554 = vld [vmem:[%s3525 + $0xe0] sm:$0xff]
        %v3555 = vld [vmem:[%s3525 + $0xe8] sm:$0xff]
        %v3556 = vld [vmem:[%s3525 + $0xf0] sm:$0xff]
        %v3557 = vld [vmem:[%s3525 + $0xf8] sm:$0xff]
        %3559 = vset.pattern.permute.xlu0 0
        %3560 = vperm.xlu0 %3559, %v3526
        %v3561 = vpop.permute.xlu0 %3560
        %3564 = vset.pattern.permute.xlu0 0
        %3565 = vperm.xlu0 %3564, %v3527
        %v3566 = vpop.permute.xlu0 %3565
        %3569 = vset.pattern.permute.xlu0 0
        %3570 = vperm.xlu0 %3569, %v3528
        %v3571 = vpop.permute.xlu0 %3570
        %3574 = vset.pattern.permute.xlu0 0
        %3575 = vperm.xlu0 %3574, %v3529
        %v3576 = vpop.permute.xlu0 %3575
        %3579 = vset.pattern.permute.xlu0 0
        %3580 = vperm.xlu0 %3579, %v3530
        %v3581 = vpop.permute.xlu0 %3580
        %3584 = vset.pattern.permute.xlu0 0
        %3585 = vperm.xlu0 %3584, %v3531
        %v3586 = vpop.permute.xlu0 %3585
        %3589 = vset.pattern.permute.xlu0 0
        %3590 = vperm.xlu0 %3589, %v3532
        %v3591 = vpop.permute.xlu0 %3590
        %3594 = vset.pattern.permute.xlu0 0
        %3595 = vperm.xlu0 %3594, %v3533
        %v3596 = vpop.permute.xlu0 %3595
        %3599 = vset.pattern.permute.xlu0 0
        %3600 = vperm.xlu0 %3599, %v3534
        %v3601 = vpop.permute.xlu0 %3600
        %3604 = vset.pattern.permute.xlu0 0
        %3605 = vperm.xlu0 %3604, %v3535
        %v3606 = vpop.permute.xlu0 %3605
        %3609 = vset.pattern.permute.xlu0 0
        %3610 = vperm.xlu0 %3609, %v3536
        %v3611 = vpop.permute.xlu0 %3610
        %3614 = vset.pattern.permute.xlu0 0
        %3615 = vperm.xlu0 %3614, %v3537
        %v3616 = vpop.permute.xlu0 %3615
        %3619 = vset.pattern.permute.xlu0 0
        %3620 = vperm.xlu0 %3619, %v3538
        %v3621 = vpop.permute.xlu0 %3620
        %3624 = vset.pattern.permute.xlu0 0
        %3625 = vperm.xlu0 %3624, %v3539
        %v3626 = vpop.permute.xlu0 %3625
        %3629 = vset.pattern.permute.xlu0 0
        %3630 = vperm.xlu0 %3629, %v3540
        %v3631 = vpop.permute.xlu0 %3630
        %3634 = vset.pattern.permute.xlu0 0
        %3635 = vperm.xlu0 %3634, %v3541
        %v3636 = vpop.permute.xlu0 %3635
        %3639 = vset.pattern.permute.xlu0 0
        %3640 = vperm.xlu0 %3639, %v3542
        %v3641 = vpop.permute.xlu0 %3640
        %3644 = vset.pattern.permute.xlu0 0
        %3645 = vperm.xlu0 %3644, %v3543
        %v3646 = vpop.permute.xlu0 %3645
        %3649 = vset.pattern.permute.xlu0 0
        %3650 = vperm.xlu0 %3649, %v3544
        %v3651 = vpop.permute.xlu0 %3650
        %3654 = vset.pattern.permute.xlu0 0
        %3655 = vperm.xlu0 %3654, %v3545
        %v3656 = vpop.permute.xlu0 %3655
        %3659 = vset.pattern.permute.xlu0 0
        %3660 = vperm.xlu0 %3659, %v3546
        %v3661 = vpop.permute.xlu0 %3660
        %3664 = vset.pattern.permute.xlu0 0
        %3665 = vperm.xlu0 %3664, %v3547
        %v3666 = vpop.permute.xlu0 %3665
        %3669 = vset.pattern.permute.xlu0 0
        %3670 = vperm.xlu0 %3669, %v3548
        %v3671 = vpop.permute.xlu0 %3670
        %3674 = vset.pattern.permute.xlu0 0
        %3675 = vperm.xlu0 %3674, %v3549
        %v3676 = vpop.permute.xlu0 %3675
        %3679 = vset.pattern.permute.xlu0 0
        %3680 = vperm.xlu0 %3679, %v3550
        %v3681 = vpop.permute.xlu0 %3680
        %3684 = vset.pattern.permute.xlu0 0
        %3685 = vperm.xlu0 %3684, %v3551
        %v3686 = vpop.permute.xlu0 %3685
        %3689 = vset.pattern.permute.xlu0 0
        %3690 = vperm.xlu0 %3689, %v3552
        %v3691 = vpop.permute.xlu0 %3690
        %3694 = vset.pattern.permute.xlu0 0
        %3695 = vperm.xlu0 %3694, %v3553
        %v3696 = vpop.permute.xlu0 %3695
        %3699 = vset.pattern.permute.xlu0 0
        %3700 = vperm.xlu0 %3699, %v3554
        %v3701 = vpop.permute.xlu0 %3700
        %3704 = vset.pattern.permute.xlu0 0
        %3705 = vperm.xlu0 %3704, %v3555
        %v3706 = vpop.permute.xlu0 %3705
        %3709 = vset.pattern.permute.xlu0 0
        %3710 = vperm.xlu0 %3709, %v3556
        %v3711 = vpop.permute.xlu0 %3710
        %3714 = vset.pattern.permute.xlu0 0
        %3715 = vperm.xlu0 %3714, %v3557
        %v3716 = vpop.permute.xlu0 %3715
        %v3750 = vunpack.c.l.b16 %v3493
        %v3751 = vunpack.c.h.b16 %v3493
        %v3752 = vunpack.c.l.b16 %v3494
        %v3753 = vunpack.c.h.b16 %v3494
        %v3754 = vunpack.c.l.b16 %v3495
        %v3755 = vunpack.c.h.b16 %v3495
        %v3756 = vunpack.c.l.b16 %v3496
        %v3757 = vunpack.c.h.b16 %v3496
        %v3758 = vunpack.c.l.b16 %v3497
        %v3759 = vunpack.c.h.b16 %v3497
        %v3760 = vunpack.c.l.b16 %v3498
        %v3761 = vunpack.c.h.b16 %v3498
        %v3762 = vunpack.c.l.b16 %v3499
        %v3763 = vunpack.c.h.b16 %v3499
        %v3764 = vunpack.c.l.b16 %v3500
        %v3765 = vunpack.c.h.b16 %v3500
        %v3766 = vunpack.c.l.b16 %v3501
        %v3767 = vunpack.c.h.b16 %v3501
        %v3768 = vunpack.c.l.b16 %v3502
        %v3769 = vunpack.c.h.b16 %v3502
        %v3770 = vunpack.c.l.b16 %v3503
        %v3771 = vunpack.c.h.b16 %v3503
        %v3772 = vunpack.c.l.b16 %v3504
        %v3773 = vunpack.c.h.b16 %v3504
        %v3774 = vunpack.c.l.b16 %v3505
        %v3775 = vunpack.c.h.b16 %v3505
        %v3776 = vunpack.c.l.b16 %v3506
        %v3777 = vunpack.c.h.b16 %v3506
        %v3778 = vunpack.c.l.b16 %v3507
        %v3779 = vunpack.c.h.b16 %v3507
        %v3780 = vunpack.c.l.b16 %v3508
        %v3781 = vunpack.c.h.b16 %v3508
        %v3782 = vunpack.c.l.b16 %v3509
        %v3783 = vunpack.c.h.b16 %v3509
        %v3784 = vunpack.c.l.b16 %v3510
        %v3785 = vunpack.c.h.b16 %v3510
        %v3786 = vunpack.c.l.b16 %v3511
        %v3787 = vunpack.c.h.b16 %v3511
        %v3788 = vunpack.c.l.b16 %v3512
        %v3789 = vunpack.c.h.b16 %v3512
        %v3790 = vunpack.c.l.b16 %v3513
        %v3791 = vunpack.c.h.b16 %v3513
        %v3792 = vunpack.c.l.b16 %v3514
        %v3793 = vunpack.c.h.b16 %v3514
        %v3794 = vunpack.c.l.b16 %v3515
        %v3795 = vunpack.c.h.b16 %v3515
        %v3796 = vunpack.c.l.b16 %v3516
        %v3797 = vunpack.c.h.b16 %v3516
        %v3798 = vunpack.c.l.b16 %v3517
        %v3799 = vunpack.c.h.b16 %v3517
        %v3800 = vunpack.c.l.b16 %v3518
        %v3801 = vunpack.c.h.b16 %v3518
        %v3802 = vunpack.c.l.b16 %v3519
        %v3803 = vunpack.c.h.b16 %v3519
        %v3804 = vunpack.c.l.b16 %v3520
        %v3805 = vunpack.c.h.b16 %v3520
        %v3806 = vunpack.c.l.b16 %v3521
        %v3807 = vunpack.c.h.b16 %v3521
        %v3808 = vunpack.c.l.b16 %v3522
        %v3809 = vunpack.c.h.b16 %v3522
        %v3810 = vunpack.c.l.b16 %v3523
        %v3811 = vunpack.c.h.b16 %v3523
        %v3812 = vunpack.c.l.b16 %v3524
        %v3813 = vunpack.c.h.b16 %v3524
        %v3814 = vpack.c.b16 %v3752, %v3750
        %v3815 = vpack.c.b16 %v3753, %v3751
        %v3816 = vpack.c.b16 %v3756, %v3754
        %v3817 = vpack.c.b16 %v3757, %v3755
        %v3818 = vpack.c.b16 %v3760, %v3758
        %v3819 = vpack.c.b16 %v3761, %v3759
        %v3820 = vpack.c.b16 %v3764, %v3762
        %v3821 = vpack.c.b16 %v3765, %v3763
        %v3822 = vpack.c.b16 %v3768, %v3766
        %v3823 = vpack.c.b16 %v3769, %v3767
        %v3824 = vpack.c.b16 %v3772, %v3770
        %v3825 = vpack.c.b16 %v3773, %v3771
        %v3826 = vpack.c.b16 %v3776, %v3774
        %v3827 = vpack.c.b16 %v3777, %v3775
        %v3828 = vpack.c.b16 %v3780, %v3778
        %v3829 = vpack.c.b16 %v3781, %v3779
        %v3830 = vpack.c.b16 %v3784, %v3782
        %v3831 = vpack.c.b16 %v3785, %v3783
        %v3832 = vpack.c.b16 %v3788, %v3786
        %v3833 = vpack.c.b16 %v3789, %v3787
        %v3834 = vpack.c.b16 %v3792, %v3790
        %v3835 = vpack.c.b16 %v3793, %v3791
        %v3836 = vpack.c.b16 %v3796, %v3794
        %v3837 = vpack.c.b16 %v3797, %v3795
        %v3838 = vpack.c.b16 %v3800, %v3798
        %v3839 = vpack.c.b16 %v3801, %v3799
        %v3840 = vpack.c.b16 %v3804, %v3802
        %v3841 = vpack.c.b16 %v3805, %v3803
        %v3842 = vpack.c.b16 %v3808, %v3806
        %v3843 = vpack.c.b16 %v3809, %v3807
        %v3844 = vpack.c.b16 %v3812, %v3810
        %v3845 = vpack.c.b16 %v3813, %v3811
        %3878 = vmatprep.subr.bf16.mxu0 0
        %3879 = vmatpush1.bf16.msra.mxu0 %v3483
        %3880 = vmatprep.subr.bf16.mxu0 0
        %3881 = vmatpush1.bf16.msra.mxu0 %v3482
        %3882 = vmatprep.subr.bf16.mxu0 0
        %3883 = vmatpush1.bf16.msra.mxu0 %v3481
        %3884 = vmatprep.subr.bf16.mxu0 0
        %3885 = vmatpush1.bf16.msra.mxu0 %v3480
        %3886 = vmatprep.subr.bf16.mxu0 0
        %3887 = vmatpush1.bf16.msra.mxu0 %v3479
        %3888 = vmatprep.subr.bf16.mxu0 0
        %3889 = vmatpush1.bf16.msra.mxu0 %v3478
        %3890 = vmatprep.subr.bf16.mxu0 0
        %3891 = vmatpush1.bf16.msra.mxu0 %v3477
        %3892 = vmatprep.subr.bf16.mxu0 0
        %3893 = vmatpush1.bf16.msra.mxu0 %v3476
        %3894 = vmatprep.subr.bf16.mxu0 0
        %3895 = vmatpush2.bf16.msra.mxu0 %v3491
        %3896 = vmatprep.subr.bf16.mxu0 0
        %3897 = vmatpush2.bf16.msra.mxu0 %v3490
        %3898 = vmatprep.subr.bf16.mxu0 0
        %3899 = vmatpush2.bf16.msra.mxu0 %v3489
        %3900 = vmatprep.subr.bf16.mxu0 0
        %3901 = vmatpush2.bf16.msra.mxu0 %v3488
        %3902 = vmatprep.subr.bf16.mxu0 0
        %3903 = vmatpush2.bf16.msra.mxu0 %v3487
        %3904 = vmatprep.subr.bf16.mxu0 0
        %3905 = vmatpush2.bf16.msra.mxu0 %v3486
        %3906 = vmatprep.subr.bf16.mxu0 0
        %3907 = vmatpush2.bf16.msra.mxu0 %v3485
        %3908 = vmatprep.subr.bf16.mxu0 0
        %3909 = vmatpush2.bf16.msra.mxu0 %v3484
        %3910 = vmatprep.mubr.bf16.mxu0 %v3815
        %3911 = vmatmul.mubr.bf16.gmra.mxu0 %v3814
        %v3912 = vpop.f32.mrf.mxu0
        %v3913 = vadd.f32 %v3561, %v3912
        %v3914 = vpop.f32.mrf.mxu0
        %v3915 = vpop.f32.mrf.mxu0
        %v3916 = vadd.f32 %v3566, %v3915
        %v3917 = vpop.f32.mrf.mxu0
        %3918 = vmatprep.mubr.bf16.mxu0 %v3817
        %3919 = vmatmul.mubr.bf16.gmra.mxu0 %v3816
        %v3920 = vpop.f32.mrf.mxu0
        %v3921 = vadd.f32 %v3571, %v3920
        %v3922 = vpop.f32.mrf.mxu0
        %v3923 = vpop.f32.mrf.mxu0
        %v3924 = vadd.f32 %v3576, %v3923
        %v3925 = vpop.f32.mrf.mxu0
        %3926 = vmatprep.mubr.bf16.mxu0 %v3819
        %3927 = vmatmul.mubr.bf16.gmra.mxu0 %v3818
        %v3928 = vpop.f32.mrf.mxu0
        %v3929 = vadd.f32 %v3581, %v3928
        %v3930 = vpop.f32.mrf.mxu0
        %v3931 = vpop.f32.mrf.mxu0
        %v3932 = vadd.f32 %v3586, %v3931
        %v3933 = vpop.f32.mrf.mxu0
        %3934 = vmatprep.mubr.bf16.mxu0 %v3821
        %3935 = vmatmul.mubr.bf16.gmra.mxu0 %v3820
        %v3936 = vpop.f32.mrf.mxu0
        %v3937 = vadd.f32 %v3591, %v3936
        %v3938 = vpop.f32.mrf.mxu0
        %v3939 = vpop.f32.mrf.mxu0
        %v3940 = vadd.f32 %v3596, %v3939
        %v3941 = vpop.f32.mrf.mxu0
        %3942 = vmatprep.mubr.bf16.mxu0 %v3823
        %3943 = vmatmul.mubr.bf16.gmra.mxu0 %v3822
        %v3944 = vpop.f32.mrf.mxu0
        %v3945 = vadd.f32 %v3601, %v3944
        %v3946 = vpop.f32.mrf.mxu0
        %v3947 = vpop.f32.mrf.mxu0
        %v3948 = vadd.f32 %v3606, %v3947
        %v3949 = vpop.f32.mrf.mxu0
        %3950 = vmatprep.mubr.bf16.mxu0 %v3825
        %3951 = vmatmul.mubr.bf16.gmra.mxu0 %v3824
        %v3952 = vpop.f32.mrf.mxu0
        %v3953 = vadd.f32 %v3611, %v3952
        %v3954 = vpop.f32.mrf.mxu0
        %v3955 = vpop.f32.mrf.mxu0
        %v3956 = vadd.f32 %v3616, %v3955
        %v3957 = vpop.f32.mrf.mxu0
        %3958 = vmatprep.mubr.bf16.mxu0 %v3827
        %3959 = vmatmul.mubr.bf16.gmra.mxu0 %v3826
        %v3960 = vpop.f32.mrf.mxu0
        %v3961 = vadd.f32 %v3621, %v3960
        %v3962 = vpop.f32.mrf.mxu0
        %v3963 = vpop.f32.mrf.mxu0
        %v3964 = vadd.f32 %v3626, %v3963
        %v3965 = vpop.f32.mrf.mxu0
        %3966 = vmatprep.mubr.bf16.mxu0 %v3829
        %3967 = vmatmul.mubr.bf16.gmra.mxu0 %v3828
        %v3968 = vpop.f32.mrf.mxu0
        %v3969 = vadd.f32 %v3631, %v3968
        %v3970 = vpop.f32.mrf.mxu0
        %v3971 = vpop.f32.mrf.mxu0
        %v3972 = vadd.f32 %v3636, %v3971
        %v3973 = vpop.f32.mrf.mxu0
        %3974 = vmatprep.mubr.bf16.mxu0 %v3831
        %3975 = vmatmul.mubr.bf16.gmra.mxu0 %v3830
        %v3976 = vpop.f32.mrf.mxu0
        %v3977 = vadd.f32 %v3641, %v3976
        %v3978 = vpop.f32.mrf.mxu0
        %v3979 = vpop.f32.mrf.mxu0
        %v3980 = vadd.f32 %v3646, %v3979
        %v3981 = vpop.f32.mrf.mxu0
        %3982 = vmatprep.mubr.bf16.mxu0 %v3833
        %3983 = vmatmul.mubr.bf16.gmra.mxu0 %v3832
        %v3984 = vpop.f32.mrf.mxu0
        %v3985 = vadd.f32 %v3651, %v3984
        %v3986 = vpop.f32.mrf.mxu0
        %v3987 = vpop.f32.mrf.mxu0
        %v3988 = vadd.f32 %v3656, %v3987
        %v3989 = vpop.f32.mrf.mxu0
        %3990 = vmatprep.mubr.bf16.mxu0 %v3835
        %3991 = vmatmul.mubr.bf16.gmra.mxu0 %v3834
        %v3992 = vpop.f32.mrf.mxu0
        %v3993 = vadd.f32 %v3661, %v3992
        %v3994 = vpop.f32.mrf.mxu0
        %v3995 = vpop.f32.mrf.mxu0
        %v3996 = vadd.f32 %v3666, %v3995
        %v3997 = vpop.f32.mrf.mxu0
        %3998 = vmatprep.mubr.bf16.mxu0 %v3837
        %3999 = vmatmul.mubr.bf16.gmra.mxu0 %v3836
        %v4000 = vpop.f32.mrf.mxu0
        %v4001 = vadd.f32 %v3671, %v4000
        %v4002 = vpop.f32.mrf.mxu0
        %v4003 = vpop.f32.mrf.mxu0
        %v4004 = vadd.f32 %v3676, %v4003
        %v4005 = vpop.f32.mrf.mxu0
        %4006 = vmatprep.mubr.bf16.mxu0 %v3839
        %4007 = vmatmul.mubr.bf16.gmra.mxu0 %v3838
        %v4008 = vpop.f32.mrf.mxu0
        %v4009 = vadd.f32 %v3681, %v4008
        %v4010 = vpop.f32.mrf.mxu0
        %v4011 = vpop.f32.mrf.mxu0
        %v4012 = vadd.f32 %v3686, %v4011
        %v4013 = vpop.f32.mrf.mxu0
        %4014 = vmatprep.mubr.bf16.mxu0 %v3841
        %4015 = vmatmul.mubr.bf16.gmra.mxu0 %v3840
        %v4016 = vpop.f32.mrf.mxu0
        %v4017 = vadd.f32 %v3691, %v4016
        %v4018 = vpop.f32.mrf.mxu0
        %v4019 = vpop.f32.mrf.mxu0
        %v4020 = vadd.f32 %v3696, %v4019
        %v4021 = vpop.f32.mrf.mxu0
        %4022 = vmatprep.mubr.bf16.mxu0 %v3843
        %4023 = vmatmul.mubr.bf16.gmra.mxu0 %v3842
        %v4024 = vpop.f32.mrf.mxu0
        %v4025 = vadd.f32 %v3701, %v4024
        %v4026 = vpop.f32.mrf.mxu0
        %v4027 = vpop.f32.mrf.mxu0
        %v4028 = vadd.f32 %v3706, %v4027
        %v4029 = vpop.f32.mrf.mxu0
        %4030 = vmatprep.mubr.bf16.mxu0 %v3845
        %4031 = vmatmul.mubr.bf16.gmra.mxu0 %v3844
        %v4032 = vpop.f32.mrf.mxu0
        %v4033 = vadd.f32 %v3711, %v4032
        %v4034 = vpop.f32.mrf.mxu0
        %v4035 = vpop.f32.mrf.mxu0
        %v4036 = vadd.f32 %v3716, %v4035
        %v4037 = vpop.f32.mrf.mxu0
        %4038 = vdwg.mxu0
        %v4039 = vmax.f32 %v3913, 0.0
        %v4040 = vmax.f32 %v3916, 0.0
        %v4041 = vmax.f32 %v3921, 0.0
        %v4042 = vmax.f32 %v3924, 0.0
        %v4043 = vmax.f32 %v3929, 0.0
        %v4044 = vmax.f32 %v3932, 0.0
        %v4045 = vmax.f32 %v3937, 0.0
        %v4046 = vmax.f32 %v3940, 0.0
        %v4047 = vmax.f32 %v3945, 0.0
        %v4048 = vmax.f32 %v3948, 0.0
        %v4049 = vmax.f32 %v3953, 0.0
        %v4050 = vmax.f32 %v3956, 0.0
        %v4051 = vmax.f32 %v3961, 0.0
        %v4052 = vmax.f32 %v3964, 0.0
        %v4053 = vmax.f32 %v3969, 0.0
        %v4054 = vmax.f32 %v3972, 0.0
        %v4055 = vmax.f32 %v3977, 0.0
        %v4056 = vmax.f32 %v3980, 0.0
        %v4057 = vmax.f32 %v3985, 0.0
        %v4058 = vmax.f32 %v3988, 0.0
        %v4059 = vmax.f32 %v3993, 0.0
        %v4060 = vmax.f32 %v3996, 0.0
        %v4061 = vmax.f32 %v4001, 0.0
        %v4062 = vmax.f32 %v4004, 0.0
        %v4063 = vmax.f32 %v4009, 0.0
        %v4064 = vmax.f32 %v4012, 0.0
        %v4065 = vmax.f32 %v4017, 0.0
        %v4066 = vmax.f32 %v4020, 0.0
        %v4067 = vmax.f32 %v4025, 0.0
        %v4068 = vmax.f32 %v4028, 0.0
        %v4069 = vmax.f32 %v4033, 0.0
        %v4070 = vmax.f32 %v4036, 0.0
        %v4071 = vpack.c.bf16 %v4040, %v4039
        %v4072 = vpack.c.bf16 %v4042, %v4041
        %v4073 = vpack.c.bf16 %v4044, %v4043
        %v4074 = vpack.c.bf16 %v4046, %v4045
        %v4075 = vpack.c.bf16 %v4048, %v4047
        %v4076 = vpack.c.bf16 %v4050, %v4049
        %v4077 = vpack.c.bf16 %v4052, %v4051
        %v4078 = vpack.c.bf16 %v4054, %v4053
        %v4079 = vpack.c.bf16 %v4056, %v4055
        %v4080 = vpack.c.bf16 %v4058, %v4057
        %v4081 = vpack.c.bf16 %v4060, %v4059
        %v4082 = vpack.c.bf16 %v4062, %v4061
        %v4083 = vpack.c.bf16 %v4064, %v4063
        %v4084 = vpack.c.bf16 %v4066, %v4065
        %v4085 = vpack.c.bf16 %v4068, %v4067
        %v4086 = vpack.c.bf16 %v4070, %v4069
        %s4087 = scalar_lea.vmem %s1, 1536
        %v4088 = vld [vmem:[%s4087] sm:$0xff]
        %v4089 = vld [vmem:[%s4087 + $0x8] sm:$0xff]
        %v4090 = vld [vmem:[%s4087 + $0x10] sm:$0xff]
        %v4091 = vld [vmem:[%s4087 + $0x18] sm:$0xff]
        %v4092 = vld [vmem:[%s4087 + $0x20] sm:$0xff]
        %v4093 = vld [vmem:[%s4087 + $0x28] sm:$0xff]
        %v4094 = vld [vmem:[%s4087 + $0x30] sm:$0xff]
        %v4095 = vld [vmem:[%s4087 + $0x38] sm:$0xff]
        %v4096 = vld [vmem:[%s4087 + $0x40] sm:$0xff]
        %v4097 = vld [vmem:[%s4087 + $0x48] sm:$0xff]
        %v4098 = vld [vmem:[%s4087 + $0x50] sm:$0xff]
        %v4099 = vld [vmem:[%s4087 + $0x58] sm:$0xff]
        %v4100 = vld [vmem:[%s4087 + $0x60] sm:$0xff]
        %v4101 = vld [vmem:[%s4087 + $0x68] sm:$0xff]
        %v4102 = vld [vmem:[%s4087 + $0x70] sm:$0xff]
        %v4103 = vld [vmem:[%s4087 + $0x78] sm:$0xff]
        %v4104 = vld [vmem:[%s4087 + $0x80] sm:$0xff]
        %v4105 = vld [vmem:[%s4087 + $0x88] sm:$0xff]
        %v4106 = vld [vmem:[%s4087 + $0x90] sm:$0xff]
        %v4107 = vld [vmem:[%s4087 + $0x98] sm:$0xff]
        %v4108 = vld [vmem:[%s4087 + $0xa0] sm:$0xff]
        %v4109 = vld [vmem:[%s4087 + $0xa8] sm:$0xff]
        %v4110 = vld [vmem:[%s4087 + $0xb0] sm:$0xff]
        %v4111 = vld [vmem:[%s4087 + $0xb8] sm:$0xff]
        %v4112 = vld [vmem:[%s4087 + $0xc0] sm:$0xff]
        %v4113 = vld [vmem:[%s4087 + $0xc8] sm:$0xff]
        %v4114 = vld [vmem:[%s4087 + $0xd0] sm:$0xff]
        %v4115 = vld [vmem:[%s4087 + $0xd8] sm:$0xff]
        %v4116 = vld [vmem:[%s4087 + $0xe0] sm:$0xff]
        %v4117 = vld [vmem:[%s4087 + $0xe8] sm:$0xff]
        %v4118 = vld [vmem:[%s4087 + $0xf0] sm:$0xff]
        %v4119 = vld [vmem:[%s4087 + $0xf8] sm:$0xff]
        %s4120 = scalar_lea.vmem %s2, 1536
        %v4121 = vld [vmem:[%s4120] sm:$0xff]
        %v4122 = vld [vmem:[%s4120 + $0x8] sm:$0xff]
        %v4123 = vld [vmem:[%s4120 + $0x10] sm:$0xff]
        %v4124 = vld [vmem:[%s4120 + $0x18] sm:$0xff]
        %v4125 = vld [vmem:[%s4120 + $0x20] sm:$0xff]
        %v4126 = vld [vmem:[%s4120 + $0x28] sm:$0xff]
        %v4127 = vld [vmem:[%s4120 + $0x30] sm:$0xff]
        %v4128 = vld [vmem:[%s4120 + $0x38] sm:$0xff]
        %v4129 = vld [vmem:[%s4120 + $0x40] sm:$0xff]
        %v4130 = vld [vmem:[%s4120 + $0x48] sm:$0xff]
        %v4131 = vld [vmem:[%s4120 + $0x50] sm:$0xff]
        %v4132 = vld [vmem:[%s4120 + $0x58] sm:$0xff]
        %v4133 = vld [vmem:[%s4120 + $0x60] sm:$0xff]
        %v4134 = vld [vmem:[%s4120 + $0x68] sm:$0xff]
        %v4135 = vld [vmem:[%s4120 + $0x70] sm:$0xff]
        %v4136 = vld [vmem:[%s4120 + $0x78] sm:$0xff]
        %v4137 = vld [vmem:[%s4120 + $0x80] sm:$0xff]
        %v4138 = vld [vmem:[%s4120 + $0x88] sm:$0xff]
        %v4139 = vld [vmem:[%s4120 + $0x90] sm:$0xff]
        %v4140 = vld [vmem:[%s4120 + $0x98] sm:$0xff]
        %v4141 = vld [vmem:[%s4120 + $0xa0] sm:$0xff]
        %v4142 = vld [vmem:[%s4120 + $0xa8] sm:$0xff]
        %v4143 = vld [vmem:[%s4120 + $0xb0] sm:$0xff]
        %v4144 = vld [vmem:[%s4120 + $0xb8] sm:$0xff]
        %v4145 = vld [vmem:[%s4120 + $0xc0] sm:$0xff]
        %v4146 = vld [vmem:[%s4120 + $0xc8] sm:$0xff]
        %v4147 = vld [vmem:[%s4120 + $0xd0] sm:$0xff]
        %v4148 = vld [vmem:[%s4120 + $0xd8] sm:$0xff]
        %v4149 = vld [vmem:[%s4120 + $0xe0] sm:$0xff]
        %v4150 = vld [vmem:[%s4120 + $0xe8] sm:$0xff]
        %v4151 = vld [vmem:[%s4120 + $0xf0] sm:$0xff]
        %v4152 = vld [vmem:[%s4120 + $0xf8] sm:$0xff]
        %4154 = vset.pattern.permute.xlu0 0
        %4155 = vperm.xlu0 %4154, %v4121
        %v4156 = vpop.permute.xlu0 %4155
        %4159 = vset.pattern.permute.xlu0 0
        %4160 = vperm.xlu0 %4159, %v4122
        %v4161 = vpop.permute.xlu0 %4160
        %4164 = vset.pattern.permute.xlu0 0
        %4165 = vperm.xlu0 %4164, %v4123
        %v4166 = vpop.permute.xlu0 %4165
        %4169 = vset.pattern.permute.xlu0 0
        %4170 = vperm.xlu0 %4169, %v4124
        %v4171 = vpop.permute.xlu0 %4170
        %4174 = vset.pattern.permute.xlu0 0
        %4175 = vperm.xlu0 %4174, %v4125
        %v4176 = vpop.permute.xlu0 %4175
        %4179 = vset.pattern.permute.xlu0 0
        %4180 = vperm.xlu0 %4179, %v4126
        %v4181 = vpop.permute.xlu0 %4180
        %4184 = vset.pattern.permute.xlu0 0
        %4185 = vperm.xlu0 %4184, %v4127
        %v4186 = vpop.permute.xlu0 %4185
        %4189 = vset.pattern.permute.xlu0 0
        %4190 = vperm.xlu0 %4189, %v4128
        %v4191 = vpop.permute.xlu0 %4190
        %4194 = vset.pattern.permute.xlu0 0
        %4195 = vperm.xlu0 %4194, %v4129
        %v4196 = vpop.permute.xlu0 %4195
        %4199 = vset.pattern.permute.xlu0 0
        %4200 = vperm.xlu0 %4199, %v4130
        %v4201 = vpop.permute.xlu0 %4200
        %4204 = vset.pattern.permute.xlu0 0
        %4205 = vperm.xlu0 %4204, %v4131
        %v4206 = vpop.permute.xlu0 %4205
        %4209 = vset.pattern.permute.xlu0 0
        %4210 = vperm.xlu0 %4209, %v4132
        %v4211 = vpop.permute.xlu0 %4210
        %4214 = vset.pattern.permute.xlu0 0
        %4215 = vperm.xlu0 %4214, %v4133
        %v4216 = vpop.permute.xlu0 %4215
        %4219 = vset.pattern.permute.xlu0 0
        %4220 = vperm.xlu0 %4219, %v4134
        %v4221 = vpop.permute.xlu0 %4220
        %4224 = vset.pattern.permute.xlu0 0
        %4225 = vperm.xlu0 %4224, %v4135
        %v4226 = vpop.permute.xlu0 %4225
        %4229 = vset.pattern.permute.xlu0 0
        %4230 = vperm.xlu0 %4229, %v4136
        %v4231 = vpop.permute.xlu0 %4230
        %4234 = vset.pattern.permute.xlu0 0
        %4235 = vperm.xlu0 %4234, %v4137
        %v4236 = vpop.permute.xlu0 %4235
        %4239 = vset.pattern.permute.xlu0 0
        %4240 = vperm.xlu0 %4239, %v4138
        %v4241 = vpop.permute.xlu0 %4240
        %4244 = vset.pattern.permute.xlu0 0
        %4245 = vperm.xlu0 %4244, %v4139
        %v4246 = vpop.permute.xlu0 %4245
        %4249 = vset.pattern.permute.xlu0 0
        %4250 = vperm.xlu0 %4249, %v4140
        %v4251 = vpop.permute.xlu0 %4250
        %4254 = vset.pattern.permute.xlu0 0
        %4255 = vperm.xlu0 %4254, %v4141
        %v4256 = vpop.permute.xlu0 %4255
        %4259 = vset.pattern.permute.xlu0 0
        %4260 = vperm.xlu0 %4259, %v4142
        %v4261 = vpop.permute.xlu0 %4260
        %4264 = vset.pattern.permute.xlu0 0
        %4265 = vperm.xlu0 %4264, %v4143
        %v4266 = vpop.permute.xlu0 %4265
        %4269 = vset.pattern.permute.xlu0 0
        %4270 = vperm.xlu0 %4269, %v4144
        %v4271 = vpop.permute.xlu0 %4270
        %4274 = vset.pattern.permute.xlu0 0
        %4275 = vperm.xlu0 %4274, %v4145
        %v4276 = vpop.permute.xlu0 %4275
        %4279 = vset.pattern.permute.xlu0 0
        %4280 = vperm.xlu0 %4279, %v4146
        %v4281 = vpop.permute.xlu0 %4280
        %4284 = vset.pattern.permute.xlu0 0
        %4285 = vperm.xlu0 %4284, %v4147
        %v4286 = vpop.permute.xlu0 %4285
        %4289 = vset.pattern.permute.xlu0 0
        %4290 = vperm.xlu0 %4289, %v4148
        %v4291 = vpop.permute.xlu0 %4290
        %4294 = vset.pattern.permute.xlu0 0
        %4295 = vperm.xlu0 %4294, %v4149
        %v4296 = vpop.permute.xlu0 %4295
        %4299 = vset.pattern.permute.xlu0 0
        %4300 = vperm.xlu0 %4299, %v4150
        %v4301 = vpop.permute.xlu0 %4300
        %4304 = vset.pattern.permute.xlu0 0
        %4305 = vperm.xlu0 %4304, %v4151
        %v4306 = vpop.permute.xlu0 %4305
        %4309 = vset.pattern.permute.xlu0 0
        %4310 = vperm.xlu0 %4309, %v4152
        %v4311 = vpop.permute.xlu0 %4310
        %v4345 = vunpack.c.l.b16 %v4088
        %v4346 = vunpack.c.h.b16 %v4088
        %v4347 = vunpack.c.l.b16 %v4089
        %v4348 = vunpack.c.h.b16 %v4089
        %v4349 = vunpack.c.l.b16 %v4090
        %v4350 = vunpack.c.h.b16 %v4090
        %v4351 = vunpack.c.l.b16 %v4091
        %v4352 = vunpack.c.h.b16 %v4091
        %v4353 = vunpack.c.l.b16 %v4092
        %v4354 = vunpack.c.h.b16 %v4092
        %v4355 = vunpack.c.l.b16 %v4093
        %v4356 = vunpack.c.h.b16 %v4093
        %v4357 = vunpack.c.l.b16 %v4094
        %v4358 = vunpack.c.h.b16 %v4094
        %v4359 = vunpack.c.l.b16 %v4095
        %v4360 = vunpack.c.h.b16 %v4095
        %v4361 = vunpack.c.l.b16 %v4096
        %v4362 = vunpack.c.h.b16 %v4096
        %v4363 = vunpack.c.l.b16 %v4097
        %v4364 = vunpack.c.h.b16 %v4097
        %v4365 = vunpack.c.l.b16 %v4098
        %v4366 = vunpack.c.h.b16 %v4098
        %v4367 = vunpack.c.l.b16 %v4099
        %v4368 = vunpack.c.h.b16 %v4099
        %v4369 = vunpack.c.l.b16 %v4100
        %v4370 = vunpack.c.h.b16 %v4100
        %v4371 = vunpack.c.l.b16 %v4101
        %v4372 = vunpack.c.h.b16 %v4101
        %v4373 = vunpack.c.l.b16 %v4102
        %v4374 = vunpack.c.h.b16 %v4102
        %v4375 = vunpack.c.l.b16 %v4103
        %v4376 = vunpack.c.h.b16 %v4103
        %v4377 = vunpack.c.l.b16 %v4104
        %v4378 = vunpack.c.h.b16 %v4104
        %v4379 = vunpack.c.l.b16 %v4105
        %v4380 = vunpack.c.h.b16 %v4105
        %v4381 = vunpack.c.l.b16 %v4106
        %v4382 = vunpack.c.h.b16 %v4106
        %v4383 = vunpack.c.l.b16 %v4107
        %v4384 = vunpack.c.h.b16 %v4107
        %v4385 = vunpack.c.l.b16 %v4108
        %v4386 = vunpack.c.h.b16 %v4108
        %v4387 = vunpack.c.l.b16 %v4109
        %v4388 = vunpack.c.h.b16 %v4109
        %v4389 = vunpack.c.l.b16 %v4110
        %v4390 = vunpack.c.h.b16 %v4110
        %v4391 = vunpack.c.l.b16 %v4111
        %v4392 = vunpack.c.h.b16 %v4111
        %v4393 = vunpack.c.l.b16 %v4112
        %v4394 = vunpack.c.h.b16 %v4112
        %v4395 = vunpack.c.l.b16 %v4113
        %v4396 = vunpack.c.h.b16 %v4113
        %v4397 = vunpack.c.l.b16 %v4114
        %v4398 = vunpack.c.h.b16 %v4114
        %v4399 = vunpack.c.l.b16 %v4115
        %v4400 = vunpack.c.h.b16 %v4115
        %v4401 = vunpack.c.l.b16 %v4116
        %v4402 = vunpack.c.h.b16 %v4116
        %v4403 = vunpack.c.l.b16 %v4117
        %v4404 = vunpack.c.h.b16 %v4117
        %v4405 = vunpack.c.l.b16 %v4118
        %v4406 = vunpack.c.h.b16 %v4118
        %v4407 = vunpack.c.l.b16 %v4119
        %v4408 = vunpack.c.h.b16 %v4119
        %v4409 = vpack.c.b16 %v4347, %v4345
        %v4410 = vpack.c.b16 %v4348, %v4346
        %v4411 = vpack.c.b16 %v4351, %v4349
        %v4412 = vpack.c.b16 %v4352, %v4350
        %v4413 = vpack.c.b16 %v4355, %v4353
        %v4414 = vpack.c.b16 %v4356, %v4354
        %v4415 = vpack.c.b16 %v4359, %v4357
        %v4416 = vpack.c.b16 %v4360, %v4358
        %v4417 = vpack.c.b16 %v4363, %v4361
        %v4418 = vpack.c.b16 %v4364, %v4362
        %v4419 = vpack.c.b16 %v4367, %v4365
        %v4420 = vpack.c.b16 %v4368, %v4366
        %v4421 = vpack.c.b16 %v4371, %v4369
        %v4422 = vpack.c.b16 %v4372, %v4370
        %v4423 = vpack.c.b16 %v4375, %v4373
        %v4424 = vpack.c.b16 %v4376, %v4374
        %v4425 = vpack.c.b16 %v4379, %v4377
        %v4426 = vpack.c.b16 %v4380, %v4378
        %v4427 = vpack.c.b16 %v4383, %v4381
        %v4428 = vpack.c.b16 %v4384, %v4382
        %v4429 = vpack.c.b16 %v4387, %v4385
        %v4430 = vpack.c.b16 %v4388, %v4386
        %v4431 = vpack.c.b16 %v4391, %v4389
        %v4432 = vpack.c.b16 %v4392, %v4390
        %v4433 = vpack.c.b16 %v4395, %v4393
        %v4434 = vpack.c.b16 %v4396, %v4394
        %v4435 = vpack.c.b16 %v4399, %v4397
        %v4436 = vpack.c.b16 %v4400, %v4398
        %v4437 = vpack.c.b16 %v4403, %v4401
        %v4438 = vpack.c.b16 %v4404, %v4402
        %v4439 = vpack.c.b16 %v4407, %v4405
        %v4440 = vpack.c.b16 %v4408, %v4406
        %4473 = vmatprep.subr.bf16.mxu0 0
        %4474 = vmatpush1.bf16.msra.mxu0 %v4078
        %4475 = vmatprep.subr.bf16.mxu0 0
        %4476 = vmatpush1.bf16.msra.mxu0 %v4077
        %4477 = vmatprep.subr.bf16.mxu0 0
        %4478 = vmatpush1.bf16.msra.mxu0 %v4076
        %4479 = vmatprep.subr.bf16.mxu0 0
        %4480 = vmatpush1.bf16.msra.mxu0 %v4075
        %4481 = vmatprep.subr.bf16.mxu0 0
        %4482 = vmatpush1.bf16.msra.mxu0 %v4074
        %4483 = vmatprep.subr.bf16.mxu0 0
        %4484 = vmatpush1.bf16.msra.mxu0 %v4073
        %4485 = vmatprep.subr.bf16.mxu0 0
        %4486 = vmatpush1.bf16.msra.mxu0 %v4072
        %4487 = vmatprep.subr.bf16.mxu0 0
        %4488 = vmatpush1.bf16.msra.mxu0 %v4071
        %4489 = vmatprep.subr.bf16.mxu0 0
        %4490 = vmatpush2.bf16.msra.mxu0 %v4086
        %4491 = vmatprep.subr.bf16.mxu0 0
        %4492 = vmatpush2.bf16.msra.mxu0 %v4085
        %4493 = vmatprep.subr.bf16.mxu0 0
        %4494 = vmatpush2.bf16.msra.mxu0 %v4084
        %4495 = vmatprep.subr.bf16.mxu0 0
        %4496 = vmatpush2.bf16.msra.mxu0 %v4083
        %4497 = vmatprep.subr.bf16.mxu0 0
        %4498 = vmatpush2.bf16.msra.mxu0 %v4082
        %4499 = vmatprep.subr.bf16.mxu0 0
        %4500 = vmatpush2.bf16.msra.mxu0 %v4081
        %4501 = vmatprep.subr.bf16.mxu0 0
        %4502 = vmatpush2.bf16.msra.mxu0 %v4080
        %4503 = vmatprep.subr.bf16.mxu0 0
        %4504 = vmatpush2.bf16.msra.mxu0 %v4079
        %4505 = vmatprep.mubr.bf16.mxu0 %v4410
        %4506 = vmatmul.mubr.bf16.gmra.mxu0 %v4409
        %v4507 = vpop.f32.mrf.mxu0
        %v4508 = vadd.f32 %v4156, %v4507
        %v4509 = vpop.f32.mrf.mxu0
        %v4510 = vpop.f32.mrf.mxu0
        %v4511 = vadd.f32 %v4161, %v4510
        %v4512 = vpop.f32.mrf.mxu0
        %4513 = vmatprep.mubr.bf16.mxu0 %v4412
        %4514 = vmatmul.mubr.bf16.gmra.mxu0 %v4411
        %v4515 = vpop.f32.mrf.mxu0
        %v4516 = vadd.f32 %v4166, %v4515
        %v4517 = vpop.f32.mrf.mxu0
        %v4518 = vpop.f32.mrf.mxu0
        %v4519 = vadd.f32 %v4171, %v4518
        %v4520 = vpop.f32.mrf.mxu0
        %4521 = vmatprep.mubr.bf16.mxu0 %v4414
        %4522 = vmatmul.mubr.bf16.gmra.mxu0 %v4413
        %v4523 = vpop.f32.mrf.mxu0
        %v4524 = vadd.f32 %v4176, %v4523
        %v4525 = vpop.f32.mrf.mxu0
        %v4526 = vpop.f32.mrf.mxu0
        %v4527 = vadd.f32 %v4181, %v4526
        %v4528 = vpop.f32.mrf.mxu0
        %4529 = vmatprep.mubr.bf16.mxu0 %v4416
        %4530 = vmatmul.mubr.bf16.gmra.mxu0 %v4415
        %v4531 = vpop.f32.mrf.mxu0
        %v4532 = vadd.f32 %v4186, %v4531
        %v4533 = vpop.f32.mrf.mxu0
        %v4534 = vpop.f32.mrf.mxu0
        %v4535 = vadd.f32 %v4191, %v4534
        %v4536 = vpop.f32.mrf.mxu0
        %4537 = vmatprep.mubr.bf16.mxu0 %v4418
        %4538 = vmatmul.mubr.bf16.gmra.mxu0 %v4417
        %v4539 = vpop.f32.mrf.mxu0
        %v4540 = vadd.f32 %v4196, %v4539
        %v4541 = vpop.f32.mrf.mxu0
        %v4542 = vpop.f32.mrf.mxu0
        %v4543 = vadd.f32 %v4201, %v4542
        %v4544 = vpop.f32.mrf.mxu0
        %4545 = vmatprep.mubr.bf16.mxu0 %v4420
        %4546 = vmatmul.mubr.bf16.gmra.mxu0 %v4419
        %v4547 = vpop.f32.mrf.mxu0
        %v4548 = vadd.f32 %v4206, %v4547
        %v4549 = vpop.f32.mrf.mxu0
        %v4550 = vpop.f32.mrf.mxu0
        %v4551 = vadd.f32 %v4211, %v4550
        %v4552 = vpop.f32.mrf.mxu0
        %4553 = vmatprep.mubr.bf16.mxu0 %v4422
        %4554 = vmatmul.mubr.bf16.gmra.mxu0 %v4421
        %v4555 = vpop.f32.mrf.mxu0
        %v4556 = vadd.f32 %v4216, %v4555
        %v4557 = vpop.f32.mrf.mxu0
        %v4558 = vpop.f32.mrf.mxu0
        %v4559 = vadd.f32 %v4221, %v4558
        %v4560 = vpop.f32.mrf.mxu0
        %4561 = vmatprep.mubr.bf16.mxu0 %v4424
        %4562 = vmatmul.mubr.bf16.gmra.mxu0 %v4423
        %v4563 = vpop.f32.mrf.mxu0
        %v4564 = vadd.f32 %v4226, %v4563
        %v4565 = vpop.f32.mrf.mxu0
        %v4566 = vpop.f32.mrf.mxu0
        %v4567 = vadd.f32 %v4231, %v4566
        %v4568 = vpop.f32.mrf.mxu0
        %4569 = vmatprep.mubr.bf16.mxu0 %v4426
        %4570 = vmatmul.mubr.bf16.gmra.mxu0 %v4425
        %v4571 = vpop.f32.mrf.mxu0
        %v4572 = vadd.f32 %v4236, %v4571
        %v4573 = vpop.f32.mrf.mxu0
        %v4574 = vpop.f32.mrf.mxu0
        %v4575 = vadd.f32 %v4241, %v4574
        %v4576 = vpop.f32.mrf.mxu0
        %4577 = vmatprep.mubr.bf16.mxu0 %v4428
        %4578 = vmatmul.mubr.bf16.gmra.mxu0 %v4427
        %v4579 = vpop.f32.mrf.mxu0
        %v4580 = vadd.f32 %v4246, %v4579
        %v4581 = vpop.f32.mrf.mxu0
        %v4582 = vpop.f32.mrf.mxu0
        %v4583 = vadd.f32 %v4251, %v4582
        %v4584 = vpop.f32.mrf.mxu0
        %4585 = vmatprep.mubr.bf16.mxu0 %v4430
        %4586 = vmatmul.mubr.bf16.gmra.mxu0 %v4429
        %v4587 = vpop.f32.mrf.mxu0
        %v4588 = vadd.f32 %v4256, %v4587
        %v4589 = vpop.f32.mrf.mxu0
        %v4590 = vpop.f32.mrf.mxu0
        %v4591 = vadd.f32 %v4261, %v4590
        %v4592 = vpop.f32.mrf.mxu0
        %4593 = vmatprep.mubr.bf16.mxu0 %v4432
        %4594 = vmatmul.mubr.bf16.gmra.mxu0 %v4431
        %v4595 = vpop.f32.mrf.mxu0
        %v4596 = vadd.f32 %v4266, %v4595
        %v4597 = vpop.f32.mrf.mxu0
        %v4598 = vpop.f32.mrf.mxu0
        %v4599 = vadd.f32 %v4271, %v4598
        %v4600 = vpop.f32.mrf.mxu0
        %4601 = vmatprep.mubr.bf16.mxu0 %v4434
        %4602 = vmatmul.mubr.bf16.gmra.mxu0 %v4433
        %v4603 = vpop.f32.mrf.mxu0
        %v4604 = vadd.f32 %v4276, %v4603
        %v4605 = vpop.f32.mrf.mxu0
        %v4606 = vpop.f32.mrf.mxu0
        %v4607 = vadd.f32 %v4281, %v4606
        %v4608 = vpop.f32.mrf.mxu0
        %4609 = vmatprep.mubr.bf16.mxu0 %v4436
        %4610 = vmatmul.mubr.bf16.gmra.mxu0 %v4435
        %v4611 = vpop.f32.mrf.mxu0
        %v4612 = vadd.f32 %v4286, %v4611
        %v4613 = vpop.f32.mrf.mxu0
        %v4614 = vpop.f32.mrf.mxu0
        %v4615 = vadd.f32 %v4291, %v4614
        %v4616 = vpop.f32.mrf.mxu0
        %4617 = vmatprep.mubr.bf16.mxu0 %v4438
        %4618 = vmatmul.mubr.bf16.gmra.mxu0 %v4437
        %v4619 = vpop.f32.mrf.mxu0
        %v4620 = vadd.f32 %v4296, %v4619
        %v4621 = vpop.f32.mrf.mxu0
        %v4622 = vpop.f32.mrf.mxu0
        %v4623 = vadd.f32 %v4301, %v4622
        %v4624 = vpop.f32.mrf.mxu0
        %4625 = vmatprep.mubr.bf16.mxu0 %v4440
        %4626 = vmatmul.mubr.bf16.gmra.mxu0 %v4439
        %v4627 = vpop.f32.mrf.mxu0
        %v4628 = vadd.f32 %v4306, %v4627
        %v4629 = vpop.f32.mrf.mxu0
        %v4630 = vpop.f32.mrf.mxu0
        %v4631 = vadd.f32 %v4311, %v4630
        %v4632 = vpop.f32.mrf.mxu0
        %4633 = vdwg.mxu0
        %v4634 = vmax.f32 %v4508, 0.0
        %v4635 = vmax.f32 %v4511, 0.0
        %v4636 = vmax.f32 %v4516, 0.0
        %v4637 = vmax.f32 %v4519, 0.0
        %v4638 = vmax.f32 %v4524, 0.0
        %v4639 = vmax.f32 %v4527, 0.0
        %v4640 = vmax.f32 %v4532, 0.0
        %v4641 = vmax.f32 %v4535, 0.0
        %v4642 = vmax.f32 %v4540, 0.0
        %v4643 = vmax.f32 %v4543, 0.0
        %v4644 = vmax.f32 %v4548, 0.0
        %v4645 = vmax.f32 %v4551, 0.0
        %v4646 = vmax.f32 %v4556, 0.0
        %v4647 = vmax.f32 %v4559, 0.0
        %v4648 = vmax.f32 %v4564, 0.0
        %v4649 = vmax.f32 %v4567, 0.0
        %v4650 = vmax.f32 %v4572, 0.0
        %v4651 = vmax.f32 %v4575, 0.0
        %v4652 = vmax.f32 %v4580, 0.0
        %v4653 = vmax.f32 %v4583, 0.0
        %v4654 = vmax.f32 %v4588, 0.0
        %v4655 = vmax.f32 %v4591, 0.0
        %v4656 = vmax.f32 %v4596, 0.0
        %v4657 = vmax.f32 %v4599, 0.0
        %v4658 = vmax.f32 %v4604, 0.0
        %v4659 = vmax.f32 %v4607, 0.0
        %v4660 = vmax.f32 %v4612, 0.0
        %v4661 = vmax.f32 %v4615, 0.0
        %v4662 = vmax.f32 %v4620, 0.0
        %v4663 = vmax.f32 %v4623, 0.0
        %v4664 = vmax.f32 %v4628, 0.0
        %v4665 = vmax.f32 %v4631, 0.0
        %v4666 = vpack.c.bf16 %v4635, %v4634
        %v4667 = vpack.c.bf16 %v4637, %v4636
        %v4668 = vpack.c.bf16 %v4639, %v4638
        %v4669 = vpack.c.bf16 %v4641, %v4640
        %v4670 = vpack.c.bf16 %v4643, %v4642
        %v4671 = vpack.c.bf16 %v4645, %v4644
        %v4672 = vpack.c.bf16 %v4647, %v4646
        %v4673 = vpack.c.bf16 %v4649, %v4648
        %v4674 = vpack.c.bf16 %v4651, %v4650
        %v4675 = vpack.c.bf16 %v4653, %v4652
        %v4676 = vpack.c.bf16 %v4655, %v4654
        %v4677 = vpack.c.bf16 %v4657, %v4656
        %v4678 = vpack.c.bf16 %v4659, %v4658
        %v4679 = vpack.c.bf16 %v4661, %v4660
        %v4680 = vpack.c.bf16 %v4663, %v4662
        %v4681 = vpack.c.bf16 %v4665, %v4664
        %s4682 = scalar_lea.vmem %s1, 1792
        %v4683 = vld [vmem:[%s4682] sm:$0xff]
        %v4684 = vld [vmem:[%s4682 + $0x8] sm:$0xff]
        %v4685 = vld [vmem:[%s4682 + $0x10] sm:$0xff]
        %v4686 = vld [vmem:[%s4682 + $0x18] sm:$0xff]
        %v4687 = vld [vmem:[%s4682 + $0x20] sm:$0xff]
        %v4688 = vld [vmem:[%s4682 + $0x28] sm:$0xff]
        %v4689 = vld [vmem:[%s4682 + $0x30] sm:$0xff]
        %v4690 = vld [vmem:[%s4682 + $0x38] sm:$0xff]
        %v4691 = vld [vmem:[%s4682 + $0x40] sm:$0xff]
        %v4692 = vld [vmem:[%s4682 + $0x48] sm:$0xff]
        %v4693 = vld [vmem:[%s4682 + $0x50] sm:$0xff]
        %v4694 = vld [vmem:[%s4682 + $0x58] sm:$0xff]
        %v4695 = vld [vmem:[%s4682 + $0x60] sm:$0xff]
        %v4696 = vld [vmem:[%s4682 + $0x68] sm:$0xff]
        %v4697 = vld [vmem:[%s4682 + $0x70] sm:$0xff]
        %v4698 = vld [vmem:[%s4682 + $0x78] sm:$0xff]
        %v4699 = vld [vmem:[%s4682 + $0x80] sm:$0xff]
        %v4700 = vld [vmem:[%s4682 + $0x88] sm:$0xff]
        %v4701 = vld [vmem:[%s4682 + $0x90] sm:$0xff]
        %v4702 = vld [vmem:[%s4682 + $0x98] sm:$0xff]
        %v4703 = vld [vmem:[%s4682 + $0xa0] sm:$0xff]
        %v4704 = vld [vmem:[%s4682 + $0xa8] sm:$0xff]
        %v4705 = vld [vmem:[%s4682 + $0xb0] sm:$0xff]
        %v4706 = vld [vmem:[%s4682 + $0xb8] sm:$0xff]
        %v4707 = vld [vmem:[%s4682 + $0xc0] sm:$0xff]
        %v4708 = vld [vmem:[%s4682 + $0xc8] sm:$0xff]
        %v4709 = vld [vmem:[%s4682 + $0xd0] sm:$0xff]
        %v4710 = vld [vmem:[%s4682 + $0xd8] sm:$0xff]
        %v4711 = vld [vmem:[%s4682 + $0xe0] sm:$0xff]
        %v4712 = vld [vmem:[%s4682 + $0xe8] sm:$0xff]
        %v4713 = vld [vmem:[%s4682 + $0xf0] sm:$0xff]
        %v4714 = vld [vmem:[%s4682 + $0xf8] sm:$0xff]
        %s4715 = scalar_lea.vmem %s2, 1792
        %v4716 = vld [vmem:[%s4715] sm:$0xff]
        %v4717 = vld [vmem:[%s4715 + $0x8] sm:$0xff]
        %v4718 = vld [vmem:[%s4715 + $0x10] sm:$0xff]
        %v4719 = vld [vmem:[%s4715 + $0x18] sm:$0xff]
        %v4720 = vld [vmem:[%s4715 + $0x20] sm:$0xff]
        %v4721 = vld [vmem:[%s4715 + $0x28] sm:$0xff]
        %v4722 = vld [vmem:[%s4715 + $0x30] sm:$0xff]
        %v4723 = vld [vmem:[%s4715 + $0x38] sm:$0xff]
        %v4724 = vld [vmem:[%s4715 + $0x40] sm:$0xff]
        %v4725 = vld [vmem:[%s4715 + $0x48] sm:$0xff]
        %v4726 = vld [vmem:[%s4715 + $0x50] sm:$0xff]
        %v4727 = vld [vmem:[%s4715 + $0x58] sm:$0xff]
        %v4728 = vld [vmem:[%s4715 + $0x60] sm:$0xff]
        %v4729 = vld [vmem:[%s4715 + $0x68] sm:$0xff]
        %v4730 = vld [vmem:[%s4715 + $0x70] sm:$0xff]
        %v4731 = vld [vmem:[%s4715 + $0x78] sm:$0xff]
        %v4732 = vld [vmem:[%s4715 + $0x80] sm:$0xff]
        %v4733 = vld [vmem:[%s4715 + $0x88] sm:$0xff]
        %v4734 = vld [vmem:[%s4715 + $0x90] sm:$0xff]
        %v4735 = vld [vmem:[%s4715 + $0x98] sm:$0xff]
        %v4736 = vld [vmem:[%s4715 + $0xa0] sm:$0xff]
        %v4737 = vld [vmem:[%s4715 + $0xa8] sm:$0xff]
        %v4738 = vld [vmem:[%s4715 + $0xb0] sm:$0xff]
        %v4739 = vld [vmem:[%s4715 + $0xb8] sm:$0xff]
        %v4740 = vld [vmem:[%s4715 + $0xc0] sm:$0xff]
        %v4741 = vld [vmem:[%s4715 + $0xc8] sm:$0xff]
        %v4742 = vld [vmem:[%s4715 + $0xd0] sm:$0xff]
        %v4743 = vld [vmem:[%s4715 + $0xd8] sm:$0xff]
        %v4744 = vld [vmem:[%s4715 + $0xe0] sm:$0xff]
        %v4745 = vld [vmem:[%s4715 + $0xe8] sm:$0xff]
        %v4746 = vld [vmem:[%s4715 + $0xf0] sm:$0xff]
        %v4747 = vld [vmem:[%s4715 + $0xf8] sm:$0xff]
        %4749 = vset.pattern.permute.xlu0 0
        %4750 = vperm.xlu0 %4749, %v4716
        %v4751 = vpop.permute.xlu0 %4750
        %4754 = vset.pattern.permute.xlu0 0
        %4755 = vperm.xlu0 %4754, %v4717
        %v4756 = vpop.permute.xlu0 %4755
        %4759 = vset.pattern.permute.xlu0 0
        %4760 = vperm.xlu0 %4759, %v4718
        %v4761 = vpop.permute.xlu0 %4760
        %4764 = vset.pattern.permute.xlu0 0
        %4765 = vperm.xlu0 %4764, %v4719
        %v4766 = vpop.permute.xlu0 %4765
        %4769 = vset.pattern.permute.xlu0 0
        %4770 = vperm.xlu0 %4769, %v4720
        %v4771 = vpop.permute.xlu0 %4770
        %4774 = vset.pattern.permute.xlu0 0
        %4775 = vperm.xlu0 %4774, %v4721
        %v4776 = vpop.permute.xlu0 %4775
        %4779 = vset.pattern.permute.xlu0 0
        %4780 = vperm.xlu0 %4779, %v4722
        %v4781 = vpop.permute.xlu0 %4780
        %4784 = vset.pattern.permute.xlu0 0
        %4785 = vperm.xlu0 %4784, %v4723
        %v4786 = vpop.permute.xlu0 %4785
        %4789 = vset.pattern.permute.xlu0 0
        %4790 = vperm.xlu0 %4789, %v4724
        %v4791 = vpop.permute.xlu0 %4790
        %4794 = vset.pattern.permute.xlu0 0
        %4795 = vperm.xlu0 %4794, %v4725
        %v4796 = vpop.permute.xlu0 %4795
        %4799 = vset.pattern.permute.xlu0 0
        %4800 = vperm.xlu0 %4799, %v4726
        %v4801 = vpop.permute.xlu0 %4800
        %4804 = vset.pattern.permute.xlu0 0
        %4805 = vperm.xlu0 %4804, %v4727
        %v4806 = vpop.permute.xlu0 %4805
        %4809 = vset.pattern.permute.xlu0 0
        %4810 = vperm.xlu0 %4809, %v4728
        %v4811 = vpop.permute.xlu0 %4810
        %4814 = vset.pattern.permute.xlu0 0
        %4815 = vperm.xlu0 %4814, %v4729
        %v4816 = vpop.permute.xlu0 %4815
        %4819 = vset.pattern.permute.xlu0 0
        %4820 = vperm.xlu0 %4819, %v4730
        %v4821 = vpop.permute.xlu0 %4820
        %4824 = vset.pattern.permute.xlu0 0
        %4825 = vperm.xlu0 %4824, %v4731
        %v4826 = vpop.permute.xlu0 %4825
        %4829 = vset.pattern.permute.xlu0 0
        %4830 = vperm.xlu0 %4829, %v4732
        %v4831 = vpop.permute.xlu0 %4830
        %4834 = vset.pattern.permute.xlu0 0
        %4835 = vperm.xlu0 %4834, %v4733
        %v4836 = vpop.permute.xlu0 %4835
        %4839 = vset.pattern.permute.xlu0 0
        %4840 = vperm.xlu0 %4839, %v4734
        %v4841 = vpop.permute.xlu0 %4840
        %4844 = vset.pattern.permute.xlu0 0
        %4845 = vperm.xlu0 %4844, %v4735
        %v4846 = vpop.permute.xlu0 %4845
        %4849 = vset.pattern.permute.xlu0 0
        %4850 = vperm.xlu0 %4849, %v4736
        %v4851 = vpop.permute.xlu0 %4850
        %4854 = vset.pattern.permute.xlu0 0
        %4855 = vperm.xlu0 %4854, %v4737
        %v4856 = vpop.permute.xlu0 %4855
        %4859 = vset.pattern.permute.xlu0 0
        %4860 = vperm.xlu0 %4859, %v4738
        %v4861 = vpop.permute.xlu0 %4860
        %4864 = vset.pattern.permute.xlu0 0
        %4865 = vperm.xlu0 %4864, %v4739
        %v4866 = vpop.permute.xlu0 %4865
        %4869 = vset.pattern.permute.xlu0 0
        %4870 = vperm.xlu0 %4869, %v4740
        %v4871 = vpop.permute.xlu0 %4870
        %4874 = vset.pattern.permute.xlu0 0
        %4875 = vperm.xlu0 %4874, %v4741
        %v4876 = vpop.permute.xlu0 %4875
        %4879 = vset.pattern.permute.xlu0 0
        %4880 = vperm.xlu0 %4879, %v4742
        %v4881 = vpop.permute.xlu0 %4880
        %4884 = vset.pattern.permute.xlu0 0
        %4885 = vperm.xlu0 %4884, %v4743
        %v4886 = vpop.permute.xlu0 %4885
        %4889 = vset.pattern.permute.xlu0 0
        %4890 = vperm.xlu0 %4889, %v4744
        %v4891 = vpop.permute.xlu0 %4890
        %4894 = vset.pattern.permute.xlu0 0
        %4895 = vperm.xlu0 %4894, %v4745
        %v4896 = vpop.permute.xlu0 %4895
        %4899 = vset.pattern.permute.xlu0 0
        %4900 = vperm.xlu0 %4899, %v4746
        %v4901 = vpop.permute.xlu0 %4900
        %4904 = vset.pattern.permute.xlu0 0
        %4905 = vperm.xlu0 %4904, %v4747
        %v4906 = vpop.permute.xlu0 %4905
        %v4940 = vunpack.c.l.b16 %v4683
        %v4941 = vunpack.c.h.b16 %v4683
        %v4942 = vunpack.c.l.b16 %v4684
        %v4943 = vunpack.c.h.b16 %v4684
        %v4944 = vunpack.c.l.b16 %v4685
        %v4945 = vunpack.c.h.b16 %v4685
        %v4946 = vunpack.c.l.b16 %v4686
        %v4947 = vunpack.c.h.b16 %v4686
        %v4948 = vunpack.c.l.b16 %v4687
        %v4949 = vunpack.c.h.b16 %v4687
        %v4950 = vunpack.c.l.b16 %v4688
        %v4951 = vunpack.c.h.b16 %v4688
        %v4952 = vunpack.c.l.b16 %v4689
        %v4953 = vunpack.c.h.b16 %v4689
        %v4954 = vunpack.c.l.b16 %v4690
        %v4955 = vunpack.c.h.b16 %v4690
        %v4956 = vunpack.c.l.b16 %v4691
        %v4957 = vunpack.c.h.b16 %v4691
        %v4958 = vunpack.c.l.b16 %v4692
        %v4959 = vunpack.c.h.b16 %v4692
        %v4960 = vunpack.c.l.b16 %v4693
        %v4961 = vunpack.c.h.b16 %v4693
        %v4962 = vunpack.c.l.b16 %v4694
        %v4963 = vunpack.c.h.b16 %v4694
        %v4964 = vunpack.c.l.b16 %v4695
        %v4965 = vunpack.c.h.b16 %v4695
        %v4966 = vunpack.c.l.b16 %v4696
        %v4967 = vunpack.c.h.b16 %v4696
        %v4968 = vunpack.c.l.b16 %v4697
        %v4969 = vunpack.c.h.b16 %v4697
        %v4970 = vunpack.c.l.b16 %v4698
        %v4971 = vunpack.c.h.b16 %v4698
        %v4972 = vunpack.c.l.b16 %v4699
        %v4973 = vunpack.c.h.b16 %v4699
        %v4974 = vunpack.c.l.b16 %v4700
        %v4975 = vunpack.c.h.b16 %v4700
        %v4976 = vunpack.c.l.b16 %v4701
        %v4977 = vunpack.c.h.b16 %v4701
        %v4978 = vunpack.c.l.b16 %v4702
        %v4979 = vunpack.c.h.b16 %v4702
        %v4980 = vunpack.c.l.b16 %v4703
        %v4981 = vunpack.c.h.b16 %v4703
        %v4982 = vunpack.c.l.b16 %v4704
        %v4983 = vunpack.c.h.b16 %v4704
        %v4984 = vunpack.c.l.b16 %v4705
        %v4985 = vunpack.c.h.b16 %v4705
        %v4986 = vunpack.c.l.b16 %v4706
        %v4987 = vunpack.c.h.b16 %v4706
        %v4988 = vunpack.c.l.b16 %v4707
        %v4989 = vunpack.c.h.b16 %v4707
        %v4990 = vunpack.c.l.b16 %v4708
        %v4991 = vunpack.c.h.b16 %v4708
        %v4992 = vunpack.c.l.b16 %v4709
        %v4993 = vunpack.c.h.b16 %v4709
        %v4994 = vunpack.c.l.b16 %v4710
        %v4995 = vunpack.c.h.b16 %v4710
        %v4996 = vunpack.c.l.b16 %v4711
        %v4997 = vunpack.c.h.b16 %v4711
        %v4998 = vunpack.c.l.b16 %v4712
        %v4999 = vunpack.c.h.b16 %v4712
        %v5000 = vunpack.c.l.b16 %v4713
        %v5001 = vunpack.c.h.b16 %v4713
        %v5002 = vunpack.c.l.b16 %v4714
        %v5003 = vunpack.c.h.b16 %v4714
        %v5004 = vpack.c.b16 %v4942, %v4940
        %v5005 = vpack.c.b16 %v4943, %v4941
        %v5006 = vpack.c.b16 %v4946, %v4944
        %v5007 = vpack.c.b16 %v4947, %v4945
        %v5008 = vpack.c.b16 %v4950, %v4948
        %v5009 = vpack.c.b16 %v4951, %v4949
        %v5010 = vpack.c.b16 %v4954, %v4952
        %v5011 = vpack.c.b16 %v4955, %v4953
        %v5012 = vpack.c.b16 %v4958, %v4956
        %v5013 = vpack.c.b16 %v4959, %v4957
        %v5014 = vpack.c.b16 %v4962, %v4960
        %v5015 = vpack.c.b16 %v4963, %v4961
        %v5016 = vpack.c.b16 %v4966, %v4964
        %v5017 = vpack.c.b16 %v4967, %v4965
        %v5018 = vpack.c.b16 %v4970, %v4968
        %v5019 = vpack.c.b16 %v4971, %v4969
        %v5020 = vpack.c.b16 %v4974, %v4972
        %v5021 = vpack.c.b16 %v4975, %v4973
        %v5022 = vpack.c.b16 %v4978, %v4976
        %v5023 = vpack.c.b16 %v4979, %v4977
        %v5024 = vpack.c.b16 %v4982, %v4980
        %v5025 = vpack.c.b16 %v4983, %v4981
        %v5026 = vpack.c.b16 %v4986, %v4984
        %v5027 = vpack.c.b16 %v4987, %v4985
        %v5028 = vpack.c.b16 %v4990, %v4988
        %v5029 = vpack.c.b16 %v4991, %v4989
        %v5030 = vpack.c.b16 %v4994, %v4992
        %v5031 = vpack.c.b16 %v4995, %v4993
        %v5032 = vpack.c.b16 %v4998, %v4996
        %v5033 = vpack.c.b16 %v4999, %v4997
        %v5034 = vpack.c.b16 %v5002, %v5000
        %v5035 = vpack.c.b16 %v5003, %v5001
        %5068 = vmatprep.subr.bf16.mxu0 0
        %5069 = vmatpush1.bf16.msra.mxu0 %v4673
        %5070 = vmatprep.subr.bf16.mxu0 0
        %5071 = vmatpush1.bf16.msra.mxu0 %v4672
        %5072 = vmatprep.subr.bf16.mxu0 0
        %5073 = vmatpush1.bf16.msra.mxu0 %v4671
        %5074 = vmatprep.subr.bf16.mxu0 0
        %5075 = vmatpush1.bf16.msra.mxu0 %v4670
        %5076 = vmatprep.subr.bf16.mxu0 0
        %5077 = vmatpush1.bf16.msra.mxu0 %v4669
        %5078 = vmatprep.subr.bf16.mxu0 0
        %5079 = vmatpush1.bf16.msra.mxu0 %v4668
        %5080 = vmatprep.subr.bf16.mxu0 0
        %5081 = vmatpush1.bf16.msra.mxu0 %v4667
        %5082 = vmatprep.subr.bf16.mxu0 0
        %5083 = vmatpush1.bf16.msra.mxu0 %v4666
        %5084 = vmatprep.subr.bf16.mxu0 0
        %5085 = vmatpush2.bf16.msra.mxu0 %v4681
        %5086 = vmatprep.subr.bf16.mxu0 0
        %5087 = vmatpush2.bf16.msra.mxu0 %v4680
        %5088 = vmatprep.subr.bf16.mxu0 0
        %5089 = vmatpush2.bf16.msra.mxu0 %v4679
        %5090 = vmatprep.subr.bf16.mxu0 0
        %5091 = vmatpush2.bf16.msra.mxu0 %v4678
        %5092 = vmatprep.subr.bf16.mxu0 0
        %5093 = vmatpush2.bf16.msra.mxu0 %v4677
        %5094 = vmatprep.subr.bf16.mxu0 0
        %5095 = vmatpush2.bf16.msra.mxu0 %v4676
        %5096 = vmatprep.subr.bf16.mxu0 0
        %5097 = vmatpush2.bf16.msra.mxu0 %v4675
        %5098 = vmatprep.subr.bf16.mxu0 0
        %5099 = vmatpush2.bf16.msra.mxu0 %v4674
        %5100 = vmatprep.mubr.bf16.mxu0 %v5005
        %5101 = vmatmul.mubr.bf16.gmra.mxu0 %v5004
        %v5102 = vpop.f32.mrf.mxu0
        %v5103 = vadd.f32 %v4751, %v5102
        %v5104 = vpop.f32.mrf.mxu0
        %v5105 = vpop.f32.mrf.mxu0
        %v5106 = vadd.f32 %v4756, %v5105
        %v5107 = vpop.f32.mrf.mxu0
        %5108 = vmatprep.mubr.bf16.mxu0 %v5007
        %5109 = vmatmul.mubr.bf16.gmra.mxu0 %v5006
        %v5110 = vpop.f32.mrf.mxu0
        %v5111 = vadd.f32 %v4761, %v5110
        %v5112 = vpop.f32.mrf.mxu0
        %v5113 = vpop.f32.mrf.mxu0
        %v5114 = vadd.f32 %v4766, %v5113
        %v5115 = vpop.f32.mrf.mxu0
        %5116 = vmatprep.mubr.bf16.mxu0 %v5009
        %5117 = vmatmul.mubr.bf16.gmra.mxu0 %v5008
        %v5118 = vpop.f32.mrf.mxu0
        %v5119 = vadd.f32 %v4771, %v5118
        %v5120 = vpop.f32.mrf.mxu0
        %v5121 = vpop.f32.mrf.mxu0
        %v5122 = vadd.f32 %v4776, %v5121
        %v5123 = vpop.f32.mrf.mxu0
        %5124 = vmatprep.mubr.bf16.mxu0 %v5011
        %5125 = vmatmul.mubr.bf16.gmra.mxu0 %v5010
        %v5126 = vpop.f32.mrf.mxu0
        %v5127 = vadd.f32 %v4781, %v5126
        %v5128 = vpop.f32.mrf.mxu0
        %v5129 = vpop.f32.mrf.mxu0
        %v5130 = vadd.f32 %v4786, %v5129
        %v5131 = vpop.f32.mrf.mxu0
        %5132 = vmatprep.mubr.bf16.mxu0 %v5013
        %5133 = vmatmul.mubr.bf16.gmra.mxu0 %v5012
        %v5134 = vpop.f32.mrf.mxu0
        %v5135 = vadd.f32 %v4791, %v5134
        %v5136 = vpop.f32.mrf.mxu0
        %v5137 = vpop.f32.mrf.mxu0
        %v5138 = vadd.f32 %v4796, %v5137
        %v5139 = vpop.f32.mrf.mxu0
        %5140 = vmatprep.mubr.bf16.mxu0 %v5015
        %5141 = vmatmul.mubr.bf16.gmra.mxu0 %v5014
        %v5142 = vpop.f32.mrf.mxu0
        %v5143 = vadd.f32 %v4801, %v5142
        %v5144 = vpop.f32.mrf.mxu0
        %v5145 = vpop.f32.mrf.mxu0
        %v5146 = vadd.f32 %v4806, %v5145
        %v5147 = vpop.f32.mrf.mxu0
        %5148 = vmatprep.mubr.bf16.mxu0 %v5017
        %5149 = vmatmul.mubr.bf16.gmra.mxu0 %v5016
        %v5150 = vpop.f32.mrf.mxu0
        %v5151 = vadd.f32 %v4811, %v5150
        %v5152 = vpop.f32.mrf.mxu0
        %v5153 = vpop.f32.mrf.mxu0
        %v5154 = vadd.f32 %v4816, %v5153
        %v5155 = vpop.f32.mrf.mxu0
        %5156 = vmatprep.mubr.bf16.mxu0 %v5019
        %5157 = vmatmul.mubr.bf16.gmra.mxu0 %v5018
        %v5158 = vpop.f32.mrf.mxu0
        %v5159 = vadd.f32 %v4821, %v5158
        %v5160 = vpop.f32.mrf.mxu0
        %v5161 = vpop.f32.mrf.mxu0
        %v5162 = vadd.f32 %v4826, %v5161
        %v5163 = vpop.f32.mrf.mxu0
        %5164 = vmatprep.mubr.bf16.mxu0 %v5021
        %5165 = vmatmul.mubr.bf16.gmra.mxu0 %v5020
        %v5166 = vpop.f32.mrf.mxu0
        %v5167 = vadd.f32 %v4831, %v5166
        %v5168 = vpop.f32.mrf.mxu0
        %v5169 = vpop.f32.mrf.mxu0
        %v5170 = vadd.f32 %v4836, %v5169
        %v5171 = vpop.f32.mrf.mxu0
        %5172 = vmatprep.mubr.bf16.mxu0 %v5023
        %5173 = vmatmul.mubr.bf16.gmra.mxu0 %v5022
        %v5174 = vpop.f32.mrf.mxu0
        %v5175 = vadd.f32 %v4841, %v5174
        %v5176 = vpop.f32.mrf.mxu0
        %v5177 = vpop.f32.mrf.mxu0
        %v5178 = vadd.f32 %v4846, %v5177
        %v5179 = vpop.f32.mrf.mxu0
        %5180 = vmatprep.mubr.bf16.mxu0 %v5025
        %5181 = vmatmul.mubr.bf16.gmra.mxu0 %v5024
        %v5182 = vpop.f32.mrf.mxu0
        %v5183 = vadd.f32 %v4851, %v5182
        %v5184 = vpop.f32.mrf.mxu0
        %v5185 = vpop.f32.mrf.mxu0
        %v5186 = vadd.f32 %v4856, %v5185
        %v5187 = vpop.f32.mrf.mxu0
        %5188 = vmatprep.mubr.bf16.mxu0 %v5027
        %5189 = vmatmul.mubr.bf16.gmra.mxu0 %v5026
        %v5190 = vpop.f32.mrf.mxu0
        %v5191 = vadd.f32 %v4861, %v5190
        %v5192 = vpop.f32.mrf.mxu0
        %v5193 = vpop.f32.mrf.mxu0
        %v5194 = vadd.f32 %v4866, %v5193
        %v5195 = vpop.f32.mrf.mxu0
        %5196 = vmatprep.mubr.bf16.mxu0 %v5029
        %5197 = vmatmul.mubr.bf16.gmra.mxu0 %v5028
        %v5198 = vpop.f32.mrf.mxu0
        %v5199 = vadd.f32 %v4871, %v5198
        %v5200 = vpop.f32.mrf.mxu0
        %v5201 = vpop.f32.mrf.mxu0
        %v5202 = vadd.f32 %v4876, %v5201
        %v5203 = vpop.f32.mrf.mxu0
        %5204 = vmatprep.mubr.bf16.mxu0 %v5031
        %5205 = vmatmul.mubr.bf16.gmra.mxu0 %v5030
        %v5206 = vpop.f32.mrf.mxu0
        %v5207 = vadd.f32 %v4881, %v5206
        %v5208 = vpop.f32.mrf.mxu0
        %v5209 = vpop.f32.mrf.mxu0
        %v5210 = vadd.f32 %v4886, %v5209
        %v5211 = vpop.f32.mrf.mxu0
        %5212 = vmatprep.mubr.bf16.mxu0 %v5033
        %5213 = vmatmul.mubr.bf16.gmra.mxu0 %v5032
        %v5214 = vpop.f32.mrf.mxu0
        %v5215 = vadd.f32 %v4891, %v5214
        %v5216 = vpop.f32.mrf.mxu0
        %v5217 = vpop.f32.mrf.mxu0
        %v5218 = vadd.f32 %v4896, %v5217
        %v5219 = vpop.f32.mrf.mxu0
        %5220 = vmatprep.mubr.bf16.mxu0 %v5035
        %5221 = vmatmul.mubr.bf16.gmra.mxu0 %v5034
        %v5222 = vpop.f32.mrf.mxu0
        %v5223 = vadd.f32 %v4901, %v5222
        %v5224 = vpop.f32.mrf.mxu0
        %v5225 = vpop.f32.mrf.mxu0
        %v5226 = vadd.f32 %v4906, %v5225
        %v5227 = vpop.f32.mrf.mxu0
        %5228 = vdwg.mxu0
        %v5229 = vmax.f32 %v5103, 0.0
        %v5230 = vmax.f32 %v5106, 0.0
        %v5231 = vmax.f32 %v5111, 0.0
        %v5232 = vmax.f32 %v5114, 0.0
        %v5233 = vmax.f32 %v5119, 0.0
        %v5234 = vmax.f32 %v5122, 0.0
        %v5235 = vmax.f32 %v5127, 0.0
        %v5236 = vmax.f32 %v5130, 0.0
        %v5237 = vmax.f32 %v5135, 0.0
        %v5238 = vmax.f32 %v5138, 0.0
        %v5239 = vmax.f32 %v5143, 0.0
        %v5240 = vmax.f32 %v5146, 0.0
        %v5241 = vmax.f32 %v5151, 0.0
        %v5242 = vmax.f32 %v5154, 0.0
        %v5243 = vmax.f32 %v5159, 0.0
        %v5244 = vmax.f32 %v5162, 0.0
        %v5245 = vmax.f32 %v5167, 0.0
        %v5246 = vmax.f32 %v5170, 0.0
        %v5247 = vmax.f32 %v5175, 0.0
        %v5248 = vmax.f32 %v5178, 0.0
        %v5249 = vmax.f32 %v5183, 0.0
        %v5250 = vmax.f32 %v5186, 0.0
        %v5251 = vmax.f32 %v5191, 0.0
        %v5252 = vmax.f32 %v5194, 0.0
        %v5253 = vmax.f32 %v5199, 0.0
        %v5254 = vmax.f32 %v5202, 0.0
        %v5255 = vmax.f32 %v5207, 0.0
        %v5256 = vmax.f32 %v5210, 0.0
        %v5257 = vmax.f32 %v5215, 0.0
        %v5258 = vmax.f32 %v5218, 0.0
        %v5259 = vmax.f32 %v5223, 0.0
        %v5260 = vmax.f32 %v5226, 0.0
        %v5261 = vpack.c.bf16 %v5230, %v5229
        %v5262 = vpack.c.bf16 %v5232, %v5231
        %v5263 = vpack.c.bf16 %v5234, %v5233
        %v5264 = vpack.c.bf16 %v5236, %v5235
        %v5265 = vpack.c.bf16 %v5238, %v5237
        %v5266 = vpack.c.bf16 %v5240, %v5239
        %v5267 = vpack.c.bf16 %v5242, %v5241
        %v5268 = vpack.c.bf16 %v5244, %v5243
        %v5269 = vpack.c.bf16 %v5246, %v5245
        %v5270 = vpack.c.bf16 %v5248, %v5247
        %v5271 = vpack.c.bf16 %v5250, %v5249
        %v5272 = vpack.c.bf16 %v5252, %v5251
        %v5273 = vpack.c.bf16 %v5254, %v5253
        %v5274 = vpack.c.bf16 %v5256, %v5255
        %v5275 = vpack.c.bf16 %v5258, %v5257
        %v5276 = vpack.c.bf16 %v5260, %v5259
        %s5277 = scalar_lea.vmem %s1, 2048
        %v5278 = vld [vmem:[%s5277] sm:$0xff]
        %v5279 = vld [vmem:[%s5277 + $0x8] sm:$0xff]
        %v5280 = vld [vmem:[%s5277 + $0x10] sm:$0xff]
        %v5281 = vld [vmem:[%s5277 + $0x18] sm:$0xff]
        %v5282 = vld [vmem:[%s5277 + $0x20] sm:$0xff]
        %v5283 = vld [vmem:[%s5277 + $0x28] sm:$0xff]
        %v5284 = vld [vmem:[%s5277 + $0x30] sm:$0xff]
        %v5285 = vld [vmem:[%s5277 + $0x38] sm:$0xff]
        %v5286 = vld [vmem:[%s5277 + $0x40] sm:$0xff]
        %v5287 = vld [vmem:[%s5277 + $0x48] sm:$0xff]
        %v5288 = vld [vmem:[%s5277 + $0x50] sm:$0xff]
        %v5289 = vld [vmem:[%s5277 + $0x58] sm:$0xff]
        %v5290 = vld [vmem:[%s5277 + $0x60] sm:$0xff]
        %v5291 = vld [vmem:[%s5277 + $0x68] sm:$0xff]
        %v5292 = vld [vmem:[%s5277 + $0x70] sm:$0xff]
        %v5293 = vld [vmem:[%s5277 + $0x78] sm:$0xff]
        %v5294 = vld [vmem:[%s5277 + $0x80] sm:$0xff]
        %v5295 = vld [vmem:[%s5277 + $0x88] sm:$0xff]
        %v5296 = vld [vmem:[%s5277 + $0x90] sm:$0xff]
        %v5297 = vld [vmem:[%s5277 + $0x98] sm:$0xff]
        %v5298 = vld [vmem:[%s5277 + $0xa0] sm:$0xff]
        %v5299 = vld [vmem:[%s5277 + $0xa8] sm:$0xff]
        %v5300 = vld [vmem:[%s5277 + $0xb0] sm:$0xff]
        %v5301 = vld [vmem:[%s5277 + $0xb8] sm:$0xff]
        %v5302 = vld [vmem:[%s5277 + $0xc0] sm:$0xff]
        %v5303 = vld [vmem:[%s5277 + $0xc8] sm:$0xff]
        %v5304 = vld [vmem:[%s5277 + $0xd0] sm:$0xff]
        %v5305 = vld [vmem:[%s5277 + $0xd8] sm:$0xff]
        %v5306 = vld [vmem:[%s5277 + $0xe0] sm:$0xff]
        %v5307 = vld [vmem:[%s5277 + $0xe8] sm:$0xff]
        %v5308 = vld [vmem:[%s5277 + $0xf0] sm:$0xff]
        %v5309 = vld [vmem:[%s5277 + $0xf8] sm:$0xff]
        %s5310 = scalar_lea.vmem %s2, 2048
        %v5311 = vld [vmem:[%s5310] sm:$0xff]
        %v5312 = vld [vmem:[%s5310 + $0x8] sm:$0xff]
        %v5313 = vld [vmem:[%s5310 + $0x10] sm:$0xff]
        %v5314 = vld [vmem:[%s5310 + $0x18] sm:$0xff]
        %v5315 = vld [vmem:[%s5310 + $0x20] sm:$0xff]
        %v5316 = vld [vmem:[%s5310 + $0x28] sm:$0xff]
        %v5317 = vld [vmem:[%s5310 + $0x30] sm:$0xff]
        %v5318 = vld [vmem:[%s5310 + $0x38] sm:$0xff]
        %v5319 = vld [vmem:[%s5310 + $0x40] sm:$0xff]
        %v5320 = vld [vmem:[%s5310 + $0x48] sm:$0xff]
        %v5321 = vld [vmem:[%s5310 + $0x50] sm:$0xff]
        %v5322 = vld [vmem:[%s5310 + $0x58] sm:$0xff]
        %v5323 = vld [vmem:[%s5310 + $0x60] sm:$0xff]
        %v5324 = vld [vmem:[%s5310 + $0x68] sm:$0xff]
        %v5325 = vld [vmem:[%s5310 + $0x70] sm:$0xff]
        %v5326 = vld [vmem:[%s5310 + $0x78] sm:$0xff]
        %v5327 = vld [vmem:[%s5310 + $0x80] sm:$0xff]
        %v5328 = vld [vmem:[%s5310 + $0x88] sm:$0xff]
        %v5329 = vld [vmem:[%s5310 + $0x90] sm:$0xff]
        %v5330 = vld [vmem:[%s5310 + $0x98] sm:$0xff]
        %v5331 = vld [vmem:[%s5310 + $0xa0] sm:$0xff]
        %v5332 = vld [vmem:[%s5310 + $0xa8] sm:$0xff]
        %v5333 = vld [vmem:[%s5310 + $0xb0] sm:$0xff]
        %v5334 = vld [vmem:[%s5310 + $0xb8] sm:$0xff]
        %v5335 = vld [vmem:[%s5310 + $0xc0] sm:$0xff]
        %v5336 = vld [vmem:[%s5310 + $0xc8] sm:$0xff]
        %v5337 = vld [vmem:[%s5310 + $0xd0] sm:$0xff]
        %v5338 = vld [vmem:[%s5310 + $0xd8] sm:$0xff]
        %v5339 = vld [vmem:[%s5310 + $0xe0] sm:$0xff]
        %v5340 = vld [vmem:[%s5310 + $0xe8] sm:$0xff]
        %v5341 = vld [vmem:[%s5310 + $0xf0] sm:$0xff]
        %v5342 = vld [vmem:[%s5310 + $0xf8] sm:$0xff]
        %5344 = vset.pattern.permute.xlu0 0
        %5345 = vperm.xlu0 %5344, %v5311
        %v5346 = vpop.permute.xlu0 %5345
        %5349 = vset.pattern.permute.xlu0 0
        %5350 = vperm.xlu0 %5349, %v5312
        %v5351 = vpop.permute.xlu0 %5350
        %5354 = vset.pattern.permute.xlu0 0
        %5355 = vperm.xlu0 %5354, %v5313
        %v5356 = vpop.permute.xlu0 %5355
        %5359 = vset.pattern.permute.xlu0 0
        %5360 = vperm.xlu0 %5359, %v5314
        %v5361 = vpop.permute.xlu0 %5360
        %5364 = vset.pattern.permute.xlu0 0
        %5365 = vperm.xlu0 %5364, %v5315
        %v5366 = vpop.permute.xlu0 %5365
        %5369 = vset.pattern.permute.xlu0 0
        %5370 = vperm.xlu0 %5369, %v5316
        %v5371 = vpop.permute.xlu0 %5370
        %5374 = vset.pattern.permute.xlu0 0
        %5375 = vperm.xlu0 %5374, %v5317
        %v5376 = vpop.permute.xlu0 %5375
        %5379 = vset.pattern.permute.xlu0 0
        %5380 = vperm.xlu0 %5379, %v5318
        %v5381 = vpop.permute.xlu0 %5380
        %5384 = vset.pattern.permute.xlu0 0
        %5385 = vperm.xlu0 %5384, %v5319
        %v5386 = vpop.permute.xlu0 %5385
        %5389 = vset.pattern.permute.xlu0 0
        %5390 = vperm.xlu0 %5389, %v5320
        %v5391 = vpop.permute.xlu0 %5390
        %5394 = vset.pattern.permute.xlu0 0
        %5395 = vperm.xlu0 %5394, %v5321
        %v5396 = vpop.permute.xlu0 %5395
        %5399 = vset.pattern.permute.xlu0 0
        %5400 = vperm.xlu0 %5399, %v5322
        %v5401 = vpop.permute.xlu0 %5400
        %5404 = vset.pattern.permute.xlu0 0
        %5405 = vperm.xlu0 %5404, %v5323
        %v5406 = vpop.permute.xlu0 %5405
        %5409 = vset.pattern.permute.xlu0 0
        %5410 = vperm.xlu0 %5409, %v5324
        %v5411 = vpop.permute.xlu0 %5410
        %5414 = vset.pattern.permute.xlu0 0
        %5415 = vperm.xlu0 %5414, %v5325
        %v5416 = vpop.permute.xlu0 %5415
        %5419 = vset.pattern.permute.xlu0 0
        %5420 = vperm.xlu0 %5419, %v5326
        %v5421 = vpop.permute.xlu0 %5420
        %5424 = vset.pattern.permute.xlu0 0
        %5425 = vperm.xlu0 %5424, %v5327
        %v5426 = vpop.permute.xlu0 %5425
        %5429 = vset.pattern.permute.xlu0 0
        %5430 = vperm.xlu0 %5429, %v5328
        %v5431 = vpop.permute.xlu0 %5430
        %5434 = vset.pattern.permute.xlu0 0
        %5435 = vperm.xlu0 %5434, %v5329
        %v5436 = vpop.permute.xlu0 %5435
        %5439 = vset.pattern.permute.xlu0 0
        %5440 = vperm.xlu0 %5439, %v5330
        %v5441 = vpop.permute.xlu0 %5440
        %5444 = vset.pattern.permute.xlu0 0
        %5445 = vperm.xlu0 %5444, %v5331
        %v5446 = vpop.permute.xlu0 %5445
        %5449 = vset.pattern.permute.xlu0 0
        %5450 = vperm.xlu0 %5449, %v5332
        %v5451 = vpop.permute.xlu0 %5450
        %5454 = vset.pattern.permute.xlu0 0
        %5455 = vperm.xlu0 %5454, %v5333
        %v5456 = vpop.permute.xlu0 %5455
        %5459 = vset.pattern.permute.xlu0 0
        %5460 = vperm.xlu0 %5459, %v5334
        %v5461 = vpop.permute.xlu0 %5460
        %5464 = vset.pattern.permute.xlu0 0
        %5465 = vperm.xlu0 %5464, %v5335
        %v5466 = vpop.permute.xlu0 %5465
        %5469 = vset.pattern.permute.xlu0 0
        %5470 = vperm.xlu0 %5469, %v5336
        %v5471 = vpop.permute.xlu0 %5470
        %5474 = vset.pattern.permute.xlu0 0
        %5475 = vperm.xlu0 %5474, %v5337
        %v5476 = vpop.permute.xlu0 %5475
        %5479 = vset.pattern.permute.xlu0 0
        %5480 = vperm.xlu0 %5479, %v5338
        %v5481 = vpop.permute.xlu0 %5480
        %5484 = vset.pattern.permute.xlu0 0
        %5485 = vperm.xlu0 %5484, %v5339
        %v5486 = vpop.permute.xlu0 %5485
        %5489 = vset.pattern.permute.xlu0 0
        %5490 = vperm.xlu0 %5489, %v5340
        %v5491 = vpop.permute.xlu0 %5490
        %5494 = vset.pattern.permute.xlu0 0
        %5495 = vperm.xlu0 %5494, %v5341
        %v5496 = vpop.permute.xlu0 %5495
        %5499 = vset.pattern.permute.xlu0 0
        %5500 = vperm.xlu0 %5499, %v5342
        %v5501 = vpop.permute.xlu0 %5500
        %v5535 = vunpack.c.l.b16 %v5278
        %v5536 = vunpack.c.h.b16 %v5278
        %v5537 = vunpack.c.l.b16 %v5279
        %v5538 = vunpack.c.h.b16 %v5279
        %v5539 = vunpack.c.l.b16 %v5280
        %v5540 = vunpack.c.h.b16 %v5280
        %v5541 = vunpack.c.l.b16 %v5281
        %v5542 = vunpack.c.h.b16 %v5281
        %v5543 = vunpack.c.l.b16 %v5282
        %v5544 = vunpack.c.h.b16 %v5282
        %v5545 = vunpack.c.l.b16 %v5283
        %v5546 = vunpack.c.h.b16 %v5283
        %v5547 = vunpack.c.l.b16 %v5284
        %v5548 = vunpack.c.h.b16 %v5284
        %v5549 = vunpack.c.l.b16 %v5285
        %v5550 = vunpack.c.h.b16 %v5285
        %v5551 = vunpack.c.l.b16 %v5286
        %v5552 = vunpack.c.h.b16 %v5286
        %v5553 = vunpack.c.l.b16 %v5287
        %v5554 = vunpack.c.h.b16 %v5287
        %v5555 = vunpack.c.l.b16 %v5288
        %v5556 = vunpack.c.h.b16 %v5288
        %v5557 = vunpack.c.l.b16 %v5289
        %v5558 = vunpack.c.h.b16 %v5289
        %v5559 = vunpack.c.l.b16 %v5290
        %v5560 = vunpack.c.h.b16 %v5290
        %v5561 = vunpack.c.l.b16 %v5291
        %v5562 = vunpack.c.h.b16 %v5291
        %v5563 = vunpack.c.l.b16 %v5292
        %v5564 = vunpack.c.h.b16 %v5292
        %v5565 = vunpack.c.l.b16 %v5293
        %v5566 = vunpack.c.h.b16 %v5293
        %v5567 = vunpack.c.l.b16 %v5294
        %v5568 = vunpack.c.h.b16 %v5294
        %v5569 = vunpack.c.l.b16 %v5295
        %v5570 = vunpack.c.h.b16 %v5295
        %v5571 = vunpack.c.l.b16 %v5296
        %v5572 = vunpack.c.h.b16 %v5296
        %v5573 = vunpack.c.l.b16 %v5297
        %v5574 = vunpack.c.h.b16 %v5297
        %v5575 = vunpack.c.l.b16 %v5298
        %v5576 = vunpack.c.h.b16 %v5298
        %v5577 = vunpack.c.l.b16 %v5299
        %v5578 = vunpack.c.h.b16 %v5299
        %v5579 = vunpack.c.l.b16 %v5300
        %v5580 = vunpack.c.h.b16 %v5300
        %v5581 = vunpack.c.l.b16 %v5301
        %v5582 = vunpack.c.h.b16 %v5301
        %v5583 = vunpack.c.l.b16 %v5302
        %v5584 = vunpack.c.h.b16 %v5302
        %v5585 = vunpack.c.l.b16 %v5303
        %v5586 = vunpack.c.h.b16 %v5303
        %v5587 = vunpack.c.l.b16 %v5304
        %v5588 = vunpack.c.h.b16 %v5304
        %v5589 = vunpack.c.l.b16 %v5305
        %v5590 = vunpack.c.h.b16 %v5305
        %v5591 = vunpack.c.l.b16 %v5306
        %v5592 = vunpack.c.h.b16 %v5306
        %v5593 = vunpack.c.l.b16 %v5307
        %v5594 = vunpack.c.h.b16 %v5307
        %v5595 = vunpack.c.l.b16 %v5308
        %v5596 = vunpack.c.h.b16 %v5308
        %v5597 = vunpack.c.l.b16 %v5309
        %v5598 = vunpack.c.h.b16 %v5309
        %v5599 = vpack.c.b16 %v5537, %v5535
        %v5600 = vpack.c.b16 %v5538, %v5536
        %v5601 = vpack.c.b16 %v5541, %v5539
        %v5602 = vpack.c.b16 %v5542, %v5540
        %v5603 = vpack.c.b16 %v5545, %v5543
        %v5604 = vpack.c.b16 %v5546, %v5544
        %v5605 = vpack.c.b16 %v5549, %v5547
        %v5606 = vpack.c.b16 %v5550, %v5548
        %v5607 = vpack.c.b16 %v5553, %v5551
        %v5608 = vpack.c.b16 %v5554, %v5552
        %v5609 = vpack.c.b16 %v5557, %v5555
        %v5610 = vpack.c.b16 %v5558, %v5556
        %v5611 = vpack.c.b16 %v5561, %v5559
        %v5612 = vpack.c.b16 %v5562, %v5560
        %v5613 = vpack.c.b16 %v5565, %v5563
        %v5614 = vpack.c.b16 %v5566, %v5564
        %v5615 = vpack.c.b16 %v5569, %v5567
        %v5616 = vpack.c.b16 %v5570, %v5568
        %v5617 = vpack.c.b16 %v5573, %v5571
        %v5618 = vpack.c.b16 %v5574, %v5572
        %v5619 = vpack.c.b16 %v5577, %v5575
        %v5620 = vpack.c.b16 %v5578, %v5576
        %v5621 = vpack.c.b16 %v5581, %v5579
        %v5622 = vpack.c.b16 %v5582, %v5580
        %v5623 = vpack.c.b16 %v5585, %v5583
        %v5624 = vpack.c.b16 %v5586, %v5584
        %v5625 = vpack.c.b16 %v5589, %v5587
        %v5626 = vpack.c.b16 %v5590, %v5588
        %v5627 = vpack.c.b16 %v5593, %v5591
        %v5628 = vpack.c.b16 %v5594, %v5592
        %v5629 = vpack.c.b16 %v5597, %v5595
        %v5630 = vpack.c.b16 %v5598, %v5596
        %5663 = vmatprep.subr.bf16.mxu0 0
        %5664 = vmatpush1.bf16.msra.mxu0 %v5268
        %5665 = vmatprep.subr.bf16.mxu0 0
        %5666 = vmatpush1.bf16.msra.mxu0 %v5267
        %5667 = vmatprep.subr.bf16.mxu0 0
        %5668 = vmatpush1.bf16.msra.mxu0 %v5266
        %5669 = vmatprep.subr.bf16.mxu0 0
        %5670 = vmatpush1.bf16.msra.mxu0 %v5265
        %5671 = vmatprep.subr.bf16.mxu0 0
        %5672 = vmatpush1.bf16.msra.mxu0 %v5264
        %5673 = vmatprep.subr.bf16.mxu0 0
        %5674 = vmatpush1.bf16.msra.mxu0 %v5263
        %5675 = vmatprep.subr.bf16.mxu0 0
        %5676 = vmatpush1.bf16.msra.mxu0 %v5262
        %5677 = vmatprep.subr.bf16.mxu0 0
        %5678 = vmatpush1.bf16.msra.mxu0 %v5261
        %5679 = vmatprep.subr.bf16.mxu0 0
        %5680 = vmatpush2.bf16.msra.mxu0 %v5276
        %5681 = vmatprep.subr.bf16.mxu0 0
        %5682 = vmatpush2.bf16.msra.mxu0 %v5275
        %5683 = vmatprep.subr.bf16.mxu0 0
        %5684 = vmatpush2.bf16.msra.mxu0 %v5274
        %5685 = vmatprep.subr.bf16.mxu0 0
        %5686 = vmatpush2.bf16.msra.mxu0 %v5273
        %5687 = vmatprep.subr.bf16.mxu0 0
        %5688 = vmatpush2.bf16.msra.mxu0 %v5272
        %5689 = vmatprep.subr.bf16.mxu0 0
        %5690 = vmatpush2.bf16.msra.mxu0 %v5271
        %5691 = vmatprep.subr.bf16.mxu0 0
        %5692 = vmatpush2.bf16.msra.mxu0 %v5270
        %5693 = vmatprep.subr.bf16.mxu0 0
        %5694 = vmatpush2.bf16.msra.mxu0 %v5269
        %5695 = vmatprep.mubr.bf16.mxu0 %v5600
        %5696 = vmatmul.mubr.bf16.gmra.mxu0 %v5599
        %v5697 = vpop.f32.mrf.mxu0
        %v5698 = vadd.f32 %v5346, %v5697
        %v5699 = vpop.f32.mrf.mxu0
        %v5700 = vpop.f32.mrf.mxu0
        %v5701 = vadd.f32 %v5351, %v5700
        %v5702 = vpop.f32.mrf.mxu0
        %5703 = vmatprep.mubr.bf16.mxu0 %v5602
        %5704 = vmatmul.mubr.bf16.gmra.mxu0 %v5601
        %v5705 = vpop.f32.mrf.mxu0
        %v5706 = vadd.f32 %v5356, %v5705
        %v5707 = vpop.f32.mrf.mxu0
        %v5708 = vpop.f32.mrf.mxu0
        %v5709 = vadd.f32 %v5361, %v5708
        %v5710 = vpop.f32.mrf.mxu0
        %5711 = vmatprep.mubr.bf16.mxu0 %v5604
        %5712 = vmatmul.mubr.bf16.gmra.mxu0 %v5603
        %v5713 = vpop.f32.mrf.mxu0
        %v5714 = vadd.f32 %v5366, %v5713
        %v5715 = vpop.f32.mrf.mxu0
        %v5716 = vpop.f32.mrf.mxu0
        %v5717 = vadd.f32 %v5371, %v5716
        %v5718 = vpop.f32.mrf.mxu0
        %5719 = vmatprep.mubr.bf16.mxu0 %v5606
        %5720 = vmatmul.mubr.bf16.gmra.mxu0 %v5605
        %v5721 = vpop.f32.mrf.mxu0
        %v5722 = vadd.f32 %v5376, %v5721
        %v5723 = vpop.f32.mrf.mxu0
        %v5724 = vpop.f32.mrf.mxu0
        %v5725 = vadd.f32 %v5381, %v5724
        %v5726 = vpop.f32.mrf.mxu0
        %5727 = vmatprep.mubr.bf16.mxu0 %v5608
        %5728 = vmatmul.mubr.bf16.gmra.mxu0 %v5607
        %v5729 = vpop.f32.mrf.mxu0
        %v5730 = vadd.f32 %v5386, %v5729
        %v5731 = vpop.f32.mrf.mxu0
        %v5732 = vpop.f32.mrf.mxu0
        %v5733 = vadd.f32 %v5391, %v5732
        %v5734 = vpop.f32.mrf.mxu0
        %5735 = vmatprep.mubr.bf16.mxu0 %v5610
        %5736 = vmatmul.mubr.bf16.gmra.mxu0 %v5609
        %v5737 = vpop.f32.mrf.mxu0
        %v5738 = vadd.f32 %v5396, %v5737
        %v5739 = vpop.f32.mrf.mxu0
        %v5740 = vpop.f32.mrf.mxu0
        %v5741 = vadd.f32 %v5401, %v5740
        %v5742 = vpop.f32.mrf.mxu0
        %5743 = vmatprep.mubr.bf16.mxu0 %v5612
        %5744 = vmatmul.mubr.bf16.gmra.mxu0 %v5611
        %v5745 = vpop.f32.mrf.mxu0
        %v5746 = vadd.f32 %v5406, %v5745
        %v5747 = vpop.f32.mrf.mxu0
        %v5748 = vpop.f32.mrf.mxu0
        %v5749 = vadd.f32 %v5411, %v5748
        %v5750 = vpop.f32.mrf.mxu0
        %5751 = vmatprep.mubr.bf16.mxu0 %v5614
        %5752 = vmatmul.mubr.bf16.gmra.mxu0 %v5613
        %v5753 = vpop.f32.mrf.mxu0
        %v5754 = vadd.f32 %v5416, %v5753
        %v5755 = vpop.f32.mrf.mxu0
        %v5756 = vpop.f32.mrf.mxu0
        %v5757 = vadd.f32 %v5421, %v5756
        %v5758 = vpop.f32.mrf.mxu0
        %5759 = vmatprep.mubr.bf16.mxu0 %v5616
        %5760 = vmatmul.mubr.bf16.gmra.mxu0 %v5615
        %v5761 = vpop.f32.mrf.mxu0
        %v5762 = vadd.f32 %v5426, %v5761
        %v5763 = vpop.f32.mrf.mxu0
        %v5764 = vpop.f32.mrf.mxu0
        %v5765 = vadd.f32 %v5431, %v5764
        %v5766 = vpop.f32.mrf.mxu0
        %5767 = vmatprep.mubr.bf16.mxu0 %v5618
        %5768 = vmatmul.mubr.bf16.gmra.mxu0 %v5617
        %v5769 = vpop.f32.mrf.mxu0
        %v5770 = vadd.f32 %v5436, %v5769
        %v5771 = vpop.f32.mrf.mxu0
        %v5772 = vpop.f32.mrf.mxu0
        %v5773 = vadd.f32 %v5441, %v5772
        %v5774 = vpop.f32.mrf.mxu0
        %5775 = vmatprep.mubr.bf16.mxu0 %v5620
        %5776 = vmatmul.mubr.bf16.gmra.mxu0 %v5619
        %v5777 = vpop.f32.mrf.mxu0
        %v5778 = vadd.f32 %v5446, %v5777
        %v5779 = vpop.f32.mrf.mxu0
        %v5780 = vpop.f32.mrf.mxu0
        %v5781 = vadd.f32 %v5451, %v5780
        %v5782 = vpop.f32.mrf.mxu0
        %5783 = vmatprep.mubr.bf16.mxu0 %v5622
        %5784 = vmatmul.mubr.bf16.gmra.mxu0 %v5621
        %v5785 = vpop.f32.mrf.mxu0
        %v5786 = vadd.f32 %v5456, %v5785
        %v5787 = vpop.f32.mrf.mxu0
        %v5788 = vpop.f32.mrf.mxu0
        %v5789 = vadd.f32 %v5461, %v5788
        %v5790 = vpop.f32.mrf.mxu0
        %5791 = vmatprep.mubr.bf16.mxu0 %v5624
        %5792 = vmatmul.mubr.bf16.gmra.mxu0 %v5623
        %v5793 = vpop.f32.mrf.mxu0
        %v5794 = vadd.f32 %v5466, %v5793
        %v5795 = vpop.f32.mrf.mxu0
        %v5796 = vpop.f32.mrf.mxu0
        %v5797 = vadd.f32 %v5471, %v5796
        %v5798 = vpop.f32.mrf.mxu0
        %5799 = vmatprep.mubr.bf16.mxu0 %v5626
        %5800 = vmatmul.mubr.bf16.gmra.mxu0 %v5625
        %v5801 = vpop.f32.mrf.mxu0
        %v5802 = vadd.f32 %v5476, %v5801
        %v5803 = vpop.f32.mrf.mxu0
        %v5804 = vpop.f32.mrf.mxu0
        %v5805 = vadd.f32 %v5481, %v5804
        %v5806 = vpop.f32.mrf.mxu0
        %5807 = vmatprep.mubr.bf16.mxu0 %v5628
        %5808 = vmatmul.mubr.bf16.gmra.mxu0 %v5627
        %v5809 = vpop.f32.mrf.mxu0
        %v5810 = vadd.f32 %v5486, %v5809
        %v5811 = vpop.f32.mrf.mxu0
        %v5812 = vpop.f32.mrf.mxu0
        %v5813 = vadd.f32 %v5491, %v5812
        %v5814 = vpop.f32.mrf.mxu0
        %5815 = vmatprep.mubr.bf16.mxu0 %v5630
        %5816 = vmatmul.mubr.bf16.gmra.mxu0 %v5629
        %v5817 = vpop.f32.mrf.mxu0
        %v5818 = vadd.f32 %v5496, %v5817
        %v5819 = vpop.f32.mrf.mxu0
        %v5820 = vpop.f32.mrf.mxu0
        %v5821 = vadd.f32 %v5501, %v5820
        %v5822 = vpop.f32.mrf.mxu0
        %5823 = vdwg.mxu0
        %v5824 = vmax.f32 %v5698, 0.0
        %v5825 = vmax.f32 %v5701, 0.0
        %v5826 = vmax.f32 %v5706, 0.0
        %v5827 = vmax.f32 %v5709, 0.0
        %v5828 = vmax.f32 %v5714, 0.0
        %v5829 = vmax.f32 %v5717, 0.0
        %v5830 = vmax.f32 %v5722, 0.0
        %v5831 = vmax.f32 %v5725, 0.0
        %v5832 = vmax.f32 %v5730, 0.0
        %v5833 = vmax.f32 %v5733, 0.0
        %v5834 = vmax.f32 %v5738, 0.0
        %v5835 = vmax.f32 %v5741, 0.0
        %v5836 = vmax.f32 %v5746, 0.0
        %v5837 = vmax.f32 %v5749, 0.0
        %v5838 = vmax.f32 %v5754, 0.0
        %v5839 = vmax.f32 %v5757, 0.0
        %v5840 = vmax.f32 %v5762, 0.0
        %v5841 = vmax.f32 %v5765, 0.0
        %v5842 = vmax.f32 %v5770, 0.0
        %v5843 = vmax.f32 %v5773, 0.0
        %v5844 = vmax.f32 %v5778, 0.0
        %v5845 = vmax.f32 %v5781, 0.0
        %v5846 = vmax.f32 %v5786, 0.0
        %v5847 = vmax.f32 %v5789, 0.0
        %v5848 = vmax.f32 %v5794, 0.0
        %v5849 = vmax.f32 %v5797, 0.0
        %v5850 = vmax.f32 %v5802, 0.0
        %v5851 = vmax.f32 %v5805, 0.0
        %v5852 = vmax.f32 %v5810, 0.0
        %v5853 = vmax.f32 %v5813, 0.0
        %v5854 = vmax.f32 %v5818, 0.0
        %v5855 = vmax.f32 %v5821, 0.0
        %v5856 = vpack.c.bf16 %v5825, %v5824
        %v5857 = vpack.c.bf16 %v5827, %v5826
        %v5858 = vpack.c.bf16 %v5829, %v5828
        %v5859 = vpack.c.bf16 %v5831, %v5830
        %v5860 = vpack.c.bf16 %v5833, %v5832
        %v5861 = vpack.c.bf16 %v5835, %v5834
        %v5862 = vpack.c.bf16 %v5837, %v5836
        %v5863 = vpack.c.bf16 %v5839, %v5838
        %v5864 = vpack.c.bf16 %v5841, %v5840
        %v5865 = vpack.c.bf16 %v5843, %v5842
        %v5866 = vpack.c.bf16 %v5845, %v5844
        %v5867 = vpack.c.bf16 %v5847, %v5846
        %v5868 = vpack.c.bf16 %v5849, %v5848
        %v5869 = vpack.c.bf16 %v5851, %v5850
        %v5870 = vpack.c.bf16 %v5853, %v5852
        %v5871 = vpack.c.bf16 %v5855, %v5854
        %v5872 = vunpack.c.l.bf16 %v5856
        %v5873 = vunpack.c.h.bf16 %v5856
        %v5874 = vunpack.c.l.bf16 %v5857
        %v5875 = vunpack.c.h.bf16 %v5857
        %v5876 = vunpack.c.l.bf16 %v5858
        %v5877 = vunpack.c.h.bf16 %v5858
        %v5878 = vunpack.c.l.bf16 %v5859
        %v5879 = vunpack.c.h.bf16 %v5859
        %v5880 = vunpack.c.l.bf16 %v5860
        %v5881 = vunpack.c.h.bf16 %v5860
        %v5882 = vunpack.c.l.bf16 %v5861
        %v5883 = vunpack.c.h.bf16 %v5861
        %v5884 = vunpack.c.l.bf16 %v5862
        %v5885 = vunpack.c.h.bf16 %v5862
        %v5886 = vunpack.c.l.bf16 %v5863
        %v5887 = vunpack.c.h.bf16 %v5863
        %v5888 = vunpack.c.l.bf16 %v5864
        %v5889 = vunpack.c.h.bf16 %v5864
        %v5890 = vunpack.c.l.bf16 %v5865
        %v5891 = vunpack.c.h.bf16 %v5865
        %v5892 = vunpack.c.l.bf16 %v5866
        %v5893 = vunpack.c.h.bf16 %v5866
        %v5894 = vunpack.c.l.bf16 %v5867
        %v5895 = vunpack.c.h.bf16 %v5867
        %v5896 = vunpack.c.l.bf16 %v5868
        %v5897 = vunpack.c.h.bf16 %v5868
        %v5898 = vunpack.c.l.bf16 %v5869
        %v5899 = vunpack.c.h.bf16 %v5869
        %v5900 = vunpack.c.l.bf16 %v5870
        %v5901 = vunpack.c.h.bf16 %v5870
        %v5902 = vunpack.c.l.bf16 %v5871
        %v5903 = vunpack.c.h.bf16 %v5871
        %v5904 = vld [vmem:[%s3] sm:$0xff]
        %v5905 = vld [vmem:[%s3 + $0x8] sm:$0xff]
        %v5906 = vld [vmem:[%s3 + $0x10] sm:$0xff]
        %v5907 = vld [vmem:[%s3 + $0x18] sm:$0xff]
        %v5908 = vld [vmem:[%s3 + $0x20] sm:$0xff]
        %v5909 = vld [vmem:[%s3 + $0x28] sm:$0xff]
        %v5910 = vld [vmem:[%s3 + $0x30] sm:$0xff]
        %v5911 = vld [vmem:[%s3 + $0x38] sm:$0xff]
        %v5912 = vld [vmem:[%s3 + $0x40] sm:$0xff]
        %v5913 = vld [vmem:[%s3 + $0x48] sm:$0xff]
        %v5914 = vld [vmem:[%s3 + $0x50] sm:$0xff]
        %v5915 = vld [vmem:[%s3 + $0x58] sm:$0xff]
        %v5916 = vld [vmem:[%s3 + $0x60] sm:$0xff]
        %v5917 = vld [vmem:[%s3 + $0x68] sm:$0xff]
        %v5918 = vld [vmem:[%s3 + $0x70] sm:$0xff]
        %v5919 = vld [vmem:[%s3 + $0x78] sm:$0xff]
        %v5920 = vld [vmem:[%s3 + $0x80] sm:$0xff]
        %v5921 = vld [vmem:[%s3 + $0x88] sm:$0xff]
        %v5922 = vld [vmem:[%s3 + $0x90] sm:$0xff]
        %v5923 = vld [vmem:[%s3 + $0x98] sm:$0xff]
        %v5924 = vld [vmem:[%s3 + $0xa0] sm:$0xff]
        %v5925 = vld [vmem:[%s3 + $0xa8] sm:$0xff]
        %v5926 = vld [vmem:[%s3 + $0xb0] sm:$0xff]
        %v5927 = vld [vmem:[%s3 + $0xb8] sm:$0xff]
        %v5928 = vld [vmem:[%s3 + $0xc0] sm:$0xff]
        %v5929 = vld [vmem:[%s3 + $0xc8] sm:$0xff]
        %v5930 = vld [vmem:[%s3 + $0xd0] sm:$0xff]
        %v5931 = vld [vmem:[%s3 + $0xd8] sm:$0xff]
        %v5932 = vld [vmem:[%s3 + $0xe0] sm:$0xff]
        %v5933 = vld [vmem:[%s3 + $0xe8] sm:$0xff]
        %v5934 = vld [vmem:[%s3 + $0xf0] sm:$0xff]
        %v5935 = vld [vmem:[%s3 + $0xf8] sm:$0xff]
        %5937 = vset.pattern.permute.xlu0 0
        %5938 = vperm.xlu0 %5937, %v5904
        %v5939 = vpop.permute.xlu0 %5938
        %5942 = vset.pattern.permute.xlu0 0
        %5943 = vperm.xlu0 %5942, %v5905
        %v5944 = vpop.permute.xlu0 %5943
        %5947 = vset.pattern.permute.xlu0 0
        %5948 = vperm.xlu0 %5947, %v5906
        %v5949 = vpop.permute.xlu0 %5948
        %5952 = vset.pattern.permute.xlu0 0
        %5953 = vperm.xlu0 %5952, %v5907
        %v5954 = vpop.permute.xlu0 %5953
        %5957 = vset.pattern.permute.xlu0 0
        %5958 = vperm.xlu0 %5957, %v5908
        %v5959 = vpop.permute.xlu0 %5958
        %5962 = vset.pattern.permute.xlu0 0
        %5963 = vperm.xlu0 %5962, %v5909
        %v5964 = vpop.permute.xlu0 %5963
        %5967 = vset.pattern.permute.xlu0 0
        %5968 = vperm.xlu0 %5967, %v5910
        %v5969 = vpop.permute.xlu0 %5968
        %5972 = vset.pattern.permute.xlu0 0
        %5973 = vperm.xlu0 %5972, %v5911
        %v5974 = vpop.permute.xlu0 %5973
        %5977 = vset.pattern.permute.xlu0 0
        %5978 = vperm.xlu0 %5977, %v5912
        %v5979 = vpop.permute.xlu0 %5978
        %5982 = vset.pattern.permute.xlu0 0
        %5983 = vperm.xlu0 %5982, %v5913
        %v5984 = vpop.permute.xlu0 %5983
        %5987 = vset.pattern.permute.xlu0 0
        %5988 = vperm.xlu0 %5987, %v5914
        %v5989 = vpop.permute.xlu0 %5988
        %5992 = vset.pattern.permute.xlu0 0
        %5993 = vperm.xlu0 %5992, %v5915
        %v5994 = vpop.permute.xlu0 %5993
        %5997 = vset.pattern.permute.xlu0 0
        %5998 = vperm.xlu0 %5997, %v5916
        %v5999 = vpop.permute.xlu0 %5998
        %6002 = vset.pattern.permute.xlu0 0
        %6003 = vperm.xlu0 %6002, %v5917
        %v6004 = vpop.permute.xlu0 %6003
        %6007 = vset.pattern.permute.xlu0 0
        %6008 = vperm.xlu0 %6007, %v5918
        %v6009 = vpop.permute.xlu0 %6008
        %6012 = vset.pattern.permute.xlu0 0
        %6013 = vperm.xlu0 %6012, %v5919
        %v6014 = vpop.permute.xlu0 %6013
        %6017 = vset.pattern.permute.xlu0 0
        %6018 = vperm.xlu0 %6017, %v5920
        %v6019 = vpop.permute.xlu0 %6018
        %6022 = vset.pattern.permute.xlu0 0
        %6023 = vperm.xlu0 %6022, %v5921
        %v6024 = vpop.permute.xlu0 %6023
        %6027 = vset.pattern.permute.xlu0 0
        %6028 = vperm.xlu0 %6027, %v5922
        %v6029 = vpop.permute.xlu0 %6028
        %6032 = vset.pattern.permute.xlu0 0
        %6033 = vperm.xlu0 %6032, %v5923
        %v6034 = vpop.permute.xlu0 %6033
        %6037 = vset.pattern.permute.xlu0 0
        %6038 = vperm.xlu0 %6037, %v5924
        %v6039 = vpop.permute.xlu0 %6038
        %6042 = vset.pattern.permute.xlu0 0
        %6043 = vperm.xlu0 %6042, %v5925
        %v6044 = vpop.permute.xlu0 %6043
        %6047 = vset.pattern.permute.xlu0 0
        %6048 = vperm.xlu0 %6047, %v5926
        %v6049 = vpop.permute.xlu0 %6048
        %6052 = vset.pattern.permute.xlu0 0
        %6053 = vperm.xlu0 %6052, %v5927
        %v6054 = vpop.permute.xlu0 %6053
        %6057 = vset.pattern.permute.xlu0 0
        %6058 = vperm.xlu0 %6057, %v5928
        %v6059 = vpop.permute.xlu0 %6058
        %6062 = vset.pattern.permute.xlu0 0
        %6063 = vperm.xlu0 %6062, %v5929
        %v6064 = vpop.permute.xlu0 %6063
        %6067 = vset.pattern.permute.xlu0 0
        %6068 = vperm.xlu0 %6067, %v5930
        %v6069 = vpop.permute.xlu0 %6068
        %6072 = vset.pattern.permute.xlu0 0
        %6073 = vperm.xlu0 %6072, %v5931
        %v6074 = vpop.permute.xlu0 %6073
        %6077 = vset.pattern.permute.xlu0 0
        %6078 = vperm.xlu0 %6077, %v5932
        %v6079 = vpop.permute.xlu0 %6078
        %6082 = vset.pattern.permute.xlu0 0
        %6083 = vperm.xlu0 %6082, %v5933
        %v6084 = vpop.permute.xlu0 %6083
        %6087 = vset.pattern.permute.xlu0 0
        %6088 = vperm.xlu0 %6087, %v5934
        %v6089 = vpop.permute.xlu0 %6088
        %6092 = vset.pattern.permute.xlu0 0
        %6093 = vperm.xlu0 %6092, %v5935
        %v6094 = vpop.permute.xlu0 %6093
        %v6096 = vmul.f32 %v5872, %v5939
        %v6097 = vmul.f32 %v5873, %v5944
        %v6098 = vmul.f32 %v5874, %v5949
        %v6099 = vmul.f32 %v5875, %v5954
        %v6100 = vmul.f32 %v5876, %v5959
        %v6101 = vmul.f32 %v5877, %v5964
        %v6102 = vmul.f32 %v5878, %v5969
        %v6103 = vmul.f32 %v5879, %v5974
        %v6104 = vmul.f32 %v5880, %v5979
        %v6105 = vmul.f32 %v5881, %v5984
        %v6106 = vmul.f32 %v5882, %v5989
        %v6107 = vmul.f32 %v5883, %v5994
        %v6108 = vmul.f32 %v5884, %v5999
        %v6109 = vmul.f32 %v5885, %v6004
        %v6110 = vmul.f32 %v5886, %v6009
        %v6111 = vmul.f32 %v5887, %v6014
        %v6112 = vmul.f32 %v5888, %v6019
        %v6113 = vmul.f32 %v5889, %v6024
        %v6114 = vmul.f32 %v5890, %v6029
        %v6115 = vmul.f32 %v5891, %v6034
        %v6116 = vmul.f32 %v5892, %v6039
        %v6117 = vmul.f32 %v5893, %v6044
        %v6118 = vmul.f32 %v5894, %v6049
        %v6119 = vmul.f32 %v5895, %v6054
        %v6120 = vmul.f32 %v5896, %v6059
        %v6121 = vmul.f32 %v5897, %v6064
        %v6122 = vmul.f32 %v5898, %v6069
        %v6123 = vmul.f32 %v5899, %v6074
        %v6124 = vmul.f32 %v5900, %v6079
        %v6125 = vmul.f32 %v5901, %v6084
        %v6126 = vmul.f32 %v5902, %v6089
        %v6127 = vmul.f32 %v5903, %v6094
        %v6128 = vadd.f32 %v6096, %v6097
        %v6129 = vadd.f32 %v6128, %v6098
        %v6130 = vadd.f32 %v6129, %v6099
        %v6131 = vadd.f32 %v6130, %v6100
        %v6132 = vadd.f32 %v6131, %v6101
        %v6133 = vadd.f32 %v6132, %v6102
        %v6134 = vadd.f32 %v6133, %v6103
        %v6135 = vrot.slane %v6134, 4
        %v6136 = vadd.f32 %v6134, %v6135
        %v6137 = vrot.slane %v6136, 2
        %v6138 = vadd.f32 %v6136, %v6137
        %v6139 = vrot.slane %v6138, 1
        %v6140 = vadd.f32 %v6138, %v6139
        %v6141 = vadd.f32 %v6104, %v6105
        %v6142 = vadd.f32 %v6141, %v6106
        %v6143 = vadd.f32 %v6142, %v6107
        %v6144 = vadd.f32 %v6143, %v6108
        %v6145 = vadd.f32 %v6144, %v6109
        %v6146 = vadd.f32 %v6145, %v6110
        %v6147 = vadd.f32 %v6146, %v6111
        %v6148 = vrot.slane %v6147, 4
        %v6149 = vadd.f32 %v6147, %v6148
        %v6150 = vrot.slane %v6149, 2
        %v6151 = vadd.f32 %v6149, %v6150
        %v6152 = vrot.slane %v6151, 1
        %v6153 = vadd.f32 %v6151, %v6152
        %v6154 = vadd.f32 %v6112, %v6113
        %v6155 = vadd.f32 %v6154, %v6114
        %v6156 = vadd.f32 %v6155, %v6115
        %v6157 = vadd.f32 %v6156, %v6116
        %v6158 = vadd.f32 %v6157, %v6117
        %v6159 = vadd.f32 %v6158, %v6118
        %v6160 = vadd.f32 %v6159, %v6119
        %v6161 = vrot.slane %v6160, 4
        %v6162 = vadd.f32 %v6160, %v6161
        %v6163 = vrot.slane %v6162, 2
        %v6164 = vadd.f32 %v6162, %v6163
        %v6165 = vrot.slane %v6164, 1
        %v6166 = vadd.f32 %v6164, %v6165
        %v6167 = vadd.f32 %v6120, %v6121
        %v6168 = vadd.f32 %v6167, %v6122
        %v6169 = vadd.f32 %v6168, %v6123
        %v6170 = vadd.f32 %v6169, %v6124
        %v6171 = vadd.f32 %v6170, %v6125
        %v6172 = vadd.f32 %v6171, %v6126
        %v6173 = vadd.f32 %v6172, %v6127
        %v6174 = vrot.slane %v6173, 4
        %v6175 = vadd.f32 %v6173, %v6174
        %v6176 = vrot.slane %v6175, 2
        %v6177 = vadd.f32 %v6175, %v6176
        %v6178 = vrot.slane %v6177, 1
        %v6179 = vadd.f32 %v6177, %v6178
        %vm6180 = vcmask 1040384
        %v6181 = vsel %vm6180, %v6140, %v6153
        %vm6182 = vcmask 1041408
        %v6183 = vsel %vm6182, %v6181, %v6166
        %vm6184 = vcmask 1042432
        %v6185 = vsel %vm6184, %v6183, %v6179
        %v6186 = vld [vmem:[%s4] sm:$0xf]
        %6188 = vset.pattern.permute.xlu0 0
        %6189 = vperm.xlu0 %6188, %v6186
        %v6190 = vpop.permute.xlu0 %6189
        %v6192 = vadd.f32 %v6185, %v6190
        %v6193 = vxor.u32 %v6192, 2147483648
        %v6194 = vmul.f32 %v6193, 1.442695
        %v6195 = vpow.pop %v6194
        %v6196 = vadd.f32 %v6195, 1.0
        %v6197 = vrcp.pop %v6196
        %v6198 = vmul.f32 1.0, %v6197
        %6199 = vst [vmem:[%s389] sm:$0xf] %v6198
        %p6200 = scmp.lt.s32.totalorder %s16, 1
        %s6201 = scalar_select %p6200, %s16, 1
        %s6202 = smul.addr %s6201, 4
        %s6203 = scalar_lea.vmem %s5, %s6202
        // Predicated region
        $region82: #{mlp_criteo_forward.1} parent=76 // pred_check
          %p6204 = pneg %p144
        $region83: #{mlp_criteo_forward.1} parent=76 // pred_check_branch
          %6206 = sbr.rel (%p6204) target = $region85
        $region84: #{mlp_criteo_forward.1} parent=76 // pred_region
          _
        $region85: #{mlp_criteo_forward.1} parent=76 // pred_fallthru
          _
      $region77: #{mlp_criteo_forward.1} parent=5 // pred_fallthru
        _
      %p6207 = scmp.le.s32.totalorder 2, %s11
      // Predicated region
      $region86: #{mlp_criteo_forward.1} parent=5 // pred_check
        %p6208 = pneg %p6207
      $region87: #{mlp_criteo_forward.1} parent=5 // pred_check_branch
        %6210 = sbr.rel (%p6208) target = $region89
      $region88: #{mlp_criteo_forward.1} parent=5 // pred_region
        %s6211 = ssub.s32 %s11, 2
        // Predicated region
        $region90: #{mlp_criteo_forward.1} parent=88 // pred_check
          %p6212 = pneg %p150
        $region91: #{mlp_criteo_forward.1} parent=88 // pred_check_branch
          %6214 = sbr.rel (%p6212) target = $region93
        $region92: #{mlp_criteo_forward.1} parent=88 // pred_region
          %p6215 = scmp.lt.s32.totalorder %s17, 1
          %s6216 = scalar_select %p6215, %s17, 1
          %s6217 = smul.addr %s6216, 4
          %s6218 = scalar_lea.vmem %s5, %s6217
        $region93: #{mlp_criteo_forward.1} parent=88 // pred_fallthru
          _
      $region89: #{mlp_criteo_forward.1} parent=5 // pred_fallthru
        _
    $region6: #{mlp_criteo_forward.1} parent=1 // loop_footer
      %s15 = sadd.s32 1, %s11
    $region7: #{mlp_criteo_forward.1} parent=1 // loop_footer_branch
      %10 = sbr.rel target = $region3
    $region8: #{mlp_criteo_forward.1} parent=1 // loop_exit
      _

</llo_original>
